<compile_context>
chip_gen: v5e
topology: v5e:2x2
jax: 0.10.0
libtpu: 0.0.40
codegen_flags: <defaults>
</compile_context>

<pallas_src>
import functools

import numpy as np
import jax
import jax.numpy as jnp
from jax import lax
from jax.experimental import pallas as pl
from jax.experimental.pallas import tpu as pltpu

NEG_SLOPE = 0.2
EPS = 1e-5


# ----------------------- layout glue (pure JAX, tiny) -----------------------

def space_to_depth(x, pad_lo, pad_hi):
    """Pad spatial dims (PyTorch F.pad semantics) and pixel-unshuffle by 2.

    x: (N, D, H, W, C) -> (N, Dp/2, Hp/2, Wp/2, 8*C).  A stride-2 / kernel-4
    conv on x becomes a stride-1 / kernel-2 conv on the result.  Any extra
    zero added to reach an even size is never read by the valid output
    window, so results match PyTorch exactly.
    """
    N, D, H, W, C = x.shape

    def pads(s):
        hi = pad_hi + ((s + pad_lo + pad_hi) % 2)
        return (pad_lo, hi)

    xp = jnp.pad(x, ((0, 0), pads(D), pads(H), pads(W), (0, 0)))
    _, Dp, Hp, Wp, _ = xp.shape
    x8 = xp.reshape(N, Dp // 2, 2, Hp // 2, 2, Wp // 2, 2, C)
    x8 = x8.transpose(0, 1, 3, 5, 2, 4, 6, 7)   # (N, d, h, w, pd, ph, pw, C)
    return x8.reshape(N, Dp // 2, Hp // 2, Wp // 2, 8 * C)


def conv_weight_to_gemm(w):
    """(4,4,4,Ci,Co) DHWIO conv weight -> (64*Ci, Co) GEMM weight whose row
    ordering matches the space-to-depth tap/phase layout used by the kernels:
      row = ((ad*2+ah)*2+aw) * 8*Ci + ((pd*2+ph)*2+pw) * Ci + ci,   k = 2a+p.
    """
    _, _, _, ci, co = w.shape
    w8 = w.reshape(2, 2, 2, 2, 2, 2, ci, co)       # (ad,pd, ah,ph, aw,pw, ci, co)
    w8 = w8.transpose(0, 2, 4, 1, 3, 5, 6, 7)      # (ad,ah,aw, pd,ph,pw, ci, co)
    return w8.reshape(64 * ci, co)


def im2col_from_s2d(xs, out_sz):
    """8 contiguous taps of the stride-1 2x2x2 conv, folded into channels.
    xs: (N, S, S, S, C8) -> (N, out_sz**3, 8*C8)."""
    N = xs.shape[0]
    C8 = xs.shape[-1]
    taps = [xs[:, ad:ad + out_sz, ah:ah + out_sz, aw:aw + out_sz, :]
            for ad in range(2) for ah in range(2) for aw in range(2)]
    p = jnp.concatenate(taps, axis=-1)
    return p.reshape(N, out_sz ** 3, 8 * C8)


def conv_out_size(s, pad_lo, pad_hi, k=4, stride=2):
    return (s + pad_lo + pad_hi - k) // stride + 1


def fold_conv3_mean_weight(w3, in_sz):
    """Fold conv3 (k=4, s=2, pad=1) + spatial mean into one effective weight.

    Because the conv3 output is immediately averaged over all spatial output
    positions, the whole op is linear in h2:
        out[co] = b3[co] + sum_{p, ci} h2[p, ci] * Weff[p, ci, co]
    where Weff accumulates w3 over every (output-window, tap) pair that lands
    on padded position p, the zero-pad ring is dropped and the result is
    divided by the number of output positions.

    Returns (co, in_sz**3, ci) in f32, with the spatial axis flattened
    row-major (d, h, w) to match the conv2 kernel's (M, C) activation layout.
    """
    k = 4
    pad = 1
    P = in_sz + 2 * pad
    os3 = (P - k) // 2 + 1
    ci, co = w3.shape[3], w3.shape[4]
    weff = jnp.zeros((P, P, P, ci, co), jnp.float32)
    w3f = w3.astype(jnp.float32)
    for od in range(os3):
        for oh in range(os3):
            for ow in range(os3):
                weff = weff.at[2 * od:2 * od + k,
                               2 * oh:2 * oh + k,
                               2 * ow:2 * ow + k].add(w3f)
    weff = weff[pad:pad + in_sz, pad:pad + in_sz, pad:pad + in_sz]
    weff = weff / float(os3 ** 3)
    return weff.reshape(in_sz ** 3, ci, co).transpose(2, 0, 1)   # (co, M, ci)


# ------------------------------ Pallas kernels ------------------------------

def _conv1_kernel(x_ref, w_ref, b_ref, o_ref, p_ref, *, out_sz):
    """Fused im2col + GEMM + bias + LeakyReLU for conv1 (one sample).

    x_ref: (S, S, S, 8*Ci) space-to-depth input, f32   (S = out_sz + 1 or + 2)
    w_ref: (64*Ci, Co) bf16 GEMM weight
    b_ref: (1, Co) f32 bias
    o_ref: (Co, out_sz**3) f32  -- lane-dense (channels-major) output
    p_ref: (out_sz**3, 64*Ci) f32 VMEM scratch holding the im2col matrix
    """
    ktap = x_ref.shape[-1]                      # 8 * Ci
    m = out_sz * out_sz * out_sz
    t = 0
    for ad in range(2):
        for ah in range(2):
            for aw in range(2):
                tap = x_ref[ad:ad + out_sz, ah:ah + out_sz, aw:aw + out_sz, :]
                # out_sz is a multiple of 8 here (16^3 input -> 8), so this
                # collapse is a pure re-tiling of full 8-sublane tiles.
                p_ref[:, t * ktap:(t + 1) * ktap] = tap.reshape(m, ktap)
                t += 1
    y = jnp.dot(p_ref[...].astype(jnp.bfloat16), w_ref[...],
                preferred_element_type=jnp.float32)          # (m, Co), f32 acc
    y = y + b_ref[...]
    y = jnp.where(y >= 0, y, NEG_SLOPE * y)                  # f32 epilogue
    o_ref[...] = jnp.transpose(y)                            # lane-dense store


def _conv2_conv3_kernel(p_ref, w2_ref, b2_ref, g_ref, bt_ref, w3_ref, b3_ref,
                        o_ref, *, n_class):
    """conv2 GEMM + bias + InstanceNorm(affine) + LeakyReLU + folded
    conv3+mean for one sample.

    p_ref : (M, K) bf16 conv2 patches
    w2_ref: (K, C) bf16
    b2/g/bt: (1, C) f32
    w3_ref: (n_class, M, C) f32 effective conv3+mean weight
    b3_ref: (1, co_pad) f32 (zero-padded to 128 lanes)
    o_ref : (1, co_pad) f32
    """
    y = jnp.dot(p_ref[...], w2_ref[...], preferred_element_type=jnp.float32)
    y = y + b2_ref[...]
    mu = jnp.mean(y, axis=0, keepdims=True)
    var = jnp.mean(jnp.square(y - mu), axis=0, keepdims=True)   # biased (torch)
    y = (y - mu) * lax.rsqrt(var + EPS)
    y = y * g_ref[...] + bt_ref[...]
    h2 = jnp.where(y >= 0, y, NEG_SLOPE * y)                    # (M, C) f32

    acc = b3_ref[...]                                           # (1, co_pad)
    lane = lax.broadcasted_iota(jnp.int32, acc.shape, 1)
    for i in range(n_class):
        prod = h2 * w3_ref[i]                                   # (M, C) f32
        s = jnp.sum(jnp.sum(prod, axis=1, keepdims=True),
                    axis=0, keepdims=True)                      # (1, 1)
        acc = acc + jnp.where(lane == i, jnp.broadcast_to(s, acc.shape), 0.0)
    o_ref[...] = acc


# ----------------------------- layer wrappers -------------------------------

def conv1_lrelu(x, w, b, *, out_sz):
    N = x.shape[0]
    xs = space_to_depth(x, 2, 1)                              # (N, S,S,S, 8*Ci)
    S, ktap = xs.shape[1], xs.shape[-1]
    wg = conv_weight_to_gemm(w).astype(jnp.bfloat16)          # (64*Ci, Co)
    co = wg.shape[1]
    m = out_sz ** 3
    out = pl.pallas_call(
        functools.partial(_conv1_kernel, out_sz=out_sz),
        out_shape=jax.ShapeDtypeStruct((N, co, m), jnp.float32),
        grid=(N,),
        in_specs=[
            pl.BlockSpec((None, S, S, S, ktap), lambda n: (n, 0, 0, 0, 0)),
            pl.BlockSpec(wg.shape, lambda n: (0, 0)),
            pl.BlockSpec((1, co), lambda n: (0, 0)),
        ],
        out_specs=pl.BlockSpec((None, co, m), lambda n: (n, 0, 0)),
        scratch_shapes=[pltpu.VMEM((m, wg.shape[0]), jnp.float32)],
        compiler_params=pltpu.CompilerParams(dimension_semantics=("parallel",)),
    )(xs, wg, b.reshape(1, co).astype(jnp.float32))
    # (N, Co, M) -> NDHWC for the next layer's layout glue.
    return out.reshape(N, co, out_sz, out_sz, out_sz).transpose(0, 2, 3, 4, 1)


def conv2_in_lrelu_conv3_mean(h1, w2, b2, gamma, beta, w3, b3, *, out_sz):
    """conv2 + InstanceNorm + LeakyReLU + conv3 + spatial mean, one kernel."""
    N = h1.shape[0]
    xs = space_to_depth(h1, 1, 2)
    p = im2col_from_s2d(xs, out_sz).astype(jnp.bfloat16)      # (N, M, K)
    w2g = conv_weight_to_gemm(w2).astype(jnp.bfloat16)        # (K, C)
    M, K = p.shape[1], p.shape[2]
    C = w2g.shape[1]
    n_class = w3.shape[-1]
    co_pad = ((n_class + 127) // 128) * 128                   # lane-dense output
    w3f = fold_conv3_mean_weight(w3, out_sz)                  # (co, M, C) f32
    b3p = jnp.pad(b3.reshape(1, n_class).astype(jnp.float32),
                  ((0, 0), (0, co_pad - n_class)))
    out = pl.pallas_call(
        functools.partial(_conv2_conv3_kernel, n_class=n_class),
        out_shape=jax.ShapeDtypeStruct((N, 1, co_pad), jnp.float32),
        grid=(N,),
        in_specs=[
            pl.BlockSpec((None, M, K), lambda n: (n, 0, 0)),
            pl.BlockSpec((K, C), lambda n: (0, 0)),
            pl.BlockSpec((1, C), lambda n: (0, 0)),
            pl.BlockSpec((1, C), lambda n: (0, 0)),
            pl.BlockSpec((1, C), lambda n: (0, 0)),
            pl.BlockSpec((n_class, M, C), lambda n: (0, 0, 0)),
            pl.BlockSpec((1, co_pad), lambda n: (0, 0)),
        ],
        out_specs=pl.BlockSpec((None, 1, co_pad), lambda n: (n, 0, 0)),
        compiler_params=pltpu.CompilerParams(dimension_semantics=("parallel",)),
    )(p, w2g,
      b2.reshape(1, C).astype(jnp.float32),
      gamma.reshape(1, C).astype(jnp.float32),
      beta.reshape(1, C).astype(jnp.float32),
      w3f, b3p)
    return out[:, 0, :n_class]                                # (N, n_class)


# ------------------------------- forward pass --------------------------------

def discriminator_forward(x_ncdhw, params):
    # PyTorch NCDHW -> NDHWC
    x = jnp.transpose(x_ncdhw, (0, 2, 3, 4, 1)).astype(jnp.float32)
    s = x.shape[1]

    os1 = conv_out_size(s, 2, 1)          # 8 for 16^3 input
    h1 = conv1_lrelu(x, params["w1"], params["b1"], out_sz=os1)

    os2 = conv_out_size(os1, 1, 2)        # 4
    return conv2_in_lrelu_conv3_mean(h1, params["w2"], params["b2"],
                                     params["gamma"], params["beta"],
                                     params["w3"], params["b3"], out_sz=os2)


# ------------------------- reference (pure JAX, f32) --------------------------

def discriminator_reference(x_ncdhw, params):
    x = jnp.transpose(x_ncdhw, (0, 2, 3, 4, 1)).astype(jnp.float32)

    def conv(v, w, b, pads):
        y = lax.conv_general_dilated(v, w, window_strides=(2, 2, 2), padding=pads,
                                     dimension_numbers=("NDHWC", "DHWIO", "NDHWC"))
        return y + b

    lrelu = lambda v: jnp.where(v >= 0, v, NEG_SLOPE * v)
    h1 = lrelu(conv(x, params["w1"], params["b1"], [(2, 1)] * 3))
    h2p = conv(h1, params["w2"], params["b2"], [(1, 2)] * 3)
    mean = jnp.mean(h2p, axis=(1, 2, 3), keepdims=True)
    var = jnp.mean((h2p - mean) ** 2, axis=(1, 2, 3), keepdims=True)
    h2 = lrelu((h2p - mean) * lax.rsqrt(var + EPS) * params["gamma"] + params["beta"])
    h3 = conv(h2, params["w3"], params["b3"], [(1, 1)] * 3)
    return jnp.mean(h3, axis=(1, 2, 3))


# --------------------------------- parameters ---------------------------------

def init_params(key, channel=64 * 2, out_class=1):
    c8, c4 = channel // 8, channel // 4          # 16, 32
    ks = jax.random.split(key, 8)

    def w_init(k, shape, fan_in):
        return jax.random.normal(k, shape, jnp.float32) / np.sqrt(fan_in)

    return {
        "w1": w_init(ks[0], (4, 4, 4, 1, c8), 4 * 4 * 4 * 1),
        "b1": 0.01 * jax.random.normal(ks[1], (c8,), jnp.float32),
        "w2": w_init(ks[2], (4, 4, 4, c8, c4), 4 * 4 * 4 * c8),
        "b2": 0.01 * jax.random.normal(ks[3], (c4,), jnp.float32),
        "gamma": 1.0 + 0.1 * jax.random.normal(ks[4], (c4,), jnp.float32),
        "beta": 0.1 * jax.random.normal(ks[5], (c4,), jnp.float32),
        "w3": w_init(ks[6], (4, 4, 4, c4, out_class), 4 * 4 * 4 * c4),
        "b3": 0.01 * jax.random.normal(ks[7], (out_class,), jnp.float32),
    }


if __name__ == "__main__":
    key = jax.random.PRNGKey(0)
    k_x, k_p = jax.random.split(key)
    # Small shape consistent with the module: NCDHW, single input channel.
    x = jax.random.normal(k_x, (2, 1, 16, 16, 16), jnp.float32)
    params = init_params(k_p)

    fwd = jax.jit(discriminator_forward)
    out = jax.block_until_ready(fwd(x, params))
    assert out.shape == (2, 1), out.shape

    ref = jax.block_until_ready(discriminator_reference(x, params))
    # bf16 MXU operands with f32 accumulation / f32 epilogue -> small rounding.
    if not np.allclose(np.asarray(out), np.asarray(ref), rtol=3e-2, atol=3e-2):
        raise AssertionError(f"Pallas/reference mismatch:\n{out}\nvs\n{ref}")

    print("KERNEL_OK")
</pallas_src>

<mosaic_0001>
module attributes {stable_mosaic.version = 11 : i64} {
  func.func @_conv1_kernel(%arg0: i32, %arg1: memref<1x10x10x10x8xf32, #tpu.memory_space<vmem>>, %arg2: memref<64x16xbf16, #tpu.memory_space<vmem>>, %arg3: memref<1x16xf32, #tpu.memory_space<vmem>>, %arg4: memref<1x16x512xf32, #tpu.memory_space<vmem>>, %arg5: memref<512x64xf32, #tpu.memory_space<vmem>>) attributes {dimension_semantics = [#tpu.dimension_semantics<parallel>], iteration_bounds = array<i64: 2>, scalar_prefetch = 0 : i64, scratch_operands = 1 : i64, tpu.core_type = #tpu.core_type<tc>, window_params = [{transform_indices = @transform_0, window_bounds = array<i64: 1, 10, 10, 10, 8>}, {pipeline_mode = #tpu.pipeline_mode<synchronous>, transform_indices = @transform_1, window_bounds = array<i64: 64, 16>}, {pipeline_mode = #tpu.pipeline_mode<synchronous>, transform_indices = @transform_2, window_bounds = array<i64: 1, 16>}, {transform_indices = @transform_3, window_bounds = array<i64: 1, 16, 512>}]} {
    %c0 = arith.constant 0 : index
    %c0_0 = arith.constant 0 : index
    %c0_1 = arith.constant 0 : index
    %c0_2 = arith.constant 0 : index
    %c0_3 = arith.constant 0 : index
    %0 = vector.load %arg1[%c0, %c0_0, %c0_1, %c0_2, %c0_3] : memref<1x10x10x10x8xf32, #tpu.memory_space<vmem>>, vector<1x8x8x8x8xf32>
    %1 = vector.shape_cast %0 : vector<1x8x8x8x8xf32> to vector<8x8x8x8xf32>
    %2 = vector.shape_cast %1 : vector<8x8x8x8xf32> to vector<512x8xf32>
    %c0_4 = arith.constant 0 : index
    %c0_5 = arith.constant 0 : index
    %3 = vector.load %arg5[%c0_4, %c0_5] : memref<512x64xf32, #tpu.memory_space<vmem>>, vector<512x8xf32>
    tpu.vector_store %arg5[%c0_4, %c0_5], %2 {strides = array<i32>} : memref<512x64xf32, #tpu.memory_space<vmem>>, vector<512x8xf32>,
    %c0_6 = arith.constant 0 : index
    %c0_7 = arith.constant 0 : index
    %c0_8 = arith.constant 0 : index
    %c1 = arith.constant 1 : index
    %c0_9 = arith.constant 0 : index
    %4 = vector.load %arg1[%c0_6, %c0_7, %c0_8, %c1, %c0_9] : memref<1x10x10x10x8xf32, #tpu.memory_space<vmem>>, vector<1x8x8x8x8xf32>
    %5 = vector.shape_cast %4 : vector<1x8x8x8x8xf32> to vector<8x8x8x8xf32>
    %6 = vector.shape_cast %5 : vector<8x8x8x8xf32> to vector<512x8xf32>
    %c0_10 = arith.constant 0 : index
    %c8 = arith.constant 8 : index
    %7 = vector.load %arg5[%c0_10, %c8] : memref<512x64xf32, #tpu.memory_space<vmem>>, vector<512x8xf32>
    tpu.vector_store %arg5[%c0_10, %c8], %6 {strides = array<i32>} : memref<512x64xf32, #tpu.memory_space<vmem>>, vector<512x8xf32>,
    %c0_11 = arith.constant 0 : index
    %c0_12 = arith.constant 0 : index
    %c1_13 = arith.constant 1 : index
    %c0_14 = arith.constant 0 : index
    %c0_15 = arith.constant 0 : index
    %8 = vector.load %arg1[%c0_11, %c0_12, %c1_13, %c0_14, %c0_15] : memref<1x10x10x10x8xf32, #tpu.memory_space<vmem>>, vector<1x8x8x8x8xf32>
    %9 = vector.shape_cast %8 : vector<1x8x8x8x8xf32> to vector<8x8x8x8xf32>
    %10 = vector.shape_cast %9 : vector<8x8x8x8xf32> to vector<512x8xf32>
    %c0_16 = arith.constant 0 : index
    %c16 = arith.constant 16 : index
    %11 = vector.load %arg5[%c0_16, %c16] : memref<512x64xf32, #tpu.memory_space<vmem>>, vector<512x8xf32>
    tpu.vector_store %arg5[%c0_16, %c16], %10 {strides = array<i32>} : memref<512x64xf32, #tpu.memory_space<vmem>>, vector<512x8xf32>,
    %c0_17 = arith.constant 0 : index
    %c0_18 = arith.constant 0 : index
    %c1_19 = arith.constant 1 : index
    %c1_20 = arith.constant 1 : index
    %c0_21 = arith.constant 0 : index
    %12 = vector.load %arg1[%c0_17, %c0_18, %c1_19, %c1_20, %c0_21] : memref<1x10x10x10x8xf32, #tpu.memory_space<vmem>>, vector<1x8x8x8x8xf32>
    %13 = vector.shape_cast %12 : vector<1x8x8x8x8xf32> to vector<8x8x8x8xf32>
    %14 = vector.shape_cast %13 : vector<8x8x8x8xf32> to vector<512x8xf32>
    %c0_22 = arith.constant 0 : index
    %c24 = arith.constant 24 : index
    %15 = vector.load %arg5[%c0_22, %c24] : memref<512x64xf32, #tpu.memory_space<vmem>>, vector<512x8xf32>
    tpu.vector_store %arg5[%c0_22, %c24], %14 {strides = array<i32>} : memref<512x64xf32, #tpu.memory_space<vmem>>, vector<512x8xf32>,
    %c0_23 = arith.constant 0 : index
    %c1_24 = arith.constant 1 : index
    %c0_25 = arith.constant 0 : index
    %c0_26 = arith.constant 0 : index
    %c0_27 = arith.constant 0 : index
    %16 = vector.load %arg1[%c0_23, %c1_24, %c0_25, %c0_26, %c0_27] : memref<1x10x10x10x8xf32, #tpu.memory_space<vmem>>, vector<1x8x8x8x8xf32>
    %17 = vector.shape_cast %16 : vector<1x8x8x8x8xf32> to vector<8x8x8x8xf32>
    %18 = vector.shape_cast %17 : vector<8x8x8x8xf32> to vector<512x8xf32>
    %c0_28 = arith.constant 0 : index
    %c32 = arith.constant 32 : index
    %19 = vector.load %arg5[%c0_28, %c32] : memref<512x64xf32, #tpu.memory_space<vmem>>, vector<512x8xf32>
    tpu.vector_store %arg5[%c0_28, %c32], %18 {strides = array<i32>} : memref<512x64xf32, #tpu.memory_space<vmem>>, vector<512x8xf32>,
    %c0_29 = arith.constant 0 : index
    %c1_30 = arith.constant 1 : index
    %c0_31 = arith.constant 0 : index
    %c1_32 = arith.constant 1 : index
    %c0_33 = arith.constant 0 : index
    %20 = vector.load %arg1[%c0_29, %c1_30, %c0_31, %c1_32, %c0_33] : memref<1x10x10x10x8xf32, #tpu.memory_space<vmem>>, vector<1x8x8x8x8xf32>
    %21 = vector.shape_cast %20 : vector<1x8x8x8x8xf32> to vector<8x8x8x8xf32>
    %22 = vector.shape_cast %21 : vector<8x8x8x8xf32> to vector<512x8xf32>
    %c0_34 = arith.constant 0 : index
    %c40 = arith.constant 40 : index
    %23 = vector.load %arg5[%c0_34, %c40] : memref<512x64xf32, #tpu.memory_space<vmem>>, vector<512x8xf32>
    tpu.vector_store %arg5[%c0_34, %c40], %22 {strides = array<i32>} : memref<512x64xf32, #tpu.memory_space<vmem>>, vector<512x8xf32>,
    %c0_35 = arith.constant 0 : index
    %c1_36 = arith.constant 1 : index
    %c1_37 = arith.constant 1 : index
    %c0_38 = arith.constant 0 : index
    %c0_39 = arith.constant 0 : index
    %24 = vector.load %arg1[%c0_35, %c1_36, %c1_37, %c0_38, %c0_39] : memref<1x10x10x10x8xf32, #tpu.memory_space<vmem>>, vector<1x8x8x8x8xf32>
    %25 = vector.shape_cast %24 : vector<1x8x8x8x8xf32> to vector<8x8x8x8xf32>
    %26 = vector.shape_cast %25 : vector<8x8x8x8xf32> to vector<512x8xf32>
    %c0_40 = arith.constant 0 : index
    %c48 = arith.constant 48 : index
    %27 = vector.load %arg5[%c0_40, %c48] : memref<512x64xf32, #tpu.memory_space<vmem>>, vector<512x8xf32>
    tpu.vector_store %arg5[%c0_40, %c48], %26 {strides = array<i32>} : memref<512x64xf32, #tpu.memory_space<vmem>>, vector<512x8xf32>,
    %c0_41 = arith.constant 0 : index
    %c1_42 = arith.constant 1 : index
    %c1_43 = arith.constant 1 : index
    %c1_44 = arith.constant 1 : index
    %c0_45 = arith.constant 0 : index
    %28 = vector.load %arg1[%c0_41, %c1_42, %c1_43, %c1_44, %c0_45] : memref<1x10x10x10x8xf32, #tpu.memory_space<vmem>>, vector<1x8x8x8x8xf32>
    %29 = vector.shape_cast %28 : vector<1x8x8x8x8xf32> to vector<8x8x8x8xf32>
    %30 = vector.shape_cast %29 : vector<8x8x8x8xf32> to vector<512x8xf32>
    %c0_46 = arith.constant 0 : index
    %c56 = arith.constant 56 : index
    %31 = vector.load %arg5[%c0_46, %c56] : memref<512x64xf32, #tpu.memory_space<vmem>>, vector<512x8xf32>
    tpu.vector_store %arg5[%c0_46, %c56], %30 {strides = array<i32>} : memref<512x64xf32, #tpu.memory_space<vmem>>, vector<512x8xf32>,
    %c0_47 = arith.constant 0 : index
    %c0_48 = arith.constant 0 : index
    %32 = vector.load %arg5[%c0_47, %c0_48] : memref<512x64xf32, #tpu.memory_space<vmem>>, vector<512x64xf32>
    %33 = arith.truncf %32 : vector<512x64xf32> to vector<512x64xbf16>
    %c0_49 = arith.constant 0 : index
    %c0_50 = arith.constant 0 : index
    %34 = vector.load %arg2[%c0_49, %c0_50] : memref<64x16xbf16, #tpu.memory_space<vmem>>, vector<64x16xbf16>
    %cst = arith.constant dense<0.000000e+00> : vector<512x16xf32>
    %35 = tpu.matmul %33, %34, %cst {dimension_numbers = #tpu.dot_dimension_numbers<[1], [0], [0], [1], [0, 0, 1, 1], [], []>} : vector<512x64xbf16>, vector<64x16xbf16>, vector<512x16xf32> -> vector<512x16xf32>
    %c0_51 = arith.constant 0 : index
    %c0_52 = arith.constant 0 : index
    %36 = vector.load %arg3[%c0_51, %c0_52] : memref<1x16xf32, #tpu.memory_space<vmem>>, vector<1x16xf32>
    %37 = vector.broadcast %36 : vector<1x16xf32> to vector<512x16xf32>
    %38 = arith.addf %35, %37 : vector<512x16xf32>
    %cst_53 = arith.constant 0.000000e+00 : f32
    %39 = vector.broadcast %cst_53 : f32 to vector<512x16xf32>
    %40 = arith.cmpf oge, %38, %39 : vector<512x16xf32>
    %cst_54 = arith.constant 2.000000e-01 : f32
    %41 = vector.broadcast %cst_54 : f32 to vector<512x16xf32>
    %42 = arith.mulf %41, %38 : vector<512x16xf32>
    %43 = arith.select %40, %38, %42 : vector<512x16xi1>, vector<512x16xf32>
    %44 = tpu.transpose %43, [1, 0] : vector<512x16xf32> -> vector<16x512xf32>
    %c0_55 = arith.constant 0 : index
    %c0_56 = arith.constant 0 : index
    %c0_57 = arith.constant 0 : index
    %45 = vector.load %arg4[%c0_55, %c0_56, %c0_57] : memref<1x16x512xf32, #tpu.memory_space<vmem>>, vector<1x16x512xf32>
    %46 = vector.shape_cast %45 : vector<1x16x512xf32> to vector<16x512xf32>
    %47 = vector.shape_cast %44 : vector<16x512xf32> to vector<1x16x512xf32>
    tpu.vector_store %arg4[%c0_55, %c0_56, %c0_57], %47 {strides = array<i32>} : memref<1x16x512xf32, #tpu.memory_space<vmem>>, vector<1x16x512xf32>,
    return
  }
  func.func @transform_0(%arg0: i32) -> (i32, i32, i32, i32, i32) {
    %c0_i32 = arith.constant 0 : i32
    %c0_i32_0 = arith.constant 0 : i32
    %c0_i32_1 = arith.constant 0 : i32
    %c0_i32_2 = arith.constant 0 : i32
    %c0_i32_3 = arith.constant 0 : i32
    return %arg0, %c0_i32, %c0_i32_0, %c0_i32_1, %c0_i32_2 : i32, i32, i32, i32, i32
  }
  func.func @transform_1(%arg0: i32) -> (i32, i32) {
    %c0_i32 = arith.constant 0 : i32
    %c0_i32_0 = arith.constant 0 : i32
    %c0_i32_1 = arith.constant 0 : i32
    return %c0_i32, %c0_i32_0 : i32, i32
  }
  func.func @transform_2(%arg0: i32) -> (i32, i32) {
    %c0_i32 = arith.constant 0 : i32
    %c0_i32_0 = arith.constant 0 : i32
    %c0_i32_1 = arith.constant 0 : i32
    return %c0_i32, %c0_i32_0 : i32, i32
  }
  func.func @transform_3(%arg0: i32) -> (i32, i32, i32) {
    %c0_i32 = arith.constant 0 : i32
    %c0_i32_0 = arith.constant 0 : i32
    %c0_i32_1 = arith.constant 0 : i32
    return %arg0, %c0_i32, %c0_i32_0 : i32, i32, i32
  }
}

module attributes {stable_mosaic.version = 11 : i64} {
  func.func @_conv2_conv3_kernel(%arg0: i32, %arg1: memref<1x64x1024xbf16, #tpu.memory_space<vmem>>, %arg2: memref<1024x32xbf16, #tpu.memory_space<vmem>>, %arg3: memref<1x32xf32, #tpu.memory_space<vmem>>, %arg4: memref<1x32xf32, #tpu.memory_space<vmem>>, %arg5: memref<1x32xf32, #tpu.memory_space<vmem>>, %arg6: memref<1x64x32xf32, #tpu.memory_space<vmem>>, %arg7: memref<1x128xf32, #tpu.memory_space<vmem>>, %arg8: memref<1x1x128xf32, #tpu.memory_space<vmem>>) attributes {dimension_semantics = [#tpu.dimension_semantics<parallel>], iteration_bounds = array<i64: 2>, scalar_prefetch = 0 : i64, scratch_operands = 0 : i64, tpu.core_type = #tpu.core_type<tc>, window_params = [{transform_indices = @transform_0, window_bounds = array<i64: 1, 64, 1024>}, {pipeline_mode = #tpu.pipeline_mode<synchronous>, transform_indices = @transform_1, window_bounds = array<i64: 1024, 32>}, {pipeline_mode = #tpu.pipeline_mode<synchronous>, transform_indices = @transform_2, window_bounds = array<i64: 1, 32>}, {pipeline_mode = #tpu.pipeline_mode<synchronous>, transform_indices = @transform_3, window_bounds = array<i64: 1, 32>}, {pipeline_mode = #tpu.pipeline_mode<synchronous>, transform_indices = @transform_4, window_bounds = array<i64: 1, 32>}, {pipeline_mode = #tpu.pipeline_mode<synchronous>, transform_indices = @transform_5, window_bounds = array<i64: 1, 64, 32>}, {pipeline_mode = #tpu.pipeline_mode<synchronous>, transform_indices = @transform_6, window_bounds = array<i64: 1, 128>}, {transform_indices = @transform_7, window_bounds = array<i64: 1, 1, 128>}]} {
    %c0 = arith.constant 0 : index
    %c0_0 = arith.constant 0 : index
    %c0_1 = arith.constant 0 : index
    %0 = vector.load %arg1[%c0, %c0_0, %c0_1] : memref<1x64x1024xbf16, #tpu.memory_space<vmem>>, vector<1x64x1024xbf16>
    %1 = vector.shape_cast %0 : vector<1x64x1024xbf16> to vector<64x1024xbf16>
    %c0_2 = arith.constant 0 : index
    %c0_3 = arith.constant 0 : index
    %2 = vector.load %arg2[%c0_2, %c0_3] : memref<1024x32xbf16, #tpu.memory_space<vmem>>, vector<1024x32xbf16>
    %cst = arith.constant dense<0.000000e+00> : vector<64x32xf32>
    %3 = tpu.matmul %1, %2, %cst {dimension_numbers = #tpu.dot_dimension_numbers<[1], [0], [0], [1], [0, 0, 1, 1], [], []>} : vector<64x1024xbf16>, vector<1024x32xbf16>, vector<64x32xf32> -> vector<64x32xf32>
    %c0_4 = arith.constant 0 : index
    %c0_5 = arith.constant 0 : index
    %4 = vector.load %arg3[%c0_4, %c0_5] : memref<1x32xf32, #tpu.memory_space<vmem>>, vector<1x32xf32>
    %5 = vector.broadcast %4 : vector<1x32xf32> to vector<64x32xf32>
    %6 = arith.addf %3, %5 : vector<64x32xf32>
    %cst_6 = arith.constant dense<0.000000e+00> : vector<32xf32>
    %7 = vector.multi_reduction <add>, %6, %cst_6 [0] : vector<64x32xf32> to vector<32xf32>
    %8 = vector.shape_cast %7 : vector<32xf32> to vector<1x32xf32>
    %cst_7 = arith.constant 6.400000e+01 : f32
    %9 = vector.broadcast %cst_7 : f32 to vector<1x32xf32>
    %10 = arith.divf %8, %9 : vector<1x32xf32>
    %11 = vector.broadcast %10 : vector<1x32xf32> to vector<64x32xf32>
    %12 = arith.subf %6, %11 : vector<64x32xf32>
    %13 = arith.mulf %12, %12 : vector<64x32xf32>
    %cst_8 = arith.constant dense<0.000000e+00> : vector<32xf32>
    %14 = vector.multi_reduction <add>, %13, %cst_8 [0] : vector<64x32xf32> to vector<32xf32>
    %15 = vector.shape_cast %14 : vector<32xf32> to vector<1x32xf32>
    %cst_9 = arith.constant 6.400000e+01 : f32
    %16 = vector.broadcast %cst_9 : f32 to vector<1x32xf32>
    %17 = arith.divf %15, %16 : vector<1x32xf32>
    %18 = vector.broadcast %10 : vector<1x32xf32> to vector<64x32xf32>
    %19 = arith.subf %6, %18 : vector<64x32xf32>
    %cst_10 = arith.constant 9.99999974E-6 : f32
    %20 = vector.broadcast %cst_10 : f32 to vector<1x32xf32>
    %21 = arith.addf %17, %20 : vector<1x32xf32>
    %22 = math.rsqrt %21 : vector<1x32xf32>
    %23 = vector.broadcast %22 : vector<1x32xf32> to vector<64x32xf32>
    %24 = arith.mulf %19, %23 : vector<64x32xf32>
    %c0_11 = arith.constant 0 : index
    %c0_12 = arith.constant 0 : index
    %25 = vector.load %arg4[%c0_11, %c0_12] : memref<1x32xf32, #tpu.memory_space<vmem>>, vector<1x32xf32>
    %26 = vector.broadcast %25 : vector<1x32xf32> to vector<64x32xf32>
    %27 = arith.mulf %24, %26 : vector<64x32xf32>
    %c0_13 = arith.constant 0 : index
    %c0_14 = arith.constant 0 : index
    %28 = vector.load %arg5[%c0_13, %c0_14] : memref<1x32xf32, #tpu.memory_space<vmem>>, vector<1x32xf32>
    %29 = vector.broadcast %28 : vector<1x32xf32> to vector<64x32xf32>
    %30 = arith.addf %27, %29 : vector<64x32xf32>
    %cst_15 = arith.constant 0.000000e+00 : f32
    %31 = vector.broadcast %cst_15 : f32 to vector<64x32xf32>
    %32 = arith.cmpf oge, %30, %31 : vector<64x32xf32>
    %cst_16 = arith.constant 2.000000e-01 : f32
    %33 = vector.broadcast %cst_16 : f32 to vector<64x32xf32>
    %34 = arith.mulf %33, %30 : vector<64x32xf32>
    %35 = arith.select %32, %30, %34 : vector<64x32xi1>, vector<64x32xf32>
    %c0_17 = arith.constant 0 : index
    %c0_18 = arith.constant 0 : index
    %36 = vector.load %arg7[%c0_17, %c0_18] : memref<1x128xf32, #tpu.memory_space<vmem>>, vector<1x128xf32>
    %37 = tpu.iota {dimensions = array<i32: 1>} : vector<1x128xi32>
    %c0_19 = arith.constant 0 : index
    %c0_20 = arith.constant 0 : index
    %c0_21 = arith.constant 0 : index
    %38 = vector.load %arg6[%c0_19, %c0_20, %c0_21] : memref<1x64x32xf32, #tpu.memory_space<vmem>>, vector<1x64x32xf32>
    %39 = vector.shape_cast %38 : vector<1x64x32xf32> to vector<64x32xf32>
    %40 = arith.mulf %35, %39 : vector<64x32xf32>
    %cst_22 = arith.constant dense<0.000000e+00> : vector<64xf32>
    %41 = vector.multi_reduction <add>, %40, %cst_22 [1] : vector<64x32xf32> to vector<64xf32>
    %42 = vector.shape_cast %41 : vector<64xf32> to vector<64x1xf32>
    %cst_23 = arith.constant dense<0.000000e+00> : vector<1xf32>
    %43 = vector.multi_reduction <add>, %42, %cst_23 [0] : vector<64x1xf32> to vector<1xf32>
    %44 = vector.shape_cast %43 : vector<1xf32> to vector<1x1xf32>
    %c0_i32 = arith.constant 0 : i32
    %45 = vector.broadcast %c0_i32 : i32 to vector<1x128xi32>
    %46 = arith.cmpi eq, %37, %45 : vector<1x128xi32>
    %47 = vector.shape_cast %44 : vector<1x1xf32> to vector<1x1xf32>
    %48 = vector.broadcast %47 : vector<1x1xf32> to vector<1x128xf32>
    %cst_24 = arith.constant 0.000000e+00 : f32
    %49 = vector.broadcast %cst_24 : f32 to vector<1x128xf32>
    %50 = arith.select %46, %48, %49 : vector<1x128xi1>, vector<1x128xf32>
    %51 = arith.addf %36, %50 : vector<1x128xf32>
    %c0_25 = arith.constant 0 : index
    %c0_26 = arith.constant 0 : index
    %c0_27 = arith.constant 0 : index
    %52 = vector.load %arg8[%c0_25, %c0_26, %c0_27] : memref<1x1x128xf32, #tpu.memory_space<vmem>>, vector<1x1x128xf32>
    %53 = vector.shape_cast %52 : vector<1x1x128xf32> to vector<1x128xf32>
    %54 = vector.shape_cast %51 : vector<1x128xf32> to vector<1x1x128xf32>
    tpu.vector_store %arg8[%c0_25, %c0_26, %c0_27], %54 {strides = array<i32>} : memref<1x1x128xf32, #tpu.memory_space<vmem>>, vector<1x1x128xf32>,
    return
  }
  func.func @transform_0(%arg0: i32) -> (i32, i32, i32) {
    %c0_i32 = arith.constant 0 : i32
    %c0_i32_0 = arith.constant 0 : i32
    %c0_i32_1 = arith.constant 0 : i32
    return %arg0, %c0_i32, %c0_i32_0 : i32, i32, i32
  }
  func.func @transform_1(%arg0: i32) -> (i32, i32) {
    %c0_i32 = arith.constant 0 : i32
    %c0_i32_0 = arith.constant 0 : i32
    %c0_i32_1 = arith.constant 0 : i32
    return %c0_i32, %c0_i32_0 : i32, i32
  }
  func.func @transform_2(%arg0: i32) -> (i32, i32) {
    %c0_i32 = arith.constant 0 : i32
    %c0_i32_0 = arith.constant 0 : i32
    %c0_i32_1 = arith.constant 0 : i32
    return %c0_i32, %c0_i32_0 : i32, i32
  }
  func.func @transform_3(%arg0: i32) -> (i32, i32) {
    %c0_i32 = arith.constant 0 : i32
    %c0_i32_0 = arith.constant 0 : i32
    %c0_i32_1 = arith.constant 0 : i32
    return %c0_i32, %c0_i32_0 : i32, i32
  }
  func.func @transform_4(%arg0: i32) -> (i32, i32) {
    %c0_i32 = arith.constant 0 : i32
    %c0_i32_0 = arith.constant 0 : i32
    %c0_i32_1 = arith.constant 0 : i32
    return %c0_i32, %c0_i32_0 : i32, i32
  }
  func.func @transform_5(%arg0: i32) -> (i32, i32, i32) {
    %c0_i32 = arith.constant 0 : i32
    %c0_i32_0 = arith.constant 0 : i32
    %c0_i32_1 = arith.constant 0 : i32
    %c0_i32_2 = arith.constant 0 : i32
    return %c0_i32, %c0_i32_0, %c0_i32_1 : i32, i32, i32
  }
  func.func @transform_6(%arg0: i32) -> (i32, i32) {
    %c0_i32 = arith.constant 0 : i32
    %c0_i32_0 = arith.constant 0 : i32
    %c0_i32_1 = arith.constant 0 : i32
    return %c0_i32, %c0_i32_0 : i32, i32
  }
  func.func @transform_7(%arg0: i32) -> (i32, i32, i32) {
    %c0_i32 = arith.constant 0 : i32
    %c0_i32_0 = arith.constant 0 : i32
    %c0_i32_1 = arith.constant 0 : i32
    return %arg0, %c0_i32, %c0_i32_0 : i32, i32, i32
  }
}

</mosaic_0001>

<llo_original>
// kernel: discriminator_forward.2
$region0: #{discriminator_forward.2}
  #allocation0 [shape = 'u32[]', space=smem, size = 0x4, offset = 0x4, fixed_abs, tag = 'smem constant byte address 0x4 - core index']
  #allocation1 [shape = 'u32[72,128]{1,0:T(1,128)}', space=vmem, size = 0x9000, scoped, tag = 'internal scratch']
  #allocation2 [shape = 'f32[512,64]{1,0:T(8,128)}', space=vmem, size = 0x40000, scoped, tag = 'scratch operand']
  %s0 = inlined_call_operand.vmem [shape: f32[2,10,10,10,8], index: 0, kind: input, shape index: {}]
  %s1 = inlined_call_operand.vmem [shape: bf16[64,16], index: 1, kind: input, shape index: {}]
  %s2 = inlined_call_operand.vmem [shape: f32[1,16], index: 2, kind: input, shape index: {}]
  %s3 = inlined_call_operand.vmem [shape: f32[2,16,512], index: 3, kind: output, shape index: {}]
  %s4 = sld [smem:[#allocation0]]
  $region45: #{discriminator_forward.2} parent=0
    _
  %s6 = ssub.s32 1, %s4
  %s7 = scalar_select 0, %s6, %s4
  loop: start=0, step=1, limit=4
  $region2: #{discriminator_forward.2} parent=0 // loop_pre_header
    _
  $region3: #{discriminator_forward.2} parent=0 // loop_header
    %s9 = sphi 0, %s13
    %p10 = scmp.ge.s32.totalorder %s9, 4
    %s19 = sphi 0, %s21
    %s22 = sphi 0, %s19
    %s23 = sphi 0, %s22
    %s39 = sphi 0, %s23
    %s43 = sphi 0, %s43
    %s45 = sphi 0, %s43
    %s46 = sphi 0, %s45
    %s60 = sphi 0, %s46
    %s64 = sphi 0, %s64
    %s66 = sphi 0, %s64
    %s67 = sphi 0, %s66
    %s81 = sphi 0, %s67
    %s87 = sphi 0, %s89
    %s90 = sphi 0, %s87
    %s91 = sphi 0, %s90
    %s107 = sphi 0, %s91
  $region4: #{discriminator_forward.2} parent=0 // loop_header_branch
    %12 = sbr.rel (%p10) target = $region8
  $region5: #{discriminator_forward.2} parent=0 // loop_body
    %s14 = ssub.s32 %s9, 1
    %s15 = ssub.s32 %s9, 2
    %s16 = sadd.s32 %s9, 1
    %s17 = ssub.s32 %s9, %s16
    %p18 = scmp.eq.s32.totalorder %s17, 0
    %s20 = sadd.s32 %s19, 1
    %s21 = scalar_select %p18, %s19, %s20
    %p24 = pneg %p18
    %p25 = scmp.eq.s32.totalorder %s9, 1
    %p26 = por %p24, %p25
    %p27 = scmp.ne.s32.totalorder %s19, %s22
    %p28 = scmp.eq.s32.totalorder %s9, 0
    %p29 = por %p27, %p28
    %p30 = scmp.ne.s32.totalorder %s19, %s22
    %p31 = scmp.eq.s32.totalorder %s14, 1
    %p32 = por %p30, %p31
    %p33 = scmp.ne.s32.totalorder %s22, %s23
    %p34 = scmp.eq.s32.totalorder %s14, 0
    %p35 = por %p33, %p34
    %p36 = scmp.ne.s32.totalorder %s22, %s23
    %p37 = scmp.eq.s32.totalorder %s15, 1
    %p38 = por %p36, %p37
    %p40 = scmp.ne.s32.totalorder %s23, %s39
    %p41 = scmp.eq.s32.totalorder %s15, 0
    %p42 = por %p40, %p41
    %s44 = sadd.s32 %s43, 1
    %p47 = scmp.eq.s32.totalorder %s9, 1
    %p48 = scmp.ne.s32.totalorder %s43, %s45
    %p49 = scmp.eq.s32.totalorder %s9, 0
    %p50 = por %p48, %p49
    %p51 = scmp.ne.s32.totalorder %s43, %s45
    %p52 = scmp.eq.s32.totalorder %s14, 1
    %p53 = por %p51, %p52
    %p54 = scmp.ne.s32.totalorder %s45, %s46
    %p55 = scmp.eq.s32.totalorder %s14, 0
    %p56 = por %p54, %p55
    %p57 = scmp.ne.s32.totalorder %s45, %s46
    %p58 = scmp.eq.s32.totalorder %s15, 1
    %p59 = por %p57, %p58
    %p61 = scmp.ne.s32.totalorder %s46, %s60
    %p62 = scmp.eq.s32.totalorder %s15, 0
    %p63 = por %p61, %p62
    %s65 = sadd.s32 %s64, 1
    %p68 = scmp.eq.s32.totalorder %s9, 1
    %p69 = scmp.ne.s32.totalorder %s64, %s66
    %p70 = scmp.eq.s32.totalorder %s9, 0
    %p71 = por %p69, %p70
    %p72 = scmp.ne.s32.totalorder %s64, %s66
    %p73 = scmp.eq.s32.totalorder %s14, 1
    %p74 = por %p72, %p73
    %p75 = scmp.ne.s32.totalorder %s66, %s67
    %p76 = scmp.eq.s32.totalorder %s14, 0
    %p77 = por %p75, %p76
    %p78 = scmp.ne.s32.totalorder %s66, %s67
    %p79 = scmp.eq.s32.totalorder %s15, 1
    %p80 = por %p78, %p79
    %p82 = scmp.ne.s32.totalorder %s67, %s81
    %p83 = scmp.eq.s32.totalorder %s15, 0
    %p84 = por %p82, %p83
    %s85 = ssub.s32 %s9, %s16
    %p86 = scmp.eq.s32.totalorder %s85, 0
    %s88 = sadd.s32 %s87, 1
    %s89 = scalar_select %p86, %s87, %s88
    %p92 = pneg %p86
    %p93 = scmp.eq.s32.totalorder %s9, 1
    %p94 = por %p92, %p93
    %p95 = scmp.ne.s32.totalorder %s87, %s90
    %p96 = scmp.eq.s32.totalorder %s9, 0
    %p97 = por %p95, %p96
    %p98 = scmp.ne.s32.totalorder %s87, %s90
    %p99 = scmp.eq.s32.totalorder %s14, 1
    %p100 = por %p98, %p99
    %p101 = scmp.ne.s32.totalorder %s90, %s91
    %p102 = scmp.eq.s32.totalorder %s14, 0
    %p103 = por %p101, %p102
    %p104 = scmp.ne.s32.totalorder %s90, %s91
    %p105 = scmp.eq.s32.totalorder %s15, 1
    %p106 = por %p104, %p105
    %p108 = scmp.ne.s32.totalorder %s91, %s107
    %p109 = scmp.eq.s32.totalorder %s15, 0
    %p110 = por %p108, %p109
    %p111 = scmp.le.s32.totalorder 1, %s9
    %p112 = scmp.lt.s32.totalorder %s9, 3
    %p113 = pnand %p111, %p112
    %p114 = pneg %p113
    // Predicated region
    $region9: #{discriminator_forward.2} parent=5 // pred_check
      _
    $region10: #{discriminator_forward.2} parent=5 // pred_check_branch
      %116 = sbr.rel (%p113) target = $region12
    $region11: #{discriminator_forward.2} parent=5 // pred_region
      %s117 = ssub.s32 %s9, 1
      // Predicated region
      $region13: #{discriminator_forward.2} parent=11 // pred_check
        %p118 = pneg %p56
      $region14: #{discriminator_forward.2} parent=11 // pred_check_branch
        %120 = sbr.rel (%p118) target = $region16
      $region15: #{discriminator_forward.2} parent=11 // pred_region
        _
      $region16: #{discriminator_forward.2} parent=11 // pred_fallthru
        _
      // Predicated region
      $region17: #{discriminator_forward.2} parent=11 // pred_check
        %p121 = pneg %p77
      $region18: #{discriminator_forward.2} parent=11 // pred_check_branch
        %123 = sbr.rel (%p121) target = $region20
      $region19: #{discriminator_forward.2} parent=11 // pred_region
        _
      $region20: #{discriminator_forward.2} parent=11 // pred_fallthru
        _
    $region12: #{discriminator_forward.2} parent=5 // pred_fallthru
      _
    %p124 = scmp.lt.s32.totalorder %s9, 2
    // Predicated region
    $region21: #{discriminator_forward.2} parent=5 // pred_check
      %p125 = pneg %p124
    $region22: #{discriminator_forward.2} parent=5 // pred_check_branch
      %127 = sbr.rel (%p125) target = $region24
    $region23: #{discriminator_forward.2} parent=5 // pred_region
      // Predicated region
      $region25: #{discriminator_forward.2} parent=23 // pred_check
        %p128 = pneg %p29
      $region26: #{discriminator_forward.2} parent=23 // pred_check_branch
        %130 = sbr.rel (%p128) target = $region28
      $region27: #{discriminator_forward.2} parent=23 // pred_region
        %p131 = scmp.lt.s32.totalorder %s9, 1
        %s132 = scalar_select %p131, %s9, 1
        %s133 = smul.addr %s132, 200
        %s134 = smul.addr %s133, 8
        %s135 = scalar_lea.vmem %s0, %s134
      $region28: #{discriminator_forward.2} parent=23 // pred_fallthru
        _
    $region24: #{discriminator_forward.2} parent=5 // pred_fallthru
      _
    %p136 = scmp.le.s32.totalorder 1, %s9
    %p137 = scmp.lt.s32.totalorder %s9, 3
    %p138 = pnand %p136, %p137
    %p139 = pneg %p138
    // Predicated region
    $region29: #{discriminator_forward.2} parent=5 // pred_check
      _
    $region30: #{discriminator_forward.2} parent=5 // pred_check_branch
      %141 = sbr.rel (%p138) target = $region32
    $region31: #{discriminator_forward.2} parent=5 // pred_region
      %s142 = ssub.s32 %s9, 1
      %p143 = scmp.lt.s32.totalorder %s14, 1
      %s144 = scalar_select %p143, %s14, 1
      %s145 = smul.addr %s144, 200
      %s146 = smul.addr %s145, 8
      %s147 = scalar_lea.vmem %s0, %s146
      %p148 = pneg %p35
      %p149 = pneg %p32
      %p150 = pneg %p56
      %p151 = pneg %p53
      %p152 = pneg %p77
      %p153 = pneg %p74
      %p154 = pneg %p103
      %p155 = pneg %p100
      %p156 = scmp.lt.s32.totalorder %s14, 1
      %s157 = scalar_select %p156, %s14, 1
      %s158 = smul.addr %s157, 8
      %s159 = smul.addr %s158, 8
      %s160 = scalar_lea.vmem %s3, %s159
      %p161 = scmp.lt.s32.totalorder %s14, 1
      %s162 = scalar_select %p161, %s14, 1
      %s163 = smul.addr %s162, 200
      %s164 = smul.addr %s163, 8
      %s165 = scalar_lea.vmem %s0, %s164
      %p166 = scmp.lt.s32.totalorder %s14, 1
      %s167 = scalar_select %p166, %s14, 1
      %s168 = smul.addr %s167, 8
      %s169 = smul.addr %s168, 8
      %s170 = scalar_lea.vmem %s3, %s169
      %v172 = vld [vmem:[%s165] sm:$0xff]
      %v173 = vld [vmem:[%s165 + $0x10] sm:$0xff]
      %v174 = vld [vmem:[%s165 + $0x20] sm:$0xff]
      %v175 = vld [vmem:[%s165 + $0x30] sm:$0xff]
      %v176 = vld [vmem:[%s165 + $0x40] sm:$0xff]
      %v177 = vld [vmem:[%s165 + $0x50] sm:$0xff]
      %v178 = vld [vmem:[%s165 + $0x60] sm:$0xff]
      %v179 = vld [vmem:[%s165 + $0x70] sm:$0xff]
      %v180 = vld [vmem:[%s165 + $0xa0] sm:$0xff]
      %v181 = vld [vmem:[%s165 + $0xb0] sm:$0xff]
      %v182 = vld [vmem:[%s165 + $0xc0] sm:$0xff]
      %v183 = vld [vmem:[%s165 + $0xd0] sm:$0xff]
      %v184 = vld [vmem:[%s165 + $0xe0] sm:$0xff]
      %v185 = vld [vmem:[%s165 + $0xf0] sm:$0xff]
      %v186 = vld [vmem:[%s165 + $0x100] sm:$0xff]
      %v187 = vld [vmem:[%s165 + $0x110] sm:$0xff]
      %v188 = vld [vmem:[%s165 + $0x140] sm:$0xff]
      %v189 = vld [vmem:[%s165 + $0x150] sm:$0xff]
      %v190 = vld [vmem:[%s165 + $0x160] sm:$0xff]
      %v191 = vld [vmem:[%s165 + $0x170] sm:$0xff]
      %v192 = vld [vmem:[%s165 + $0x180] sm:$0xff]
      %v193 = vld [vmem:[%s165 + $0x190] sm:$0xff]
      %v194 = vld [vmem:[%s165 + $0x1a0] sm:$0xff]
      %v195 = vld [vmem:[%s165 + $0x1b0] sm:$0xff]
      %v196 = vld [vmem:[%s165 + $0x1e0] sm:$0xff]
      %v197 = vld [vmem:[%s165 + $0x1f0] sm:$0xff]
      %v198 = vld [vmem:[%s165 + $0x200] sm:$0xff]
      %v199 = vld [vmem:[%s165 + $0x210] sm:$0xff]
      %v200 = vld [vmem:[%s165 + $0x220] sm:$0xff]
      %v201 = vld [vmem:[%s165 + $0x230] sm:$0xff]
      %v202 = vld [vmem:[%s165 + $0x240] sm:$0xff]
      %v203 = vld [vmem:[%s165 + $0x250] sm:$0xff]
      %v204 = vld [vmem:[%s165 + $0x280] sm:$0xff]
      %v205 = vld [vmem:[%s165 + $0x290] sm:$0xff]
      %v206 = vld [vmem:[%s165 + $0x2a0] sm:$0xff]
      %v207 = vld [vmem:[%s165 + $0x2b0] sm:$0xff]
      %v208 = vld [vmem:[%s165 + $0x2c0] sm:$0xff]
      %v209 = vld [vmem:[%s165 + $0x2d0] sm:$0xff]
      %v210 = vld [vmem:[%s165 + $0x2e0] sm:$0xff]
      %v211 = vld [vmem:[%s165 + $0x2f0] sm:$0xff]
      %v212 = vld [vmem:[%s165 + $0x320] sm:$0xff]
      %v213 = vld [vmem:[%s165 + $0x330] sm:$0xff]
      %v214 = vld [vmem:[%s165 + $0x340] sm:$0xff]
      %v215 = vld [vmem:[%s165 + $0x350] sm:$0xff]
      %v216 = vld [vmem:[%s165 + $0x360] sm:$0xff]
      %v217 = vld [vmem:[%s165 + $0x370] sm:$0xff]
      %v218 = vld [vmem:[%s165 + $0x380] sm:$0xff]
      %v219 = vld [vmem:[%s165 + $0x390] sm:$0xff]
      %v220 = vld [vmem:[%s165 + $0x3c0] sm:$0xff]
      %v221 = vld [vmem:[%s165 + $0x3d0] sm:$0xff]
      %v222 = vld [vmem:[%s165 + $0x3e0] sm:$0xff]
      %v223 = vld [vmem:[%s165 + $0x3f0] sm:$0xff]
      %v224 = vld [vmem:[%s165 + $0x400] sm:$0xff]
      %v225 = vld [vmem:[%s165 + $0x410] sm:$0xff]
      %v226 = vld [vmem:[%s165 + $0x420] sm:$0xff]
      %v227 = vld [vmem:[%s165 + $0x430] sm:$0xff]
      %v228 = vld [vmem:[%s165 + $0x460] sm:$0xff]
      %v229 = vld [vmem:[%s165 + $0x470] sm:$0xff]
      %v230 = vld [vmem:[%s165 + $0x480] sm:$0xff]
      %v231 = vld [vmem:[%s165 + $0x490] sm:$0xff]
      %v232 = vld [vmem:[%s165 + $0x4a0] sm:$0xff]
      %v233 = vld [vmem:[%s165 + $0x4b0] sm:$0xff]
      %v234 = vld [vmem:[%s165 + $0x4c0] sm:$0xff]
      %v235 = vld [vmem:[%s165 + $0x4d0] sm:$0xff]
      %vm236 = vcmask 64512
      %237 = vst.msk [vmem:[#allocation2] sm:$0xff] %vm236, %v172
      %238 = vst.msk [vmem:[#allocation2 + $0x8] sm:$0xff] %vm236, %v173
      %239 = vst.msk [vmem:[#allocation2 + $0x10] sm:$0xff] %vm236, %v174
      %240 = vst.msk [vmem:[#allocation2 + $0x18] sm:$0xff] %vm236, %v175
      %241 = vst.msk [vmem:[#allocation2 + $0x20] sm:$0xff] %vm236, %v176
      %242 = vst.msk [vmem:[#allocation2 + $0x28] sm:$0xff] %vm236, %v177
      %243 = vst.msk [vmem:[#allocation2 + $0x30] sm:$0xff] %vm236, %v178
      %244 = vst.msk [vmem:[#allocation2 + $0x38] sm:$0xff] %vm236, %v179
      %245 = vst.msk [vmem:[#allocation2 + $0x40] sm:$0xff] %vm236, %v180
      %246 = vst.msk [vmem:[#allocation2 + $0x48] sm:$0xff] %vm236, %v181
      %247 = vst.msk [vmem:[#allocation2 + $0x50] sm:$0xff] %vm236, %v182
      %248 = vst.msk [vmem:[#allocation2 + $0x58] sm:$0xff] %vm236, %v183
      %249 = vst.msk [vmem:[#allocation2 + $0x60] sm:$0xff] %vm236, %v184
      %250 = vst.msk [vmem:[#allocation2 + $0x68] sm:$0xff] %vm236, %v185
      %251 = vst.msk [vmem:[#allocation2 + $0x70] sm:$0xff] %vm236, %v186
      %252 = vst.msk [vmem:[#allocation2 + $0x78] sm:$0xff] %vm236, %v187
      %253 = vst.msk [vmem:[#allocation2 + $0x80] sm:$0xff] %vm236, %v188
      %254 = vst.msk [vmem:[#allocation2 + $0x88] sm:$0xff] %vm236, %v189
      %255 = vst.msk [vmem:[#allocation2 + $0x90] sm:$0xff] %vm236, %v190
      %256 = vst.msk [vmem:[#allocation2 + $0x98] sm:$0xff] %vm236, %v191
      %257 = vst.msk [vmem:[#allocation2 + $0xa0] sm:$0xff] %vm236, %v192
      %258 = vst.msk [vmem:[#allocation2 + $0xa8] sm:$0xff] %vm236, %v193
      %259 = vst.msk [vmem:[#allocation2 + $0xb0] sm:$0xff] %vm236, %v194
      %260 = vst.msk [vmem:[#allocation2 + $0xb8] sm:$0xff] %vm236, %v195
      %261 = vst.msk [vmem:[#allocation2 + $0xc0] sm:$0xff] %vm236, %v196
      %262 = vst.msk [vmem:[#allocation2 + $0xc8] sm:$0xff] %vm236, %v197
      %263 = vst.msk [vmem:[#allocation2 + $0xd0] sm:$0xff] %vm236, %v198
      %264 = vst.msk [vmem:[#allocation2 + $0xd8] sm:$0xff] %vm236, %v199
      %265 = vst.msk [vmem:[#allocation2 + $0xe0] sm:$0xff] %vm236, %v200
      %266 = vst.msk [vmem:[#allocation2 + $0xe8] sm:$0xff] %vm236, %v201
      %267 = vst.msk [vmem:[#allocation2 + $0xf0] sm:$0xff] %vm236, %v202
      %268 = vst.msk [vmem:[#allocation2 + $0xf8] sm:$0xff] %vm236, %v203
      %269 = vst.msk [vmem:[#allocation2 + $0x100] sm:$0xff] %vm236, %v204
      %270 = vst.msk [vmem:[#allocation2 + $0x108] sm:$0xff] %vm236, %v205
      %271 = vst.msk [vmem:[#allocation2 + $0x110] sm:$0xff] %vm236, %v206
      %272 = vst.msk [vmem:[#allocation2 + $0x118] sm:$0xff] %vm236, %v207
      %273 = vst.msk [vmem:[#allocation2 + $0x120] sm:$0xff] %vm236, %v208
      %274 = vst.msk [vmem:[#allocation2 + $0x128] sm:$0xff] %vm236, %v209
      %275 = vst.msk [vmem:[#allocation2 + $0x130] sm:$0xff] %vm236, %v210
      %276 = vst.msk [vmem:[#allocation2 + $0x138] sm:$0xff] %vm236, %v211
      %277 = vst.msk [vmem:[#allocation2 + $0x140] sm:$0xff] %vm236, %v212
      %278 = vst.msk [vmem:[#allocation2 + $0x148] sm:$0xff] %vm236, %v213
      %279 = vst.msk [vmem:[#allocation2 + $0x150] sm:$0xff] %vm236, %v214
      %280 = vst.msk [vmem:[#allocation2 + $0x158] sm:$0xff] %vm236, %v215
      %281 = vst.msk [vmem:[#allocation2 + $0x160] sm:$0xff] %vm236, %v216
      %282 = vst.msk [vmem:[#allocation2 + $0x168] sm:$0xff] %vm236, %v217
      %283 = vst.msk [vmem:[#allocation2 + $0x170] sm:$0xff] %vm236, %v218
      %284 = vst.msk [vmem:[#allocation2 + $0x178] sm:$0xff] %vm236, %v219
      %285 = vst.msk [vmem:[#allocation2 + $0x180] sm:$0xff] %vm236, %v220
      %286 = vst.msk [vmem:[#allocation2 + $0x188] sm:$0xff] %vm236, %v221
      %287 = vst.msk [vmem:[#allocation2 + $0x190] sm:$0xff] %vm236, %v222
      %288 = vst.msk [vmem:[#allocation2 + $0x198] sm:$0xff] %vm236, %v223
      %289 = vst.msk [vmem:[#allocation2 + $0x1a0] sm:$0xff] %vm236, %v224
      %290 = vst.msk [vmem:[#allocation2 + $0x1a8] sm:$0xff] %vm236, %v225
      %291 = vst.msk [vmem:[#allocation2 + $0x1b0] sm:$0xff] %vm236, %v226
      %292 = vst.msk [vmem:[#allocation2 + $0x1b8] sm:$0xff] %vm236, %v227
      %293 = vst.msk [vmem:[#allocation2 + $0x1c0] sm:$0xff] %vm236, %v228
      %294 = vst.msk [vmem:[#allocation2 + $0x1c8] sm:$0xff] %vm236, %v229
      %295 = vst.msk [vmem:[#allocation2 + $0x1d0] sm:$0xff] %vm236, %v230
      %296 = vst.msk [vmem:[#allocation2 + $0x1d8] sm:$0xff] %vm236, %v231
      %297 = vst.msk [vmem:[#allocation2 + $0x1e0] sm:$0xff] %vm236, %v232
      %298 = vst.msk [vmem:[#allocation2 + $0x1e8] sm:$0xff] %vm236, %v233
      %299 = vst.msk [vmem:[#allocation2 + $0x1f0] sm:$0xff] %vm236, %v234
      %300 = vst.msk [vmem:[#allocation2 + $0x1f8] sm:$0xff] %vm236, %v235
      %v301 = vld [vmem:[%s165 + $0x1] sm:$0xff]
      %v302 = vld [vmem:[%s165 + $0x11] sm:$0xff]
      %v303 = vld [vmem:[%s165 + $0x21] sm:$0xff]
      %v304 = vld [vmem:[%s165 + $0x31] sm:$0xff]
      %v305 = vld [vmem:[%s165 + $0x41] sm:$0xff]
      %v306 = vld [vmem:[%s165 + $0x51] sm:$0xff]
      %v307 = vld [vmem:[%s165 + $0x61] sm:$0xff]
      %v308 = vld [vmem:[%s165 + $0x71] sm:$0xff]
      %v309 = vld [vmem:[%s165 + $0xa1] sm:$0xff]
      %v310 = vld [vmem:[%s165 + $0xb1] sm:$0xff]
      %v311 = vld [vmem:[%s165 + $0xc1] sm:$0xff]
      %v312 = vld [vmem:[%s165 + $0xd1] sm:$0xff]
      %v313 = vld [vmem:[%s165 + $0xe1] sm:$0xff]
      %v314 = vld [vmem:[%s165 + $0xf1] sm:$0xff]
      %v315 = vld [vmem:[%s165 + $0x101] sm:$0xff]
      %v316 = vld [vmem:[%s165 + $0x111] sm:$0xff]
      %v317 = vld [vmem:[%s165 + $0x141] sm:$0xff]
      %v318 = vld [vmem:[%s165 + $0x151] sm:$0xff]
      %v319 = vld [vmem:[%s165 + $0x161] sm:$0xff]
      %v320 = vld [vmem:[%s165 + $0x171] sm:$0xff]
      %v321 = vld [vmem:[%s165 + $0x181] sm:$0xff]
      %v322 = vld [vmem:[%s165 + $0x191] sm:$0xff]
      %v323 = vld [vmem:[%s165 + $0x1a1] sm:$0xff]
      %v324 = vld [vmem:[%s165 + $0x1b1] sm:$0xff]
      %v325 = vld [vmem:[%s165 + $0x1e1] sm:$0xff]
      %v326 = vld [vmem:[%s165 + $0x1f1] sm:$0xff]
      %v327 = vld [vmem:[%s165 + $0x201] sm:$0xff]
      %v328 = vld [vmem:[%s165 + $0x211] sm:$0xff]
      %v329 = vld [vmem:[%s165 + $0x221] sm:$0xff]
      %v330 = vld [vmem:[%s165 + $0x231] sm:$0xff]
      %v331 = vld [vmem:[%s165 + $0x241] sm:$0xff]
      %v332 = vld [vmem:[%s165 + $0x251] sm:$0xff]
      %v333 = vld [vmem:[%s165 + $0x281] sm:$0xff]
      %v334 = vld [vmem:[%s165 + $0x291] sm:$0xff]
      %v335 = vld [vmem:[%s165 + $0x2a1] sm:$0xff]
      %v336 = vld [vmem:[%s165 + $0x2b1] sm:$0xff]
      %v337 = vld [vmem:[%s165 + $0x2c1] sm:$0xff]
      %v338 = vld [vmem:[%s165 + $0x2d1] sm:$0xff]
      %v339 = vld [vmem:[%s165 + $0x2e1] sm:$0xff]
      %v340 = vld [vmem:[%s165 + $0x2f1] sm:$0xff]
      %v341 = vld [vmem:[%s165 + $0x321] sm:$0xff]
      %v342 = vld [vmem:[%s165 + $0x331] sm:$0xff]
      %v343 = vld [vmem:[%s165 + $0x341] sm:$0xff]
      %v344 = vld [vmem:[%s165 + $0x351] sm:$0xff]
      %v345 = vld [vmem:[%s165 + $0x361] sm:$0xff]
      %v346 = vld [vmem:[%s165 + $0x371] sm:$0xff]
      %v347 = vld [vmem:[%s165 + $0x381] sm:$0xff]
      %v348 = vld [vmem:[%s165 + $0x391] sm:$0xff]
      %v349 = vld [vmem:[%s165 + $0x3c1] sm:$0xff]
      %v350 = vld [vmem:[%s165 + $0x3d1] sm:$0xff]
      %v351 = vld [vmem:[%s165 + $0x3e1] sm:$0xff]
      %v352 = vld [vmem:[%s165 + $0x3f1] sm:$0xff]
      %v353 = vld [vmem:[%s165 + $0x401] sm:$0xff]
      %v354 = vld [vmem:[%s165 + $0x411] sm:$0xff]
      %v355 = vld [vmem:[%s165 + $0x421] sm:$0xff]
      %v356 = vld [vmem:[%s165 + $0x431] sm:$0xff]
      %v357 = vld [vmem:[%s165 + $0x461] sm:$0xff]
      %v358 = vld [vmem:[%s165 + $0x471] sm:$0xff]
      %v359 = vld [vmem:[%s165 + $0x481] sm:$0xff]
      %v360 = vld [vmem:[%s165 + $0x491] sm:$0xff]
      %v361 = vld [vmem:[%s165 + $0x4a1] sm:$0xff]
      %v362 = vld [vmem:[%s165 + $0x4b1] sm:$0xff]
      %v363 = vld [vmem:[%s165 + $0x4c1] sm:$0xff]
      %v364 = vld [vmem:[%s165 + $0x4d1] sm:$0xff]
      %429 = vrot.lane.b32.xlu0 %v301, 8
      %v430 = vpop.permute.xlu0 %429
      %431 = vrot.lane.b32.xlu0 %v302, 8
      %v432 = vpop.permute.xlu0 %431
      %433 = vrot.lane.b32.xlu0 %v303, 8
      %v434 = vpop.permute.xlu0 %433
      %435 = vrot.lane.b32.xlu0 %v304, 8
      %v436 = vpop.permute.xlu0 %435
      %437 = vrot.lane.b32.xlu0 %v305, 8
      %v438 = vpop.permute.xlu0 %437
      %439 = vrot.lane.b32.xlu0 %v306, 8
      %v440 = vpop.permute.xlu0 %439
      %441 = vrot.lane.b32.xlu0 %v307, 8
      %v442 = vpop.permute.xlu0 %441
      %443 = vrot.lane.b32.xlu0 %v308, 8
      %v444 = vpop.permute.xlu0 %443
      %445 = vrot.lane.b32.xlu0 %v309, 8
      %v446 = vpop.permute.xlu0 %445
      %447 = vrot.lane.b32.xlu0 %v310, 8
      %v448 = vpop.permute.xlu0 %447
      %449 = vrot.lane.b32.xlu0 %v311, 8
      %v450 = vpop.permute.xlu0 %449
      %451 = vrot.lane.b32.xlu0 %v312, 8
      %v452 = vpop.permute.xlu0 %451
      %453 = vrot.lane.b32.xlu0 %v313, 8
      %v454 = vpop.permute.xlu0 %453
      %455 = vrot.lane.b32.xlu0 %v314, 8
      %v456 = vpop.permute.xlu0 %455
      %457 = vrot.lane.b32.xlu0 %v315, 8
      %v458 = vpop.permute.xlu0 %457
      %459 = vrot.lane.b32.xlu0 %v316, 8
      %v460 = vpop.permute.xlu0 %459
      %461 = vrot.lane.b32.xlu0 %v317, 8
      %v462 = vpop.permute.xlu0 %461
      %463 = vrot.lane.b32.xlu0 %v318, 8
      %v464 = vpop.permute.xlu0 %463
      %465 = vrot.lane.b32.xlu0 %v319, 8
      %v466 = vpop.permute.xlu0 %465
      %467 = vrot.lane.b32.xlu0 %v320, 8
      %v468 = vpop.permute.xlu0 %467
      %469 = vrot.lane.b32.xlu0 %v321, 8
      %v470 = vpop.permute.xlu0 %469
      %471 = vrot.lane.b32.xlu0 %v322, 8
      %v472 = vpop.permute.xlu0 %471
      %473 = vrot.lane.b32.xlu0 %v323, 8
      %v474 = vpop.permute.xlu0 %473
      %475 = vrot.lane.b32.xlu0 %v324, 8
      %v476 = vpop.permute.xlu0 %475
      %477 = vrot.lane.b32.xlu0 %v325, 8
      %v478 = vpop.permute.xlu0 %477
      %479 = vrot.lane.b32.xlu0 %v326, 8
      %v480 = vpop.permute.xlu0 %479
      %481 = vrot.lane.b32.xlu0 %v327, 8
      %v482 = vpop.permute.xlu0 %481
      %483 = vrot.lane.b32.xlu0 %v328, 8
      %v484 = vpop.permute.xlu0 %483
      %485 = vrot.lane.b32.xlu0 %v329, 8
      %v486 = vpop.permute.xlu0 %485
      %487 = vrot.lane.b32.xlu0 %v330, 8
      %v488 = vpop.permute.xlu0 %487
      %489 = vrot.lane.b32.xlu0 %v331, 8
      %v490 = vpop.permute.xlu0 %489
      %491 = vrot.lane.b32.xlu0 %v332, 8
      %v492 = vpop.permute.xlu0 %491
      %493 = vrot.lane.b32.xlu0 %v333, 8
      %v494 = vpop.permute.xlu0 %493
      %495 = vrot.lane.b32.xlu0 %v334, 8
      %v496 = vpop.permute.xlu0 %495
      %497 = vrot.lane.b32.xlu0 %v335, 8
      %v498 = vpop.permute.xlu0 %497
      %499 = vrot.lane.b32.xlu0 %v336, 8
      %v500 = vpop.permute.xlu0 %499
      %501 = vrot.lane.b32.xlu0 %v337, 8
      %v502 = vpop.permute.xlu0 %501
      %503 = vrot.lane.b32.xlu0 %v338, 8
      %v504 = vpop.permute.xlu0 %503
      %505 = vrot.lane.b32.xlu0 %v339, 8
      %v506 = vpop.permute.xlu0 %505
      %507 = vrot.lane.b32.xlu0 %v340, 8
      %v508 = vpop.permute.xlu0 %507
      %509 = vrot.lane.b32.xlu0 %v341, 8
      %v510 = vpop.permute.xlu0 %509
      %511 = vrot.lane.b32.xlu0 %v342, 8
      %v512 = vpop.permute.xlu0 %511
      %513 = vrot.lane.b32.xlu0 %v343, 8
      %v514 = vpop.permute.xlu0 %513
      %515 = vrot.lane.b32.xlu0 %v344, 8
      %v516 = vpop.permute.xlu0 %515
      %517 = vrot.lane.b32.xlu0 %v345, 8
      %v518 = vpop.permute.xlu0 %517
      %519 = vrot.lane.b32.xlu0 %v346, 8
      %v520 = vpop.permute.xlu0 %519
      %521 = vrot.lane.b32.xlu0 %v347, 8
      %v522 = vpop.permute.xlu0 %521
      %523 = vrot.lane.b32.xlu0 %v348, 8
      %v524 = vpop.permute.xlu0 %523
      %525 = vrot.lane.b32.xlu0 %v349, 8
      %v526 = vpop.permute.xlu0 %525
      %527 = vrot.lane.b32.xlu0 %v350, 8
      %v528 = vpop.permute.xlu0 %527
      %529 = vrot.lane.b32.xlu0 %v351, 8
      %v530 = vpop.permute.xlu0 %529
      %531 = vrot.lane.b32.xlu0 %v352, 8
      %v532 = vpop.permute.xlu0 %531
      %533 = vrot.lane.b32.xlu0 %v353, 8
      %v534 = vpop.permute.xlu0 %533
      %535 = vrot.lane.b32.xlu0 %v354, 8
      %v536 = vpop.permute.xlu0 %535
      %537 = vrot.lane.b32.xlu0 %v355, 8
      %v538 = vpop.permute.xlu0 %537
      %539 = vrot.lane.b32.xlu0 %v356, 8
      %v540 = vpop.permute.xlu0 %539
      %541 = vrot.lane.b32.xlu0 %v357, 8
      %v542 = vpop.permute.xlu0 %541
      %543 = vrot.lane.b32.xlu0 %v358, 8
      %v544 = vpop.permute.xlu0 %543
      %545 = vrot.lane.b32.xlu0 %v359, 8
      %v546 = vpop.permute.xlu0 %545
      %547 = vrot.lane.b32.xlu0 %v360, 8
      %v548 = vpop.permute.xlu0 %547
      %549 = vrot.lane.b32.xlu0 %v361, 8
      %v550 = vpop.permute.xlu0 %549
      %551 = vrot.lane.b32.xlu0 %v362, 8
      %v552 = vpop.permute.xlu0 %551
      %553 = vrot.lane.b32.xlu0 %v363, 8
      %v554 = vpop.permute.xlu0 %553
      %555 = vrot.lane.b32.xlu0 %v364, 8
      %v556 = vpop.permute.xlu0 %555
      %vm621 = vcmask 130112
      %622 = vst.msk [vmem:[#allocation2] sm:$0xff] %vm621, %v430
      %623 = vst.msk [vmem:[#allocation2 + $0x8] sm:$0xff] %vm621, %v432
      %624 = vst.msk [vmem:[#allocation2 + $0x10] sm:$0xff] %vm621, %v434
      %625 = vst.msk [vmem:[#allocation2 + $0x18] sm:$0xff] %vm621, %v436
      %626 = vst.msk [vmem:[#allocation2 + $0x20] sm:$0xff] %vm621, %v438
      %627 = vst.msk [vmem:[#allocation2 + $0x28] sm:$0xff] %vm621, %v440
      %628 = vst.msk [vmem:[#allocation2 + $0x30] sm:$0xff] %vm621, %v442
      %629 = vst.msk [vmem:[#allocation2 + $0x38] sm:$0xff] %vm621, %v444
      %630 = vst.msk [vmem:[#allocation2 + $0x40] sm:$0xff] %vm621, %v446
      %631 = vst.msk [vmem:[#allocation2 + $0x48] sm:$0xff] %vm621, %v448
      %632 = vst.msk [vmem:[#allocation2 + $0x50] sm:$0xff] %vm621, %v450
      %633 = vst.msk [vmem:[#allocation2 + $0x58] sm:$0xff] %vm621, %v452
      %634 = vst.msk [vmem:[#allocation2 + $0x60] sm:$0xff] %vm621, %v454
      %635 = vst.msk [vmem:[#allocation2 + $0x68] sm:$0xff] %vm621, %v456
      %636 = vst.msk [vmem:[#allocation2 + $0x70] sm:$0xff] %vm621, %v458
      %637 = vst.msk [vmem:[#allocation2 + $0x78] sm:$0xff] %vm621, %v460
      %638 = vst.msk [vmem:[#allocation2 + $0x80] sm:$0xff] %vm621, %v462
      %639 = vst.msk [vmem:[#allocation2 + $0x88] sm:$0xff] %vm621, %v464
      %640 = vst.msk [vmem:[#allocation2 + $0x90] sm:$0xff] %vm621, %v466
      %641 = vst.msk [vmem:[#allocation2 + $0x98] sm:$0xff] %vm621, %v468
      %642 = vst.msk [vmem:[#allocation2 + $0xa0] sm:$0xff] %vm621, %v470
      %643 = vst.msk [vmem:[#allocation2 + $0xa8] sm:$0xff] %vm621, %v472
      %644 = vst.msk [vmem:[#allocation2 + $0xb0] sm:$0xff] %vm621, %v474
      %645 = vst.msk [vmem:[#allocation2 + $0xb8] sm:$0xff] %vm621, %v476
      %646 = vst.msk [vmem:[#allocation2 + $0xc0] sm:$0xff] %vm621, %v478
      %647 = vst.msk [vmem:[#allocation2 + $0xc8] sm:$0xff] %vm621, %v480
      %648 = vst.msk [vmem:[#allocation2 + $0xd0] sm:$0xff] %vm621, %v482
      %649 = vst.msk [vmem:[#allocation2 + $0xd8] sm:$0xff] %vm621, %v484
      %650 = vst.msk [vmem:[#allocation2 + $0xe0] sm:$0xff] %vm621, %v486
      %651 = vst.msk [vmem:[#allocation2 + $0xe8] sm:$0xff] %vm621, %v488
      %652 = vst.msk [vmem:[#allocation2 + $0xf0] sm:$0xff] %vm621, %v490
      %653 = vst.msk [vmem:[#allocation2 + $0xf8] sm:$0xff] %vm621, %v492
      %654 = vst.msk [vmem:[#allocation2 + $0x100] sm:$0xff] %vm621, %v494
      %655 = vst.msk [vmem:[#allocation2 + $0x108] sm:$0xff] %vm621, %v496
      %656 = vst.msk [vmem:[#allocation2 + $0x110] sm:$0xff] %vm621, %v498
      %657 = vst.msk [vmem:[#allocation2 + $0x118] sm:$0xff] %vm621, %v500
      %658 = vst.msk [vmem:[#allocation2 + $0x120] sm:$0xff] %vm621, %v502
      %659 = vst.msk [vmem:[#allocation2 + $0x128] sm:$0xff] %vm621, %v504
      %660 = vst.msk [vmem:[#allocation2 + $0x130] sm:$0xff] %vm621, %v506
      %661 = vst.msk [vmem:[#allocation2 + $0x138] sm:$0xff] %vm621, %v508
      %662 = vst.msk [vmem:[#allocation2 + $0x140] sm:$0xff] %vm621, %v510
      %663 = vst.msk [vmem:[#allocation2 + $0x148] sm:$0xff] %vm621, %v512
      %664 = vst.msk [vmem:[#allocation2 + $0x150] sm:$0xff] %vm621, %v514
      %665 = vst.msk [vmem:[#allocation2 + $0x158] sm:$0xff] %vm621, %v516
      %666 = vst.msk [vmem:[#allocation2 + $0x160] sm:$0xff] %vm621, %v518
      %667 = vst.msk [vmem:[#allocation2 + $0x168] sm:$0xff] %vm621, %v520
      %668 = vst.msk [vmem:[#allocation2 + $0x170] sm:$0xff] %vm621, %v522
      %669 = vst.msk [vmem:[#allocation2 + $0x178] sm:$0xff] %vm621, %v524
      %670 = vst.msk [vmem:[#allocation2 + $0x180] sm:$0xff] %vm621, %v526
      %671 = vst.msk [vmem:[#allocation2 + $0x188] sm:$0xff] %vm621, %v528
      %672 = vst.msk [vmem:[#allocation2 + $0x190] sm:$0xff] %vm621, %v530
      %673 = vst.msk [vmem:[#allocation2 + $0x198] sm:$0xff] %vm621, %v532
      %674 = vst.msk [vmem:[#allocation2 + $0x1a0] sm:$0xff] %vm621, %v534
      %675 = vst.msk [vmem:[#allocation2 + $0x1a8] sm:$0xff] %vm621, %v536
      %676 = vst.msk [vmem:[#allocation2 + $0x1b0] sm:$0xff] %vm621, %v538
      %677 = vst.msk [vmem:[#allocation2 + $0x1b8] sm:$0xff] %vm621, %v540
      %678 = vst.msk [vmem:[#allocation2 + $0x1c0] sm:$0xff] %vm621, %v542
      %679 = vst.msk [vmem:[#allocation2 + $0x1c8] sm:$0xff] %vm621, %v544
      %680 = vst.msk [vmem:[#allocation2 + $0x1d0] sm:$0xff] %vm621, %v546
      %681 = vst.msk [vmem:[#allocation2 + $0x1d8] sm:$0xff] %vm621, %v548
      %682 = vst.msk [vmem:[#allocation2 + $0x1e0] sm:$0xff] %vm621, %v550
      %683 = vst.msk [vmem:[#allocation2 + $0x1e8] sm:$0xff] %vm621, %v552
      %684 = vst.msk [vmem:[#allocation2 + $0x1f0] sm:$0xff] %vm621, %v554
      %685 = vst.msk [vmem:[#allocation2 + $0x1f8] sm:$0xff] %vm621, %v556
      %s686 = scalar_lea.vmem %s165, 16
      %v687 = vld [vmem:[%s686] sm:$0xff]
      %v688 = vld [vmem:[%s686 + $0x10] sm:$0xff]
      %v689 = vld [vmem:[%s686 + $0x20] sm:$0xff]
      %v690 = vld [vmem:[%s686 + $0x30] sm:$0xff]
      %v691 = vld [vmem:[%s686 + $0x40] sm:$0xff]
      %v692 = vld [vmem:[%s686 + $0x50] sm:$0xff]
      %v693 = vld [vmem:[%s686 + $0x60] sm:$0xff]
      %v694 = vld [vmem:[%s686 + $0x70] sm:$0xff]
      %v695 = vld [vmem:[%s686 + $0xa0] sm:$0xff]
      %v696 = vld [vmem:[%s686 + $0xb0] sm:$0xff]
      %v697 = vld [vmem:[%s686 + $0xc0] sm:$0xff]
      %v698 = vld [vmem:[%s686 + $0xd0] sm:$0xff]
      %v699 = vld [vmem:[%s686 + $0xe0] sm:$0xff]
      %v700 = vld [vmem:[%s686 + $0xf0] sm:$0xff]
      %v701 = vld [vmem:[%s686 + $0x100] sm:$0xff]
      %v702 = vld [vmem:[%s686 + $0x110] sm:$0xff]
      %v703 = vld [vmem:[%s686 + $0x140] sm:$0xff]
      %v704 = vld [vmem:[%s686 + $0x150] sm:$0xff]
      %v705 = vld [vmem:[%s686 + $0x160] sm:$0xff]
      %v706 = vld [vmem:[%s686 + $0x170] sm:$0xff]
      %v707 = vld [vmem:[%s686 + $0x180] sm:$0xff]
      %v708 = vld [vmem:[%s686 + $0x190] sm:$0xff]
      %v709 = vld [vmem:[%s686 + $0x1a0] sm:$0xff]
      %v710 = vld [vmem:[%s686 + $0x1b0] sm:$0xff]
      %v711 = vld [vmem:[%s686 + $0x1e0] sm:$0xff]
      %v712 = vld [vmem:[%s686 + $0x1f0] sm:$0xff]
      %v713 = vld [vmem:[%s686 + $0x200] sm:$0xff]
      %v714 = vld [vmem:[%s686 + $0x210] sm:$0xff]
      %v715 = vld [vmem:[%s686 + $0x220] sm:$0xff]
      %v716 = vld [vmem:[%s686 + $0x230] sm:$0xff]
      %v717 = vld [vmem:[%s686 + $0x240] sm:$0xff]
      %v718 = vld [vmem:[%s686 + $0x250] sm:$0xff]
      %v719 = vld [vmem:[%s686 + $0x280] sm:$0xff]
      %v720 = vld [vmem:[%s686 + $0x290] sm:$0xff]
      %v721 = vld [vmem:[%s686 + $0x2a0] sm:$0xff]
      %v722 = vld [vmem:[%s686 + $0x2b0] sm:$0xff]
      %v723 = vld [vmem:[%s686 + $0x2c0] sm:$0xff]
      %v724 = vld [vmem:[%s686 + $0x2d0] sm:$0xff]
      %v725 = vld [vmem:[%s686 + $0x2e0] sm:$0xff]
      %v726 = vld [vmem:[%s686 + $0x2f0] sm:$0xff]
      %v727 = vld [vmem:[%s686 + $0x320] sm:$0xff]
      %v728 = vld [vmem:[%s686 + $0x330] sm:$0xff]
      %v729 = vld [vmem:[%s686 + $0x340] sm:$0xff]
      %v730 = vld [vmem:[%s686 + $0x350] sm:$0xff]
      %v731 = vld [vmem:[%s686 + $0x360] sm:$0xff]
      %v732 = vld [vmem:[%s686 + $0x370] sm:$0xff]
      %v733 = vld [vmem:[%s686 + $0x380] sm:$0xff]
      %v734 = vld [vmem:[%s686 + $0x390] sm:$0xff]
      %v735 = vld [vmem:[%s686 + $0x3c0] sm:$0xff]
      %v736 = vld [vmem:[%s686 + $0x3d0] sm:$0xff]
      %v737 = vld [vmem:[%s686 + $0x3e0] sm:$0xff]
      %v738 = vld [vmem:[%s686 + $0x3f0] sm:$0xff]
      %v739 = vld [vmem:[%s686 + $0x400] sm:$0xff]
      %v740 = vld [vmem:[%s686 + $0x410] sm:$0xff]
      %v741 = vld [vmem:[%s686 + $0x420] sm:$0xff]
      %v742 = vld [vmem:[%s686 + $0x430] sm:$0xff]
      %v743 = vld [vmem:[%s686 + $0x460] sm:$0xff]
      %v744 = vld [vmem:[%s686 + $0x470] sm:$0xff]
      %v745 = vld [vmem:[%s686 + $0x480] sm:$0xff]
      %v746 = vld [vmem:[%s686 + $0x490] sm:$0xff]
      %v747 = vld [vmem:[%s686 + $0x4a0] sm:$0xff]
      %v748 = vld [vmem:[%s686 + $0x4b0] sm:$0xff]
      %v749 = vld [vmem:[%s686 + $0x4c0] sm:$0xff]
      %v750 = vld [vmem:[%s686 + $0x4d0] sm:$0xff]
      %815 = vrot.lane.b32.xlu0 %v687, 16
      %v816 = vpop.permute.xlu0 %815
      %817 = vrot.lane.b32.xlu0 %v688, 16
      %v818 = vpop.permute.xlu0 %817
      %819 = vrot.lane.b32.xlu0 %v689, 16
      %v820 = vpop.permute.xlu0 %819
      %821 = vrot.lane.b32.xlu0 %v690, 16
      %v822 = vpop.permute.xlu0 %821
      %823 = vrot.lane.b32.xlu0 %v691, 16
      %v824 = vpop.permute.xlu0 %823
      %825 = vrot.lane.b32.xlu0 %v692, 16
      %v826 = vpop.permute.xlu0 %825
      %827 = vrot.lane.b32.xlu0 %v693, 16
      %v828 = vpop.permute.xlu0 %827
      %829 = vrot.lane.b32.xlu0 %v694, 16
      %v830 = vpop.permute.xlu0 %829
      %831 = vrot.lane.b32.xlu0 %v695, 16
      %v832 = vpop.permute.xlu0 %831
      %833 = vrot.lane.b32.xlu0 %v696, 16
      %v834 = vpop.permute.xlu0 %833
      %835 = vrot.lane.b32.xlu0 %v697, 16
      %v836 = vpop.permute.xlu0 %835
      %837 = vrot.lane.b32.xlu0 %v698, 16
      %v838 = vpop.permute.xlu0 %837
      %839 = vrot.lane.b32.xlu0 %v699, 16
      %v840 = vpop.permute.xlu0 %839
      %841 = vrot.lane.b32.xlu0 %v700, 16
      %v842 = vpop.permute.xlu0 %841
      %843 = vrot.lane.b32.xlu0 %v701, 16
      %v844 = vpop.permute.xlu0 %843
      %845 = vrot.lane.b32.xlu0 %v702, 16
      %v846 = vpop.permute.xlu0 %845
      %847 = vrot.lane.b32.xlu0 %v703, 16
      %v848 = vpop.permute.xlu0 %847
      %849 = vrot.lane.b32.xlu0 %v704, 16
      %v850 = vpop.permute.xlu0 %849
      %851 = vrot.lane.b32.xlu0 %v705, 16
      %v852 = vpop.permute.xlu0 %851
      %853 = vrot.lane.b32.xlu0 %v706, 16
      %v854 = vpop.permute.xlu0 %853
      %855 = vrot.lane.b32.xlu0 %v707, 16
      %v856 = vpop.permute.xlu0 %855
      %857 = vrot.lane.b32.xlu0 %v708, 16
      %v858 = vpop.permute.xlu0 %857
      %859 = vrot.lane.b32.xlu0 %v709, 16
      %v860 = vpop.permute.xlu0 %859
      %861 = vrot.lane.b32.xlu0 %v710, 16
      %v862 = vpop.permute.xlu0 %861
      %863 = vrot.lane.b32.xlu0 %v711, 16
      %v864 = vpop.permute.xlu0 %863
      %865 = vrot.lane.b32.xlu0 %v712, 16
      %v866 = vpop.permute.xlu0 %865
      %867 = vrot.lane.b32.xlu0 %v713, 16
      %v868 = vpop.permute.xlu0 %867
      %869 = vrot.lane.b32.xlu0 %v714, 16
      %v870 = vpop.permute.xlu0 %869
      %871 = vrot.lane.b32.xlu0 %v715, 16
      %v872 = vpop.permute.xlu0 %871
      %873 = vrot.lane.b32.xlu0 %v716, 16
      %v874 = vpop.permute.xlu0 %873
      %875 = vrot.lane.b32.xlu0 %v717, 16
      %v876 = vpop.permute.xlu0 %875
      %877 = vrot.lane.b32.xlu0 %v718, 16
      %v878 = vpop.permute.xlu0 %877
      %879 = vrot.lane.b32.xlu0 %v719, 16
      %v880 = vpop.permute.xlu0 %879
      %881 = vrot.lane.b32.xlu0 %v720, 16
      %v882 = vpop.permute.xlu0 %881
      %883 = vrot.lane.b32.xlu0 %v721, 16
      %v884 = vpop.permute.xlu0 %883
      %885 = vrot.lane.b32.xlu0 %v722, 16
      %v886 = vpop.permute.xlu0 %885
      %887 = vrot.lane.b32.xlu0 %v723, 16
      %v888 = vpop.permute.xlu0 %887
      %889 = vrot.lane.b32.xlu0 %v724, 16
      %v890 = vpop.permute.xlu0 %889
      %891 = vrot.lane.b32.xlu0 %v725, 16
      %v892 = vpop.permute.xlu0 %891
      %893 = vrot.lane.b32.xlu0 %v726, 16
      %v894 = vpop.permute.xlu0 %893
      %895 = vrot.lane.b32.xlu0 %v727, 16
      %v896 = vpop.permute.xlu0 %895
      %897 = vrot.lane.b32.xlu0 %v728, 16
      %v898 = vpop.permute.xlu0 %897
      %899 = vrot.lane.b32.xlu0 %v729, 16
      %v900 = vpop.permute.xlu0 %899
      %901 = vrot.lane.b32.xlu0 %v730, 16
      %v902 = vpop.permute.xlu0 %901
      %903 = vrot.lane.b32.xlu0 %v731, 16
      %v904 = vpop.permute.xlu0 %903
      %905 = vrot.lane.b32.xlu0 %v732, 16
      %v906 = vpop.permute.xlu0 %905
      %907 = vrot.lane.b32.xlu0 %v733, 16
      %v908 = vpop.permute.xlu0 %907
      %909 = vrot.lane.b32.xlu0 %v734, 16
      %v910 = vpop.permute.xlu0 %909
      %911 = vrot.lane.b32.xlu0 %v735, 16
      %v912 = vpop.permute.xlu0 %911
      %913 = vrot.lane.b32.xlu0 %v736, 16
      %v914 = vpop.permute.xlu0 %913
      %915 = vrot.lane.b32.xlu0 %v737, 16
      %v916 = vpop.permute.xlu0 %915
      %917 = vrot.lane.b32.xlu0 %v738, 16
      %v918 = vpop.permute.xlu0 %917
      %919 = vrot.lane.b32.xlu0 %v739, 16
      %v920 = vpop.permute.xlu0 %919
      %921 = vrot.lane.b32.xlu0 %v740, 16
      %v922 = vpop.permute.xlu0 %921
      %923 = vrot.lane.b32.xlu0 %v741, 16
      %v924 = vpop.permute.xlu0 %923
      %925 = vrot.lane.b32.xlu0 %v742, 16
      %v926 = vpop.permute.xlu0 %925
      %927 = vrot.lane.b32.xlu0 %v743, 16
      %v928 = vpop.permute.xlu0 %927
      %929 = vrot.lane.b32.xlu0 %v744, 16
      %v930 = vpop.permute.xlu0 %929
      %931 = vrot.lane.b32.xlu0 %v745, 16
      %v932 = vpop.permute.xlu0 %931
      %933 = vrot.lane.b32.xlu0 %v746, 16
      %v934 = vpop.permute.xlu0 %933
      %935 = vrot.lane.b32.xlu0 %v747, 16
      %v936 = vpop.permute.xlu0 %935
      %937 = vrot.lane.b32.xlu0 %v748, 16
      %v938 = vpop.permute.xlu0 %937
      %939 = vrot.lane.b32.xlu0 %v749, 16
      %v940 = vpop.permute.xlu0 %939
      %941 = vrot.lane.b32.xlu0 %v750, 16
      %v942 = vpop.permute.xlu0 %941
      %vm1007 = vcmask 195712
      %1008 = vst.msk [vmem:[#allocation2] sm:$0xff] %vm1007, %v816
      %1009 = vst.msk [vmem:[#allocation2 + $0x8] sm:$0xff] %vm1007, %v818
      %1010 = vst.msk [vmem:[#allocation2 + $0x10] sm:$0xff] %vm1007, %v820
      %1011 = vst.msk [vmem:[#allocation2 + $0x18] sm:$0xff] %vm1007, %v822
      %1012 = vst.msk [vmem:[#allocation2 + $0x20] sm:$0xff] %vm1007, %v824
      %1013 = vst.msk [vmem:[#allocation2 + $0x28] sm:$0xff] %vm1007, %v826
      %1014 = vst.msk [vmem:[#allocation2 + $0x30] sm:$0xff] %vm1007, %v828
      %1015 = vst.msk [vmem:[#allocation2 + $0x38] sm:$0xff] %vm1007, %v830
      %1016 = vst.msk [vmem:[#allocation2 + $0x40] sm:$0xff] %vm1007, %v832
      %1017 = vst.msk [vmem:[#allocation2 + $0x48] sm:$0xff] %vm1007, %v834
      %1018 = vst.msk [vmem:[#allocation2 + $0x50] sm:$0xff] %vm1007, %v836
      %1019 = vst.msk [vmem:[#allocation2 + $0x58] sm:$0xff] %vm1007, %v838
      %1020 = vst.msk [vmem:[#allocation2 + $0x60] sm:$0xff] %vm1007, %v840
      %1021 = vst.msk [vmem:[#allocation2 + $0x68] sm:$0xff] %vm1007, %v842
      %1022 = vst.msk [vmem:[#allocation2 + $0x70] sm:$0xff] %vm1007, %v844
      %1023 = vst.msk [vmem:[#allocation2 + $0x78] sm:$0xff] %vm1007, %v846
      %1024 = vst.msk [vmem:[#allocation2 + $0x80] sm:$0xff] %vm1007, %v848
      %1025 = vst.msk [vmem:[#allocation2 + $0x88] sm:$0xff] %vm1007, %v850
      %1026 = vst.msk [vmem:[#allocation2 + $0x90] sm:$0xff] %vm1007, %v852
      %1027 = vst.msk [vmem:[#allocation2 + $0x98] sm:$0xff] %vm1007, %v854
      %1028 = vst.msk [vmem:[#allocation2 + $0xa0] sm:$0xff] %vm1007, %v856
      %1029 = vst.msk [vmem:[#allocation2 + $0xa8] sm:$0xff] %vm1007, %v858
      %1030 = vst.msk [vmem:[#allocation2 + $0xb0] sm:$0xff] %vm1007, %v860
      %1031 = vst.msk [vmem:[#allocation2 + $0xb8] sm:$0xff] %vm1007, %v862
      %1032 = vst.msk [vmem:[#allocation2 + $0xc0] sm:$0xff] %vm1007, %v864
      %1033 = vst.msk [vmem:[#allocation2 + $0xc8] sm:$0xff] %vm1007, %v866
      %1034 = vst.msk [vmem:[#allocation2 + $0xd0] sm:$0xff] %vm1007, %v868
      %1035 = vst.msk [vmem:[#allocation2 + $0xd8] sm:$0xff] %vm1007, %v870
      %1036 = vst.msk [vmem:[#allocation2 + $0xe0] sm:$0xff] %vm1007, %v872
      %1037 = vst.msk [vmem:[#allocation2 + $0xe8] sm:$0xff] %vm1007, %v874
      %1038 = vst.msk [vmem:[#allocation2 + $0xf0] sm:$0xff] %vm1007, %v876
      %1039 = vst.msk [vmem:[#allocation2 + $0xf8] sm:$0xff] %vm1007, %v878
      %1040 = vst.msk [vmem:[#allocation2 + $0x100] sm:$0xff] %vm1007, %v880
      %1041 = vst.msk [vmem:[#allocation2 + $0x108] sm:$0xff] %vm1007, %v882
      %1042 = vst.msk [vmem:[#allocation2 + $0x110] sm:$0xff] %vm1007, %v884
      %1043 = vst.msk [vmem:[#allocation2 + $0x118] sm:$0xff] %vm1007, %v886
      %1044 = vst.msk [vmem:[#allocation2 + $0x120] sm:$0xff] %vm1007, %v888
      %1045 = vst.msk [vmem:[#allocation2 + $0x128] sm:$0xff] %vm1007, %v890
      %1046 = vst.msk [vmem:[#allocation2 + $0x130] sm:$0xff] %vm1007, %v892
      %1047 = vst.msk [vmem:[#allocation2 + $0x138] sm:$0xff] %vm1007, %v894
      %1048 = vst.msk [vmem:[#allocation2 + $0x140] sm:$0xff] %vm1007, %v896
      %1049 = vst.msk [vmem:[#allocation2 + $0x148] sm:$0xff] %vm1007, %v898
      %1050 = vst.msk [vmem:[#allocation2 + $0x150] sm:$0xff] %vm1007, %v900
      %1051 = vst.msk [vmem:[#allocation2 + $0x158] sm:$0xff] %vm1007, %v902
      %1052 = vst.msk [vmem:[#allocation2 + $0x160] sm:$0xff] %vm1007, %v904
      %1053 = vst.msk [vmem:[#allocation2 + $0x168] sm:$0xff] %vm1007, %v906
      %1054 = vst.msk [vmem:[#allocation2 + $0x170] sm:$0xff] %vm1007, %v908
      %1055 = vst.msk [vmem:[#allocation2 + $0x178] sm:$0xff] %vm1007, %v910
      %1056 = vst.msk [vmem:[#allocation2 + $0x180] sm:$0xff] %vm1007, %v912
      %1057 = vst.msk [vmem:[#allocation2 + $0x188] sm:$0xff] %vm1007, %v914
      %1058 = vst.msk [vmem:[#allocation2 + $0x190] sm:$0xff] %vm1007, %v916
      %1059 = vst.msk [vmem:[#allocation2 + $0x198] sm:$0xff] %vm1007, %v918
      %1060 = vst.msk [vmem:[#allocation2 + $0x1a0] sm:$0xff] %vm1007, %v920
      %1061 = vst.msk [vmem:[#allocation2 + $0x1a8] sm:$0xff] %vm1007, %v922
      %1062 = vst.msk [vmem:[#allocation2 + $0x1b0] sm:$0xff] %vm1007, %v924
      %1063 = vst.msk [vmem:[#allocation2 + $0x1b8] sm:$0xff] %vm1007, %v926
      %1064 = vst.msk [vmem:[#allocation2 + $0x1c0] sm:$0xff] %vm1007, %v928
      %1065 = vst.msk [vmem:[#allocation2 + $0x1c8] sm:$0xff] %vm1007, %v930
      %1066 = vst.msk [vmem:[#allocation2 + $0x1d0] sm:$0xff] %vm1007, %v932
      %1067 = vst.msk [vmem:[#allocation2 + $0x1d8] sm:$0xff] %vm1007, %v934
      %1068 = vst.msk [vmem:[#allocation2 + $0x1e0] sm:$0xff] %vm1007, %v936
      %1069 = vst.msk [vmem:[#allocation2 + $0x1e8] sm:$0xff] %vm1007, %v938
      %1070 = vst.msk [vmem:[#allocation2 + $0x1f0] sm:$0xff] %vm1007, %v940
      %1071 = vst.msk [vmem:[#allocation2 + $0x1f8] sm:$0xff] %vm1007, %v942
      %v1072 = vld [vmem:[%s686 + $0x1] sm:$0xff]
      %v1073 = vld [vmem:[%s686 + $0x11] sm:$0xff]
      %v1074 = vld [vmem:[%s686 + $0x21] sm:$0xff]
      %v1075 = vld [vmem:[%s686 + $0x31] sm:$0xff]
      %v1076 = vld [vmem:[%s686 + $0x41] sm:$0xff]
      %v1077 = vld [vmem:[%s686 + $0x51] sm:$0xff]
      %v1078 = vld [vmem:[%s686 + $0x61] sm:$0xff]
      %v1079 = vld [vmem:[%s686 + $0x71] sm:$0xff]
      %v1080 = vld [vmem:[%s686 + $0xa1] sm:$0xff]
      %v1081 = vld [vmem:[%s686 + $0xb1] sm:$0xff]
      %v1082 = vld [vmem:[%s686 + $0xc1] sm:$0xff]
      %v1083 = vld [vmem:[%s686 + $0xd1] sm:$0xff]
      %v1084 = vld [vmem:[%s686 + $0xe1] sm:$0xff]
      %v1085 = vld [vmem:[%s686 + $0xf1] sm:$0xff]
      %v1086 = vld [vmem:[%s686 + $0x101] sm:$0xff]
      %v1087 = vld [vmem:[%s686 + $0x111] sm:$0xff]
      %v1088 = vld [vmem:[%s686 + $0x141] sm:$0xff]
      %v1089 = vld [vmem:[%s686 + $0x151] sm:$0xff]
      %v1090 = vld [vmem:[%s686 + $0x161] sm:$0xff]
      %v1091 = vld [vmem:[%s686 + $0x171] sm:$0xff]
      %v1092 = vld [vmem:[%s686 + $0x181] sm:$0xff]
      %v1093 = vld [vmem:[%s686 + $0x191] sm:$0xff]
      %v1094 = vld [vmem:[%s686 + $0x1a1] sm:$0xff]
      %v1095 = vld [vmem:[%s686 + $0x1b1] sm:$0xff]
      %v1096 = vld [vmem:[%s686 + $0x1e1] sm:$0xff]
      %v1097 = vld [vmem:[%s686 + $0x1f1] sm:$0xff]
      %v1098 = vld [vmem:[%s686 + $0x201] sm:$0xff]
      %v1099 = vld [vmem:[%s686 + $0x211] sm:$0xff]
      %v1100 = vld [vmem:[%s686 + $0x221] sm:$0xff]
      %v1101 = vld [vmem:[%s686 + $0x231] sm:$0xff]
      %v1102 = vld [vmem:[%s686 + $0x241] sm:$0xff]
      %v1103 = vld [vmem:[%s686 + $0x251] sm:$0xff]
      %v1104 = vld [vmem:[%s686 + $0x281] sm:$0xff]
      %v1105 = vld [vmem:[%s686 + $0x291] sm:$0xff]
      %v1106 = vld [vmem:[%s686 + $0x2a1] sm:$0xff]
      %v1107 = vld [vmem:[%s686 + $0x2b1] sm:$0xff]
      %v1108 = vld [vmem:[%s686 + $0x2c1] sm:$0xff]
      %v1109 = vld [vmem:[%s686 + $0x2d1] sm:$0xff]
      %v1110 = vld [vmem:[%s686 + $0x2e1] sm:$0xff]
      %v1111 = vld [vmem:[%s686 + $0x2f1] sm:$0xff]
      %v1112 = vld [vmem:[%s686 + $0x321] sm:$0xff]
      %v1113 = vld [vmem:[%s686 + $0x331] sm:$0xff]
      %v1114 = vld [vmem:[%s686 + $0x341] sm:$0xff]
      %v1115 = vld [vmem:[%s686 + $0x351] sm:$0xff]
      %v1116 = vld [vmem:[%s686 + $0x361] sm:$0xff]
      %v1117 = vld [vmem:[%s686 + $0x371] sm:$0xff]
      %v1118 = vld [vmem:[%s686 + $0x381] sm:$0xff]
      %v1119 = vld [vmem:[%s686 + $0x391] sm:$0xff]
      %v1120 = vld [vmem:[%s686 + $0x3c1] sm:$0xff]
      %v1121 = vld [vmem:[%s686 + $0x3d1] sm:$0xff]
      %v1122 = vld [vmem:[%s686 + $0x3e1] sm:$0xff]
      %v1123 = vld [vmem:[%s686 + $0x3f1] sm:$0xff]
      %v1124 = vld [vmem:[%s686 + $0x401] sm:$0xff]
      %v1125 = vld [vmem:[%s686 + $0x411] sm:$0xff]
      %v1126 = vld [vmem:[%s686 + $0x421] sm:$0xff]
      %v1127 = vld [vmem:[%s686 + $0x431] sm:$0xff]
      %v1128 = vld [vmem:[%s686 + $0x461] sm:$0xff]
      %v1129 = vld [vmem:[%s686 + $0x471] sm:$0xff]
      %v1130 = vld [vmem:[%s686 + $0x481] sm:$0xff]
      %v1131 = vld [vmem:[%s686 + $0x491] sm:$0xff]
      %v1132 = vld [vmem:[%s686 + $0x4a1] sm:$0xff]
      %v1133 = vld [vmem:[%s686 + $0x4b1] sm:$0xff]
      %v1134 = vld [vmem:[%s686 + $0x4c1] sm:$0xff]
      %v1135 = vld [vmem:[%s686 + $0x4d1] sm:$0xff]
      %1200 = vrot.lane.b32.xlu0 %v1072, 24
      %v1201 = vpop.permute.xlu0 %1200
      %1202 = vrot.lane.b32.xlu0 %v1073, 24
      %v1203 = vpop.permute.xlu0 %1202
      %1204 = vrot.lane.b32.xlu0 %v1074, 24
      %v1205 = vpop.permute.xlu0 %1204
      %1206 = vrot.lane.b32.xlu0 %v1075, 24
      %v1207 = vpop.permute.xlu0 %1206
      %1208 = vrot.lane.b32.xlu0 %v1076, 24
      %v1209 = vpop.permute.xlu0 %1208
      %1210 = vrot.lane.b32.xlu0 %v1077, 24
      %v1211 = vpop.permute.xlu0 %1210
      %1212 = vrot.lane.b32.xlu0 %v1078, 24
      %v1213 = vpop.permute.xlu0 %1212
      %1214 = vrot.lane.b32.xlu0 %v1079, 24
      %v1215 = vpop.permute.xlu0 %1214
      %1216 = vrot.lane.b32.xlu0 %v1080, 24
      %v1217 = vpop.permute.xlu0 %1216
      %1218 = vrot.lane.b32.xlu0 %v1081, 24
      %v1219 = vpop.permute.xlu0 %1218
      %1220 = vrot.lane.b32.xlu0 %v1082, 24
      %v1221 = vpop.permute.xlu0 %1220
      %1222 = vrot.lane.b32.xlu0 %v1083, 24
      %v1223 = vpop.permute.xlu0 %1222
      %1224 = vrot.lane.b32.xlu0 %v1084, 24
      %v1225 = vpop.permute.xlu0 %1224
      %1226 = vrot.lane.b32.xlu0 %v1085, 24
      %v1227 = vpop.permute.xlu0 %1226
      %1228 = vrot.lane.b32.xlu0 %v1086, 24
      %v1229 = vpop.permute.xlu0 %1228
      %1230 = vrot.lane.b32.xlu0 %v1087, 24
      %v1231 = vpop.permute.xlu0 %1230
      %1232 = vrot.lane.b32.xlu0 %v1088, 24
      %v1233 = vpop.permute.xlu0 %1232
      %1234 = vrot.lane.b32.xlu0 %v1089, 24
      %v1235 = vpop.permute.xlu0 %1234
      %1236 = vrot.lane.b32.xlu0 %v1090, 24
      %v1237 = vpop.permute.xlu0 %1236
      %1238 = vrot.lane.b32.xlu0 %v1091, 24
      %v1239 = vpop.permute.xlu0 %1238
      %1240 = vrot.lane.b32.xlu0 %v1092, 24
      %v1241 = vpop.permute.xlu0 %1240
      %1242 = vrot.lane.b32.xlu0 %v1093, 24
      %v1243 = vpop.permute.xlu0 %1242
      %1244 = vrot.lane.b32.xlu0 %v1094, 24
      %v1245 = vpop.permute.xlu0 %1244
      %1246 = vrot.lane.b32.xlu0 %v1095, 24
      %v1247 = vpop.permute.xlu0 %1246
      %1248 = vrot.lane.b32.xlu0 %v1096, 24
      %v1249 = vpop.permute.xlu0 %1248
      %1250 = vrot.lane.b32.xlu0 %v1097, 24
      %v1251 = vpop.permute.xlu0 %1250
      %1252 = vrot.lane.b32.xlu0 %v1098, 24
      %v1253 = vpop.permute.xlu0 %1252
      %1254 = vrot.lane.b32.xlu0 %v1099, 24
      %v1255 = vpop.permute.xlu0 %1254
      %1256 = vrot.lane.b32.xlu0 %v1100, 24
      %v1257 = vpop.permute.xlu0 %1256
      %1258 = vrot.lane.b32.xlu0 %v1101, 24
      %v1259 = vpop.permute.xlu0 %1258
      %1260 = vrot.lane.b32.xlu0 %v1102, 24
      %v1261 = vpop.permute.xlu0 %1260
      %1262 = vrot.lane.b32.xlu0 %v1103, 24
      %v1263 = vpop.permute.xlu0 %1262
      %1264 = vrot.lane.b32.xlu0 %v1104, 24
      %v1265 = vpop.permute.xlu0 %1264
      %1266 = vrot.lane.b32.xlu0 %v1105, 24
      %v1267 = vpop.permute.xlu0 %1266
      %1268 = vrot.lane.b32.xlu0 %v1106, 24
      %v1269 = vpop.permute.xlu0 %1268
      %1270 = vrot.lane.b32.xlu0 %v1107, 24
      %v1271 = vpop.permute.xlu0 %1270
      %1272 = vrot.lane.b32.xlu0 %v1108, 24
      %v1273 = vpop.permute.xlu0 %1272
      %1274 = vrot.lane.b32.xlu0 %v1109, 24
      %v1275 = vpop.permute.xlu0 %1274
      %1276 = vrot.lane.b32.xlu0 %v1110, 24
      %v1277 = vpop.permute.xlu0 %1276
      %1278 = vrot.lane.b32.xlu0 %v1111, 24
      %v1279 = vpop.permute.xlu0 %1278
      %1280 = vrot.lane.b32.xlu0 %v1112, 24
      %v1281 = vpop.permute.xlu0 %1280
      %1282 = vrot.lane.b32.xlu0 %v1113, 24
      %v1283 = vpop.permute.xlu0 %1282
      %1284 = vrot.lane.b32.xlu0 %v1114, 24
      %v1285 = vpop.permute.xlu0 %1284
      %1286 = vrot.lane.b32.xlu0 %v1115, 24
      %v1287 = vpop.permute.xlu0 %1286
      %1288 = vrot.lane.b32.xlu0 %v1116, 24
      %v1289 = vpop.permute.xlu0 %1288
      %1290 = vrot.lane.b32.xlu0 %v1117, 24
      %v1291 = vpop.permute.xlu0 %1290
      %1292 = vrot.lane.b32.xlu0 %v1118, 24
      %v1293 = vpop.permute.xlu0 %1292
      %1294 = vrot.lane.b32.xlu0 %v1119, 24
      %v1295 = vpop.permute.xlu0 %1294
      %1296 = vrot.lane.b32.xlu0 %v1120, 24
      %v1297 = vpop.permute.xlu0 %1296
      %1298 = vrot.lane.b32.xlu0 %v1121, 24
      %v1299 = vpop.permute.xlu0 %1298
      %1300 = vrot.lane.b32.xlu0 %v1122, 24
      %v1301 = vpop.permute.xlu0 %1300
      %1302 = vrot.lane.b32.xlu0 %v1123, 24
      %v1303 = vpop.permute.xlu0 %1302
      %1304 = vrot.lane.b32.xlu0 %v1124, 24
      %v1305 = vpop.permute.xlu0 %1304
      %1306 = vrot.lane.b32.xlu0 %v1125, 24
      %v1307 = vpop.permute.xlu0 %1306
      %1308 = vrot.lane.b32.xlu0 %v1126, 24
      %v1309 = vpop.permute.xlu0 %1308
      %1310 = vrot.lane.b32.xlu0 %v1127, 24
      %v1311 = vpop.permute.xlu0 %1310
      %1312 = vrot.lane.b32.xlu0 %v1128, 24
      %v1313 = vpop.permute.xlu0 %1312
      %1314 = vrot.lane.b32.xlu0 %v1129, 24
      %v1315 = vpop.permute.xlu0 %1314
      %1316 = vrot.lane.b32.xlu0 %v1130, 24
      %v1317 = vpop.permute.xlu0 %1316
      %1318 = vrot.lane.b32.xlu0 %v1131, 24
      %v1319 = vpop.permute.xlu0 %1318
      %1320 = vrot.lane.b32.xlu0 %v1132, 24
      %v1321 = vpop.permute.xlu0 %1320
      %1322 = vrot.lane.b32.xlu0 %v1133, 24
      %v1323 = vpop.permute.xlu0 %1322
      %1324 = vrot.lane.b32.xlu0 %v1134, 24
      %v1325 = vpop.permute.xlu0 %1324
      %1326 = vrot.lane.b32.xlu0 %v1135, 24
      %v1327 = vpop.permute.xlu0 %1326
      %vm1392 = vcmask 261312
      %1393 = vst.msk [vmem:[#allocation2] sm:$0xff] %vm1392, %v1201
      %1394 = vst.msk [vmem:[#allocation2 + $0x8] sm:$0xff] %vm1392, %v1203
      %1395 = vst.msk [vmem:[#allocation2 + $0x10] sm:$0xff] %vm1392, %v1205
      %1396 = vst.msk [vmem:[#allocation2 + $0x18] sm:$0xff] %vm1392, %v1207
      %1397 = vst.msk [vmem:[#allocation2 + $0x20] sm:$0xff] %vm1392, %v1209
      %1398 = vst.msk [vmem:[#allocation2 + $0x28] sm:$0xff] %vm1392, %v1211
      %1399 = vst.msk [vmem:[#allocation2 + $0x30] sm:$0xff] %vm1392, %v1213
      %1400 = vst.msk [vmem:[#allocation2 + $0x38] sm:$0xff] %vm1392, %v1215
      %1401 = vst.msk [vmem:[#allocation2 + $0x40] sm:$0xff] %vm1392, %v1217
      %1402 = vst.msk [vmem:[#allocation2 + $0x48] sm:$0xff] %vm1392, %v1219
      %1403 = vst.msk [vmem:[#allocation2 + $0x50] sm:$0xff] %vm1392, %v1221
      %1404 = vst.msk [vmem:[#allocation2 + $0x58] sm:$0xff] %vm1392, %v1223
      %1405 = vst.msk [vmem:[#allocation2 + $0x60] sm:$0xff] %vm1392, %v1225
      %1406 = vst.msk [vmem:[#allocation2 + $0x68] sm:$0xff] %vm1392, %v1227
      %1407 = vst.msk [vmem:[#allocation2 + $0x70] sm:$0xff] %vm1392, %v1229
      %1408 = vst.msk [vmem:[#allocation2 + $0x78] sm:$0xff] %vm1392, %v1231
      %1409 = vst.msk [vmem:[#allocation2 + $0x80] sm:$0xff] %vm1392, %v1233
      %1410 = vst.msk [vmem:[#allocation2 + $0x88] sm:$0xff] %vm1392, %v1235
      %1411 = vst.msk [vmem:[#allocation2 + $0x90] sm:$0xff] %vm1392, %v1237
      %1412 = vst.msk [vmem:[#allocation2 + $0x98] sm:$0xff] %vm1392, %v1239
      %1413 = vst.msk [vmem:[#allocation2 + $0xa0] sm:$0xff] %vm1392, %v1241
      %1414 = vst.msk [vmem:[#allocation2 + $0xa8] sm:$0xff] %vm1392, %v1243
      %1415 = vst.msk [vmem:[#allocation2 + $0xb0] sm:$0xff] %vm1392, %v1245
      %1416 = vst.msk [vmem:[#allocation2 + $0xb8] sm:$0xff] %vm1392, %v1247
      %1417 = vst.msk [vmem:[#allocation2 + $0xc0] sm:$0xff] %vm1392, %v1249
      %1418 = vst.msk [vmem:[#allocation2 + $0xc8] sm:$0xff] %vm1392, %v1251
      %1419 = vst.msk [vmem:[#allocation2 + $0xd0] sm:$0xff] %vm1392, %v1253
      %1420 = vst.msk [vmem:[#allocation2 + $0xd8] sm:$0xff] %vm1392, %v1255
      %1421 = vst.msk [vmem:[#allocation2 + $0xe0] sm:$0xff] %vm1392, %v1257
      %1422 = vst.msk [vmem:[#allocation2 + $0xe8] sm:$0xff] %vm1392, %v1259
      %1423 = vst.msk [vmem:[#allocation2 + $0xf0] sm:$0xff] %vm1392, %v1261
      %1424 = vst.msk [vmem:[#allocation2 + $0xf8] sm:$0xff] %vm1392, %v1263
      %1425 = vst.msk [vmem:[#allocation2 + $0x100] sm:$0xff] %vm1392, %v1265
      %1426 = vst.msk [vmem:[#allocation2 + $0x108] sm:$0xff] %vm1392, %v1267
      %1427 = vst.msk [vmem:[#allocation2 + $0x110] sm:$0xff] %vm1392, %v1269
      %1428 = vst.msk [vmem:[#allocation2 + $0x118] sm:$0xff] %vm1392, %v1271
      %1429 = vst.msk [vmem:[#allocation2 + $0x120] sm:$0xff] %vm1392, %v1273
      %1430 = vst.msk [vmem:[#allocation2 + $0x128] sm:$0xff] %vm1392, %v1275
      %1431 = vst.msk [vmem:[#allocation2 + $0x130] sm:$0xff] %vm1392, %v1277
      %1432 = vst.msk [vmem:[#allocation2 + $0x138] sm:$0xff] %vm1392, %v1279
      %1433 = vst.msk [vmem:[#allocation2 + $0x140] sm:$0xff] %vm1392, %v1281
      %1434 = vst.msk [vmem:[#allocation2 + $0x148] sm:$0xff] %vm1392, %v1283
      %1435 = vst.msk [vmem:[#allocation2 + $0x150] sm:$0xff] %vm1392, %v1285
      %1436 = vst.msk [vmem:[#allocation2 + $0x158] sm:$0xff] %vm1392, %v1287
      %1437 = vst.msk [vmem:[#allocation2 + $0x160] sm:$0xff] %vm1392, %v1289
      %1438 = vst.msk [vmem:[#allocation2 + $0x168] sm:$0xff] %vm1392, %v1291
      %1439 = vst.msk [vmem:[#allocation2 + $0x170] sm:$0xff] %vm1392, %v1293
      %1440 = vst.msk [vmem:[#allocation2 + $0x178] sm:$0xff] %vm1392, %v1295
      %1441 = vst.msk [vmem:[#allocation2 + $0x180] sm:$0xff] %vm1392, %v1297
      %1442 = vst.msk [vmem:[#allocation2 + $0x188] sm:$0xff] %vm1392, %v1299
      %1443 = vst.msk [vmem:[#allocation2 + $0x190] sm:$0xff] %vm1392, %v1301
      %1444 = vst.msk [vmem:[#allocation2 + $0x198] sm:$0xff] %vm1392, %v1303
      %1445 = vst.msk [vmem:[#allocation2 + $0x1a0] sm:$0xff] %vm1392, %v1305
      %1446 = vst.msk [vmem:[#allocation2 + $0x1a8] sm:$0xff] %vm1392, %v1307
      %1447 = vst.msk [vmem:[#allocation2 + $0x1b0] sm:$0xff] %vm1392, %v1309
      %1448 = vst.msk [vmem:[#allocation2 + $0x1b8] sm:$0xff] %vm1392, %v1311
      %1449 = vst.msk [vmem:[#allocation2 + $0x1c0] sm:$0xff] %vm1392, %v1313
      %1450 = vst.msk [vmem:[#allocation2 + $0x1c8] sm:$0xff] %vm1392, %v1315
      %1451 = vst.msk [vmem:[#allocation2 + $0x1d0] sm:$0xff] %vm1392, %v1317
      %1452 = vst.msk [vmem:[#allocation2 + $0x1d8] sm:$0xff] %vm1392, %v1319
      %1453 = vst.msk [vmem:[#allocation2 + $0x1e0] sm:$0xff] %vm1392, %v1321
      %1454 = vst.msk [vmem:[#allocation2 + $0x1e8] sm:$0xff] %vm1392, %v1323
      %1455 = vst.msk [vmem:[#allocation2 + $0x1f0] sm:$0xff] %vm1392, %v1325
      %1456 = vst.msk [vmem:[#allocation2 + $0x1f8] sm:$0xff] %vm1392, %v1327
      %s1457 = scalar_lea.vmem %s165, 160
      %v1458 = vld [vmem:[%s1457] sm:$0xff]
      %v1459 = vld [vmem:[%s1457 + $0x10] sm:$0xff]
      %v1460 = vld [vmem:[%s1457 + $0x20] sm:$0xff]
      %v1461 = vld [vmem:[%s1457 + $0x30] sm:$0xff]
      %v1462 = vld [vmem:[%s1457 + $0x40] sm:$0xff]
      %v1463 = vld [vmem:[%s1457 + $0x50] sm:$0xff]
      %v1464 = vld [vmem:[%s1457 + $0x60] sm:$0xff]
      %v1465 = vld [vmem:[%s1457 + $0x70] sm:$0xff]
      %v1466 = vld [vmem:[%s1457 + $0xa0] sm:$0xff]
      %v1467 = vld [vmem:[%s1457 + $0xb0] sm:$0xff]
      %v1468 = vld [vmem:[%s1457 + $0xc0] sm:$0xff]
      %v1469 = vld [vmem:[%s1457 + $0xd0] sm:$0xff]
      %v1470 = vld [vmem:[%s1457 + $0xe0] sm:$0xff]
      %v1471 = vld [vmem:[%s1457 + $0xf0] sm:$0xff]
      %v1472 = vld [vmem:[%s1457 + $0x100] sm:$0xff]
      %v1473 = vld [vmem:[%s1457 + $0x110] sm:$0xff]
      %v1474 = vld [vmem:[%s1457 + $0x140] sm:$0xff]
      %v1475 = vld [vmem:[%s1457 + $0x150] sm:$0xff]
      %v1476 = vld [vmem:[%s1457 + $0x160] sm:$0xff]
      %v1477 = vld [vmem:[%s1457 + $0x170] sm:$0xff]
      %v1478 = vld [vmem:[%s1457 + $0x180] sm:$0xff]
      %v1479 = vld [vmem:[%s1457 + $0x190] sm:$0xff]
      %v1480 = vld [vmem:[%s1457 + $0x1a0] sm:$0xff]
      %v1481 = vld [vmem:[%s1457 + $0x1b0] sm:$0xff]
      %v1482 = vld [vmem:[%s1457 + $0x1e0] sm:$0xff]
      %v1483 = vld [vmem:[%s1457 + $0x1f0] sm:$0xff]
      %v1484 = vld [vmem:[%s1457 + $0x200] sm:$0xff]
      %v1485 = vld [vmem:[%s1457 + $0x210] sm:$0xff]
      %v1486 = vld [vmem:[%s1457 + $0x220] sm:$0xff]
      %v1487 = vld [vmem:[%s1457 + $0x230] sm:$0xff]
      %v1488 = vld [vmem:[%s1457 + $0x240] sm:$0xff]
      %v1489 = vld [vmem:[%s1457 + $0x250] sm:$0xff]
      %v1490 = vld [vmem:[%s1457 + $0x280] sm:$0xff]
      %v1491 = vld [vmem:[%s1457 + $0x290] sm:$0xff]
      %v1492 = vld [vmem:[%s1457 + $0x2a0] sm:$0xff]
      %v1493 = vld [vmem:[%s1457 + $0x2b0] sm:$0xff]
      %v1494 = vld [vmem:[%s1457 + $0x2c0] sm:$0xff]
      %v1495 = vld [vmem:[%s1457 + $0x2d0] sm:$0xff]
      %v1496 = vld [vmem:[%s1457 + $0x2e0] sm:$0xff]
      %v1497 = vld [vmem:[%s1457 + $0x2f0] sm:$0xff]
      %v1498 = vld [vmem:[%s1457 + $0x320] sm:$0xff]
      %v1499 = vld [vmem:[%s1457 + $0x330] sm:$0xff]
      %v1500 = vld [vmem:[%s1457 + $0x340] sm:$0xff]
      %v1501 = vld [vmem:[%s1457 + $0x350] sm:$0xff]
      %v1502 = vld [vmem:[%s1457 + $0x360] sm:$0xff]
      %v1503 = vld [vmem:[%s1457 + $0x370] sm:$0xff]
      %v1504 = vld [vmem:[%s1457 + $0x380] sm:$0xff]
      %v1505 = vld [vmem:[%s1457 + $0x390] sm:$0xff]
      %v1506 = vld [vmem:[%s1457 + $0x3c0] sm:$0xff]
      %v1507 = vld [vmem:[%s1457 + $0x3d0] sm:$0xff]
      %v1508 = vld [vmem:[%s1457 + $0x3e0] sm:$0xff]
      %v1509 = vld [vmem:[%s1457 + $0x3f0] sm:$0xff]
      %v1510 = vld [vmem:[%s1457 + $0x400] sm:$0xff]
      %v1511 = vld [vmem:[%s1457 + $0x410] sm:$0xff]
      %v1512 = vld [vmem:[%s1457 + $0x420] sm:$0xff]
      %v1513 = vld [vmem:[%s1457 + $0x430] sm:$0xff]
      %v1514 = vld [vmem:[%s1457 + $0x460] sm:$0xff]
      %v1515 = vld [vmem:[%s1457 + $0x470] sm:$0xff]
      %v1516 = vld [vmem:[%s1457 + $0x480] sm:$0xff]
      %v1517 = vld [vmem:[%s1457 + $0x490] sm:$0xff]
      %v1518 = vld [vmem:[%s1457 + $0x4a0] sm:$0xff]
      %v1519 = vld [vmem:[%s1457 + $0x4b0] sm:$0xff]
      %v1520 = vld [vmem:[%s1457 + $0x4c0] sm:$0xff]
      %v1521 = vld [vmem:[%s1457 + $0x4d0] sm:$0xff]
      %1586 = vrot.lane.b32.xlu0 %v1458, 32
      %v1587 = vpop.permute.xlu0 %1586
      %1588 = vrot.lane.b32.xlu0 %v1459, 32
      %v1589 = vpop.permute.xlu0 %1588
      %1590 = vrot.lane.b32.xlu0 %v1460, 32
      %v1591 = vpop.permute.xlu0 %1590
      %1592 = vrot.lane.b32.xlu0 %v1461, 32
      %v1593 = vpop.permute.xlu0 %1592
      %1594 = vrot.lane.b32.xlu0 %v1462, 32
      %v1595 = vpop.permute.xlu0 %1594
      %1596 = vrot.lane.b32.xlu0 %v1463, 32
      %v1597 = vpop.permute.xlu0 %1596
      %1598 = vrot.lane.b32.xlu0 %v1464, 32
      %v1599 = vpop.permute.xlu0 %1598
      %1600 = vrot.lane.b32.xlu0 %v1465, 32
      %v1601 = vpop.permute.xlu0 %1600
      %1602 = vrot.lane.b32.xlu0 %v1466, 32
      %v1603 = vpop.permute.xlu0 %1602
      %1604 = vrot.lane.b32.xlu0 %v1467, 32
      %v1605 = vpop.permute.xlu0 %1604
      %1606 = vrot.lane.b32.xlu0 %v1468, 32
      %v1607 = vpop.permute.xlu0 %1606
      %1608 = vrot.lane.b32.xlu0 %v1469, 32
      %v1609 = vpop.permute.xlu0 %1608
      %1610 = vrot.lane.b32.xlu0 %v1470, 32
      %v1611 = vpop.permute.xlu0 %1610
      %1612 = vrot.lane.b32.xlu0 %v1471, 32
      %v1613 = vpop.permute.xlu0 %1612
      %1614 = vrot.lane.b32.xlu0 %v1472, 32
      %v1615 = vpop.permute.xlu0 %1614
      %1616 = vrot.lane.b32.xlu0 %v1473, 32
      %v1617 = vpop.permute.xlu0 %1616
      %1618 = vrot.lane.b32.xlu0 %v1474, 32
      %v1619 = vpop.permute.xlu0 %1618
      %1620 = vrot.lane.b32.xlu0 %v1475, 32
      %v1621 = vpop.permute.xlu0 %1620
      %1622 = vrot.lane.b32.xlu0 %v1476, 32
      %v1623 = vpop.permute.xlu0 %1622
      %1624 = vrot.lane.b32.xlu0 %v1477, 32
      %v1625 = vpop.permute.xlu0 %1624
      %1626 = vrot.lane.b32.xlu0 %v1478, 32
      %v1627 = vpop.permute.xlu0 %1626
      %1628 = vrot.lane.b32.xlu0 %v1479, 32
      %v1629 = vpop.permute.xlu0 %1628
      %1630 = vrot.lane.b32.xlu0 %v1480, 32
      %v1631 = vpop.permute.xlu0 %1630
      %1632 = vrot.lane.b32.xlu0 %v1481, 32
      %v1633 = vpop.permute.xlu0 %1632
      %1634 = vrot.lane.b32.xlu0 %v1482, 32
      %v1635 = vpop.permute.xlu0 %1634
      %1636 = vrot.lane.b32.xlu0 %v1483, 32
      %v1637 = vpop.permute.xlu0 %1636
      %1638 = vrot.lane.b32.xlu0 %v1484, 32
      %v1639 = vpop.permute.xlu0 %1638
      %1640 = vrot.lane.b32.xlu0 %v1485, 32
      %v1641 = vpop.permute.xlu0 %1640
      %1642 = vrot.lane.b32.xlu0 %v1486, 32
      %v1643 = vpop.permute.xlu0 %1642
      %1644 = vrot.lane.b32.xlu0 %v1487, 32
      %v1645 = vpop.permute.xlu0 %1644
      %1646 = vrot.lane.b32.xlu0 %v1488, 32
      %v1647 = vpop.permute.xlu0 %1646
      %1648 = vrot.lane.b32.xlu0 %v1489, 32
      %v1649 = vpop.permute.xlu0 %1648
      %1650 = vrot.lane.b32.xlu0 %v1490, 32
      %v1651 = vpop.permute.xlu0 %1650
      %1652 = vrot.lane.b32.xlu0 %v1491, 32
      %v1653 = vpop.permute.xlu0 %1652
      %1654 = vrot.lane.b32.xlu0 %v1492, 32
      %v1655 = vpop.permute.xlu0 %1654
      %1656 = vrot.lane.b32.xlu0 %v1493, 32
      %v1657 = vpop.permute.xlu0 %1656
      %1658 = vrot.lane.b32.xlu0 %v1494, 32
      %v1659 = vpop.permute.xlu0 %1658
      %1660 = vrot.lane.b32.xlu0 %v1495, 32
      %v1661 = vpop.permute.xlu0 %1660
      %1662 = vrot.lane.b32.xlu0 %v1496, 32
      %v1663 = vpop.permute.xlu0 %1662
      %1664 = vrot.lane.b32.xlu0 %v1497, 32
      %v1665 = vpop.permute.xlu0 %1664
      %1666 = vrot.lane.b32.xlu0 %v1498, 32
      %v1667 = vpop.permute.xlu0 %1666
      %1668 = vrot.lane.b32.xlu0 %v1499, 32
      %v1669 = vpop.permute.xlu0 %1668
      %1670 = vrot.lane.b32.xlu0 %v1500, 32
      %v1671 = vpop.permute.xlu0 %1670
      %1672 = vrot.lane.b32.xlu0 %v1501, 32
      %v1673 = vpop.permute.xlu0 %1672
      %1674 = vrot.lane.b32.xlu0 %v1502, 32
      %v1675 = vpop.permute.xlu0 %1674
      %1676 = vrot.lane.b32.xlu0 %v1503, 32
      %v1677 = vpop.permute.xlu0 %1676
      %1678 = vrot.lane.b32.xlu0 %v1504, 32
      %v1679 = vpop.permute.xlu0 %1678
      %1680 = vrot.lane.b32.xlu0 %v1505, 32
      %v1681 = vpop.permute.xlu0 %1680
      %1682 = vrot.lane.b32.xlu0 %v1506, 32
      %v1683 = vpop.permute.xlu0 %1682
      %1684 = vrot.lane.b32.xlu0 %v1507, 32
      %v1685 = vpop.permute.xlu0 %1684
      %1686 = vrot.lane.b32.xlu0 %v1508, 32
      %v1687 = vpop.permute.xlu0 %1686
      %1688 = vrot.lane.b32.xlu0 %v1509, 32
      %v1689 = vpop.permute.xlu0 %1688
      %1690 = vrot.lane.b32.xlu0 %v1510, 32
      %v1691 = vpop.permute.xlu0 %1690
      %1692 = vrot.lane.b32.xlu0 %v1511, 32
      %v1693 = vpop.permute.xlu0 %1692
      %1694 = vrot.lane.b32.xlu0 %v1512, 32
      %v1695 = vpop.permute.xlu0 %1694
      %1696 = vrot.lane.b32.xlu0 %v1513, 32
      %v1697 = vpop.permute.xlu0 %1696
      %1698 = vrot.lane.b32.xlu0 %v1514, 32
      %v1699 = vpop.permute.xlu0 %1698
      %1700 = vrot.lane.b32.xlu0 %v1515, 32
      %v1701 = vpop.permute.xlu0 %1700
      %1702 = vrot.lane.b32.xlu0 %v1516, 32
      %v1703 = vpop.permute.xlu0 %1702
      %1704 = vrot.lane.b32.xlu0 %v1517, 32
      %v1705 = vpop.permute.xlu0 %1704
      %1706 = vrot.lane.b32.xlu0 %v1518, 32
      %v1707 = vpop.permute.xlu0 %1706
      %1708 = vrot.lane.b32.xlu0 %v1519, 32
      %v1709 = vpop.permute.xlu0 %1708
      %1710 = vrot.lane.b32.xlu0 %v1520, 32
      %v1711 = vpop.permute.xlu0 %1710
      %1712 = vrot.lane.b32.xlu0 %v1521, 32
      %v1713 = vpop.permute.xlu0 %1712
      %vm1778 = vcmask 326912
      %1779 = vst.msk [vmem:[#allocation2] sm:$0xff] %vm1778, %v1587
      %1780 = vst.msk [vmem:[#allocation2 + $0x8] sm:$0xff] %vm1778, %v1589
      %1781 = vst.msk [vmem:[#allocation2 + $0x10] sm:$0xff] %vm1778, %v1591
      %1782 = vst.msk [vmem:[#allocation2 + $0x18] sm:$0xff] %vm1778, %v1593
      %1783 = vst.msk [vmem:[#allocation2 + $0x20] sm:$0xff] %vm1778, %v1595
      %1784 = vst.msk [vmem:[#allocation2 + $0x28] sm:$0xff] %vm1778, %v1597
      %1785 = vst.msk [vmem:[#allocation2 + $0x30] sm:$0xff] %vm1778, %v1599
      %1786 = vst.msk [vmem:[#allocation2 + $0x38] sm:$0xff] %vm1778, %v1601
      %1787 = vst.msk [vmem:[#allocation2 + $0x40] sm:$0xff] %vm1778, %v1603
      %1788 = vst.msk [vmem:[#allocation2 + $0x48] sm:$0xff] %vm1778, %v1605
      %1789 = vst.msk [vmem:[#allocation2 + $0x50] sm:$0xff] %vm1778, %v1607
      %1790 = vst.msk [vmem:[#allocation2 + $0x58] sm:$0xff] %vm1778, %v1609
      %1791 = vst.msk [vmem:[#allocation2 + $0x60] sm:$0xff] %vm1778, %v1611
      %1792 = vst.msk [vmem:[#allocation2 + $0x68] sm:$0xff] %vm1778, %v1613
      %1793 = vst.msk [vmem:[#allocation2 + $0x70] sm:$0xff] %vm1778, %v1615
      %1794 = vst.msk [vmem:[#allocation2 + $0x78] sm:$0xff] %vm1778, %v1617
      %1795 = vst.msk [vmem:[#allocation2 + $0x80] sm:$0xff] %vm1778, %v1619
      %1796 = vst.msk [vmem:[#allocation2 + $0x88] sm:$0xff] %vm1778, %v1621
      %1797 = vst.msk [vmem:[#allocation2 + $0x90] sm:$0xff] %vm1778, %v1623
      %1798 = vst.msk [vmem:[#allocation2 + $0x98] sm:$0xff] %vm1778, %v1625
      %1799 = vst.msk [vmem:[#allocation2 + $0xa0] sm:$0xff] %vm1778, %v1627
      %1800 = vst.msk [vmem:[#allocation2 + $0xa8] sm:$0xff] %vm1778, %v1629
      %1801 = vst.msk [vmem:[#allocation2 + $0xb0] sm:$0xff] %vm1778, %v1631
      %1802 = vst.msk [vmem:[#allocation2 + $0xb8] sm:$0xff] %vm1778, %v1633
      %1803 = vst.msk [vmem:[#allocation2 + $0xc0] sm:$0xff] %vm1778, %v1635
      %1804 = vst.msk [vmem:[#allocation2 + $0xc8] sm:$0xff] %vm1778, %v1637
      %1805 = vst.msk [vmem:[#allocation2 + $0xd0] sm:$0xff] %vm1778, %v1639
      %1806 = vst.msk [vmem:[#allocation2 + $0xd8] sm:$0xff] %vm1778, %v1641
      %1807 = vst.msk [vmem:[#allocation2 + $0xe0] sm:$0xff] %vm1778, %v1643
      %1808 = vst.msk [vmem:[#allocation2 + $0xe8] sm:$0xff] %vm1778, %v1645
      %1809 = vst.msk [vmem:[#allocation2 + $0xf0] sm:$0xff] %vm1778, %v1647
      %1810 = vst.msk [vmem:[#allocation2 + $0xf8] sm:$0xff] %vm1778, %v1649
      %1811 = vst.msk [vmem:[#allocation2 + $0x100] sm:$0xff] %vm1778, %v1651
      %1812 = vst.msk [vmem:[#allocation2 + $0x108] sm:$0xff] %vm1778, %v1653
      %1813 = vst.msk [vmem:[#allocation2 + $0x110] sm:$0xff] %vm1778, %v1655
      %1814 = vst.msk [vmem:[#allocation2 + $0x118] sm:$0xff] %vm1778, %v1657
      %1815 = vst.msk [vmem:[#allocation2 + $0x120] sm:$0xff] %vm1778, %v1659
      %1816 = vst.msk [vmem:[#allocation2 + $0x128] sm:$0xff] %vm1778, %v1661
      %1817 = vst.msk [vmem:[#allocation2 + $0x130] sm:$0xff] %vm1778, %v1663
      %1818 = vst.msk [vmem:[#allocation2 + $0x138] sm:$0xff] %vm1778, %v1665
      %1819 = vst.msk [vmem:[#allocation2 + $0x140] sm:$0xff] %vm1778, %v1667
      %1820 = vst.msk [vmem:[#allocation2 + $0x148] sm:$0xff] %vm1778, %v1669
      %1821 = vst.msk [vmem:[#allocation2 + $0x150] sm:$0xff] %vm1778, %v1671
      %1822 = vst.msk [vmem:[#allocation2 + $0x158] sm:$0xff] %vm1778, %v1673
      %1823 = vst.msk [vmem:[#allocation2 + $0x160] sm:$0xff] %vm1778, %v1675
      %1824 = vst.msk [vmem:[#allocation2 + $0x168] sm:$0xff] %vm1778, %v1677
      %1825 = vst.msk [vmem:[#allocation2 + $0x170] sm:$0xff] %vm1778, %v1679
      %1826 = vst.msk [vmem:[#allocation2 + $0x178] sm:$0xff] %vm1778, %v1681
      %1827 = vst.msk [vmem:[#allocation2 + $0x180] sm:$0xff] %vm1778, %v1683
      %1828 = vst.msk [vmem:[#allocation2 + $0x188] sm:$0xff] %vm1778, %v1685
      %1829 = vst.msk [vmem:[#allocation2 + $0x190] sm:$0xff] %vm1778, %v1687
      %1830 = vst.msk [vmem:[#allocation2 + $0x198] sm:$0xff] %vm1778, %v1689
      %1831 = vst.msk [vmem:[#allocation2 + $0x1a0] sm:$0xff] %vm1778, %v1691
      %1832 = vst.msk [vmem:[#allocation2 + $0x1a8] sm:$0xff] %vm1778, %v1693
      %1833 = vst.msk [vmem:[#allocation2 + $0x1b0] sm:$0xff] %vm1778, %v1695
      %1834 = vst.msk [vmem:[#allocation2 + $0x1b8] sm:$0xff] %vm1778, %v1697
      %1835 = vst.msk [vmem:[#allocation2 + $0x1c0] sm:$0xff] %vm1778, %v1699
      %1836 = vst.msk [vmem:[#allocation2 + $0x1c8] sm:$0xff] %vm1778, %v1701
      %1837 = vst.msk [vmem:[#allocation2 + $0x1d0] sm:$0xff] %vm1778, %v1703
      %1838 = vst.msk [vmem:[#allocation2 + $0x1d8] sm:$0xff] %vm1778, %v1705
      %1839 = vst.msk [vmem:[#allocation2 + $0x1e0] sm:$0xff] %vm1778, %v1707
      %1840 = vst.msk [vmem:[#allocation2 + $0x1e8] sm:$0xff] %vm1778, %v1709
      %1841 = vst.msk [vmem:[#allocation2 + $0x1f0] sm:$0xff] %vm1778, %v1711
      %1842 = vst.msk [vmem:[#allocation2 + $0x1f8] sm:$0xff] %vm1778, %v1713
      %v1843 = vld [vmem:[%s1457 + $0x1] sm:$0xff]
      %v1844 = vld [vmem:[%s1457 + $0x11] sm:$0xff]
      %v1845 = vld [vmem:[%s1457 + $0x21] sm:$0xff]
      %v1846 = vld [vmem:[%s1457 + $0x31] sm:$0xff]
      %v1847 = vld [vmem:[%s1457 + $0x41] sm:$0xff]
      %v1848 = vld [vmem:[%s1457 + $0x51] sm:$0xff]
      %v1849 = vld [vmem:[%s1457 + $0x61] sm:$0xff]
      %v1850 = vld [vmem:[%s1457 + $0x71] sm:$0xff]
      %v1851 = vld [vmem:[%s1457 + $0xa1] sm:$0xff]
      %v1852 = vld [vmem:[%s1457 + $0xb1] sm:$0xff]
      %v1853 = vld [vmem:[%s1457 + $0xc1] sm:$0xff]
      %v1854 = vld [vmem:[%s1457 + $0xd1] sm:$0xff]
      %v1855 = vld [vmem:[%s1457 + $0xe1] sm:$0xff]
      %v1856 = vld [vmem:[%s1457 + $0xf1] sm:$0xff]
      %v1857 = vld [vmem:[%s1457 + $0x101] sm:$0xff]
      %v1858 = vld [vmem:[%s1457 + $0x111] sm:$0xff]
      %v1859 = vld [vmem:[%s1457 + $0x141] sm:$0xff]
      %v1860 = vld [vmem:[%s1457 + $0x151] sm:$0xff]
      %v1861 = vld [vmem:[%s1457 + $0x161] sm:$0xff]
      %v1862 = vld [vmem:[%s1457 + $0x171] sm:$0xff]
      %v1863 = vld [vmem:[%s1457 + $0x181] sm:$0xff]
      %v1864 = vld [vmem:[%s1457 + $0x191] sm:$0xff]
      %v1865 = vld [vmem:[%s1457 + $0x1a1] sm:$0xff]
      %v1866 = vld [vmem:[%s1457 + $0x1b1] sm:$0xff]
      %v1867 = vld [vmem:[%s1457 + $0x1e1] sm:$0xff]
      %v1868 = vld [vmem:[%s1457 + $0x1f1] sm:$0xff]
      %v1869 = vld [vmem:[%s1457 + $0x201] sm:$0xff]
      %v1870 = vld [vmem:[%s1457 + $0x211] sm:$0xff]
      %v1871 = vld [vmem:[%s1457 + $0x221] sm:$0xff]
      %v1872 = vld [vmem:[%s1457 + $0x231] sm:$0xff]
      %v1873 = vld [vmem:[%s1457 + $0x241] sm:$0xff]
      %v1874 = vld [vmem:[%s1457 + $0x251] sm:$0xff]
      %v1875 = vld [vmem:[%s1457 + $0x281] sm:$0xff]
      %v1876 = vld [vmem:[%s1457 + $0x291] sm:$0xff]
      %v1877 = vld [vmem:[%s1457 + $0x2a1] sm:$0xff]
      %v1878 = vld [vmem:[%s1457 + $0x2b1] sm:$0xff]
      %v1879 = vld [vmem:[%s1457 + $0x2c1] sm:$0xff]
      %v1880 = vld [vmem:[%s1457 + $0x2d1] sm:$0xff]
      %v1881 = vld [vmem:[%s1457 + $0x2e1] sm:$0xff]
      %v1882 = vld [vmem:[%s1457 + $0x2f1] sm:$0xff]
      %v1883 = vld [vmem:[%s1457 + $0x321] sm:$0xff]
      %v1884 = vld [vmem:[%s1457 + $0x331] sm:$0xff]
      %v1885 = vld [vmem:[%s1457 + $0x341] sm:$0xff]
      %v1886 = vld [vmem:[%s1457 + $0x351] sm:$0xff]
      %v1887 = vld [vmem:[%s1457 + $0x361] sm:$0xff]
      %v1888 = vld [vmem:[%s1457 + $0x371] sm:$0xff]
      %v1889 = vld [vmem:[%s1457 + $0x381] sm:$0xff]
      %v1890 = vld [vmem:[%s1457 + $0x391] sm:$0xff]
      %v1891 = vld [vmem:[%s1457 + $0x3c1] sm:$0xff]
      %v1892 = vld [vmem:[%s1457 + $0x3d1] sm:$0xff]
      %v1893 = vld [vmem:[%s1457 + $0x3e1] sm:$0xff]
      %v1894 = vld [vmem:[%s1457 + $0x3f1] sm:$0xff]
      %v1895 = vld [vmem:[%s1457 + $0x401] sm:$0xff]
      %v1896 = vld [vmem:[%s1457 + $0x411] sm:$0xff]
      %v1897 = vld [vmem:[%s1457 + $0x421] sm:$0xff]
      %v1898 = vld [vmem:[%s1457 + $0x431] sm:$0xff]
      %v1899 = vld [vmem:[%s1457 + $0x461] sm:$0xff]
      %v1900 = vld [vmem:[%s1457 + $0x471] sm:$0xff]
      %v1901 = vld [vmem:[%s1457 + $0x481] sm:$0xff]
      %v1902 = vld [vmem:[%s1457 + $0x491] sm:$0xff]
      %v1903 = vld [vmem:[%s1457 + $0x4a1] sm:$0xff]
      %v1904 = vld [vmem:[%s1457 + $0x4b1] sm:$0xff]
      %v1905 = vld [vmem:[%s1457 + $0x4c1] sm:$0xff]
      %v1906 = vld [vmem:[%s1457 + $0x4d1] sm:$0xff]
      %1971 = vrot.lane.b32.xlu0 %v1843, 40
      %v1972 = vpop.permute.xlu0 %1971
      %1973 = vrot.lane.b32.xlu0 %v1844, 40
      %v1974 = vpop.permute.xlu0 %1973
      %1975 = vrot.lane.b32.xlu0 %v1845, 40
      %v1976 = vpop.permute.xlu0 %1975
      %1977 = vrot.lane.b32.xlu0 %v1846, 40
      %v1978 = vpop.permute.xlu0 %1977
      %1979 = vrot.lane.b32.xlu0 %v1847, 40
      %v1980 = vpop.permute.xlu0 %1979
      %1981 = vrot.lane.b32.xlu0 %v1848, 40
      %v1982 = vpop.permute.xlu0 %1981
      %1983 = vrot.lane.b32.xlu0 %v1849, 40
      %v1984 = vpop.permute.xlu0 %1983
      %1985 = vrot.lane.b32.xlu0 %v1850, 40
      %v1986 = vpop.permute.xlu0 %1985
      %1987 = vrot.lane.b32.xlu0 %v1851, 40
      %v1988 = vpop.permute.xlu0 %1987
      %1989 = vrot.lane.b32.xlu0 %v1852, 40
      %v1990 = vpop.permute.xlu0 %1989
      %1991 = vrot.lane.b32.xlu0 %v1853, 40
      %v1992 = vpop.permute.xlu0 %1991
      %1993 = vrot.lane.b32.xlu0 %v1854, 40
      %v1994 = vpop.permute.xlu0 %1993
      %1995 = vrot.lane.b32.xlu0 %v1855, 40
      %v1996 = vpop.permute.xlu0 %1995
      %1997 = vrot.lane.b32.xlu0 %v1856, 40
      %v1998 = vpop.permute.xlu0 %1997
      %1999 = vrot.lane.b32.xlu0 %v1857, 40
      %v2000 = vpop.permute.xlu0 %1999
      %2001 = vrot.lane.b32.xlu0 %v1858, 40
      %v2002 = vpop.permute.xlu0 %2001
      %2003 = vrot.lane.b32.xlu0 %v1859, 40
      %v2004 = vpop.permute.xlu0 %2003
      %2005 = vrot.lane.b32.xlu0 %v1860, 40
      %v2006 = vpop.permute.xlu0 %2005
      %2007 = vrot.lane.b32.xlu0 %v1861, 40
      %v2008 = vpop.permute.xlu0 %2007
      %2009 = vrot.lane.b32.xlu0 %v1862, 40
      %v2010 = vpop.permute.xlu0 %2009
      %2011 = vrot.lane.b32.xlu0 %v1863, 40
      %v2012 = vpop.permute.xlu0 %2011
      %2013 = vrot.lane.b32.xlu0 %v1864, 40
      %v2014 = vpop.permute.xlu0 %2013
      %2015 = vrot.lane.b32.xlu0 %v1865, 40
      %v2016 = vpop.permute.xlu0 %2015
      %2017 = vrot.lane.b32.xlu0 %v1866, 40
      %v2018 = vpop.permute.xlu0 %2017
      %2019 = vrot.lane.b32.xlu0 %v1867, 40
      %v2020 = vpop.permute.xlu0 %2019
      %2021 = vrot.lane.b32.xlu0 %v1868, 40
      %v2022 = vpop.permute.xlu0 %2021
      %2023 = vrot.lane.b32.xlu0 %v1869, 40
      %v2024 = vpop.permute.xlu0 %2023
      %2025 = vrot.lane.b32.xlu0 %v1870, 40
      %v2026 = vpop.permute.xlu0 %2025
      %2027 = vrot.lane.b32.xlu0 %v1871, 40
      %v2028 = vpop.permute.xlu0 %2027
      %2029 = vrot.lane.b32.xlu0 %v1872, 40
      %v2030 = vpop.permute.xlu0 %2029
      %2031 = vrot.lane.b32.xlu0 %v1873, 40
      %v2032 = vpop.permute.xlu0 %2031
      %2033 = vrot.lane.b32.xlu0 %v1874, 40
      %v2034 = vpop.permute.xlu0 %2033
      %2035 = vrot.lane.b32.xlu0 %v1875, 40
      %v2036 = vpop.permute.xlu0 %2035
      %2037 = vrot.lane.b32.xlu0 %v1876, 40
      %v2038 = vpop.permute.xlu0 %2037
      %2039 = vrot.lane.b32.xlu0 %v1877, 40
      %v2040 = vpop.permute.xlu0 %2039
      %2041 = vrot.lane.b32.xlu0 %v1878, 40
      %v2042 = vpop.permute.xlu0 %2041
      %2043 = vrot.lane.b32.xlu0 %v1879, 40
      %v2044 = vpop.permute.xlu0 %2043
      %2045 = vrot.lane.b32.xlu0 %v1880, 40
      %v2046 = vpop.permute.xlu0 %2045
      %2047 = vrot.lane.b32.xlu0 %v1881, 40
      %v2048 = vpop.permute.xlu0 %2047
      %2049 = vrot.lane.b32.xlu0 %v1882, 40
      %v2050 = vpop.permute.xlu0 %2049
      %2051 = vrot.lane.b32.xlu0 %v1883, 40
      %v2052 = vpop.permute.xlu0 %2051
      %2053 = vrot.lane.b32.xlu0 %v1884, 40
      %v2054 = vpop.permute.xlu0 %2053
      %2055 = vrot.lane.b32.xlu0 %v1885, 40
      %v2056 = vpop.permute.xlu0 %2055
      %2057 = vrot.lane.b32.xlu0 %v1886, 40
      %v2058 = vpop.permute.xlu0 %2057
      %2059 = vrot.lane.b32.xlu0 %v1887, 40
      %v2060 = vpop.permute.xlu0 %2059
      %2061 = vrot.lane.b32.xlu0 %v1888, 40
      %v2062 = vpop.permute.xlu0 %2061
      %2063 = vrot.lane.b32.xlu0 %v1889, 40
      %v2064 = vpop.permute.xlu0 %2063
      %2065 = vrot.lane.b32.xlu0 %v1890, 40
      %v2066 = vpop.permute.xlu0 %2065
      %2067 = vrot.lane.b32.xlu0 %v1891, 40
      %v2068 = vpop.permute.xlu0 %2067
      %2069 = vrot.lane.b32.xlu0 %v1892, 40
      %v2070 = vpop.permute.xlu0 %2069
      %2071 = vrot.lane.b32.xlu0 %v1893, 40
      %v2072 = vpop.permute.xlu0 %2071
      %2073 = vrot.lane.b32.xlu0 %v1894, 40
      %v2074 = vpop.permute.xlu0 %2073
      %2075 = vrot.lane.b32.xlu0 %v1895, 40
      %v2076 = vpop.permute.xlu0 %2075
      %2077 = vrot.lane.b32.xlu0 %v1896, 40
      %v2078 = vpop.permute.xlu0 %2077
      %2079 = vrot.lane.b32.xlu0 %v1897, 40
      %v2080 = vpop.permute.xlu0 %2079
      %2081 = vrot.lane.b32.xlu0 %v1898, 40
      %v2082 = vpop.permute.xlu0 %2081
      %2083 = vrot.lane.b32.xlu0 %v1899, 40
      %v2084 = vpop.permute.xlu0 %2083
      %2085 = vrot.lane.b32.xlu0 %v1900, 40
      %v2086 = vpop.permute.xlu0 %2085
      %2087 = vrot.lane.b32.xlu0 %v1901, 40
      %v2088 = vpop.permute.xlu0 %2087
      %2089 = vrot.lane.b32.xlu0 %v1902, 40
      %v2090 = vpop.permute.xlu0 %2089
      %2091 = vrot.lane.b32.xlu0 %v1903, 40
      %v2092 = vpop.permute.xlu0 %2091
      %2093 = vrot.lane.b32.xlu0 %v1904, 40
      %v2094 = vpop.permute.xlu0 %2093
      %2095 = vrot.lane.b32.xlu0 %v1905, 40
      %v2096 = vpop.permute.xlu0 %2095
      %2097 = vrot.lane.b32.xlu0 %v1906, 40
      %v2098 = vpop.permute.xlu0 %2097
      %vm2163 = vcmask 392512
      %2164 = vst.msk [vmem:[#allocation2] sm:$0xff] %vm2163, %v1972
      %2165 = vst.msk [vmem:[#allocation2 + $0x8] sm:$0xff] %vm2163, %v1974
      %2166 = vst.msk [vmem:[#allocation2 + $0x10] sm:$0xff] %vm2163, %v1976
      %2167 = vst.msk [vmem:[#allocation2 + $0x18] sm:$0xff] %vm2163, %v1978
      %2168 = vst.msk [vmem:[#allocation2 + $0x20] sm:$0xff] %vm2163, %v1980
      %2169 = vst.msk [vmem:[#allocation2 + $0x28] sm:$0xff] %vm2163, %v1982
      %2170 = vst.msk [vmem:[#allocation2 + $0x30] sm:$0xff] %vm2163, %v1984
      %2171 = vst.msk [vmem:[#allocation2 + $0x38] sm:$0xff] %vm2163, %v1986
      %2172 = vst.msk [vmem:[#allocation2 + $0x40] sm:$0xff] %vm2163, %v1988
      %2173 = vst.msk [vmem:[#allocation2 + $0x48] sm:$0xff] %vm2163, %v1990
      %2174 = vst.msk [vmem:[#allocation2 + $0x50] sm:$0xff] %vm2163, %v1992
      %2175 = vst.msk [vmem:[#allocation2 + $0x58] sm:$0xff] %vm2163, %v1994
      %2176 = vst.msk [vmem:[#allocation2 + $0x60] sm:$0xff] %vm2163, %v1996
      %2177 = vst.msk [vmem:[#allocation2 + $0x68] sm:$0xff] %vm2163, %v1998
      %2178 = vst.msk [vmem:[#allocation2 + $0x70] sm:$0xff] %vm2163, %v2000
      %2179 = vst.msk [vmem:[#allocation2 + $0x78] sm:$0xff] %vm2163, %v2002
      %2180 = vst.msk [vmem:[#allocation2 + $0x80] sm:$0xff] %vm2163, %v2004
      %2181 = vst.msk [vmem:[#allocation2 + $0x88] sm:$0xff] %vm2163, %v2006
      %2182 = vst.msk [vmem:[#allocation2 + $0x90] sm:$0xff] %vm2163, %v2008
      %2183 = vst.msk [vmem:[#allocation2 + $0x98] sm:$0xff] %vm2163, %v2010
      %2184 = vst.msk [vmem:[#allocation2 + $0xa0] sm:$0xff] %vm2163, %v2012
      %2185 = vst.msk [vmem:[#allocation2 + $0xa8] sm:$0xff] %vm2163, %v2014
      %2186 = vst.msk [vmem:[#allocation2 + $0xb0] sm:$0xff] %vm2163, %v2016
      %2187 = vst.msk [vmem:[#allocation2 + $0xb8] sm:$0xff] %vm2163, %v2018
      %2188 = vst.msk [vmem:[#allocation2 + $0xc0] sm:$0xff] %vm2163, %v2020
      %2189 = vst.msk [vmem:[#allocation2 + $0xc8] sm:$0xff] %vm2163, %v2022
      %2190 = vst.msk [vmem:[#allocation2 + $0xd0] sm:$0xff] %vm2163, %v2024
      %2191 = vst.msk [vmem:[#allocation2 + $0xd8] sm:$0xff] %vm2163, %v2026
      %2192 = vst.msk [vmem:[#allocation2 + $0xe0] sm:$0xff] %vm2163, %v2028
      %2193 = vst.msk [vmem:[#allocation2 + $0xe8] sm:$0xff] %vm2163, %v2030
      %2194 = vst.msk [vmem:[#allocation2 + $0xf0] sm:$0xff] %vm2163, %v2032
      %2195 = vst.msk [vmem:[#allocation2 + $0xf8] sm:$0xff] %vm2163, %v2034
      %2196 = vst.msk [vmem:[#allocation2 + $0x100] sm:$0xff] %vm2163, %v2036
      %2197 = vst.msk [vmem:[#allocation2 + $0x108] sm:$0xff] %vm2163, %v2038
      %2198 = vst.msk [vmem:[#allocation2 + $0x110] sm:$0xff] %vm2163, %v2040
      %2199 = vst.msk [vmem:[#allocation2 + $0x118] sm:$0xff] %vm2163, %v2042
      %2200 = vst.msk [vmem:[#allocation2 + $0x120] sm:$0xff] %vm2163, %v2044
      %2201 = vst.msk [vmem:[#allocation2 + $0x128] sm:$0xff] %vm2163, %v2046
      %2202 = vst.msk [vmem:[#allocation2 + $0x130] sm:$0xff] %vm2163, %v2048
      %2203 = vst.msk [vmem:[#allocation2 + $0x138] sm:$0xff] %vm2163, %v2050
      %2204 = vst.msk [vmem:[#allocation2 + $0x140] sm:$0xff] %vm2163, %v2052
      %2205 = vst.msk [vmem:[#allocation2 + $0x148] sm:$0xff] %vm2163, %v2054
      %2206 = vst.msk [vmem:[#allocation2 + $0x150] sm:$0xff] %vm2163, %v2056
      %2207 = vst.msk [vmem:[#allocation2 + $0x158] sm:$0xff] %vm2163, %v2058
      %2208 = vst.msk [vmem:[#allocation2 + $0x160] sm:$0xff] %vm2163, %v2060
      %2209 = vst.msk [vmem:[#allocation2 + $0x168] sm:$0xff] %vm2163, %v2062
      %2210 = vst.msk [vmem:[#allocation2 + $0x170] sm:$0xff] %vm2163, %v2064
      %2211 = vst.msk [vmem:[#allocation2 + $0x178] sm:$0xff] %vm2163, %v2066
      %2212 = vst.msk [vmem:[#allocation2 + $0x180] sm:$0xff] %vm2163, %v2068
      %2213 = vst.msk [vmem:[#allocation2 + $0x188] sm:$0xff] %vm2163, %v2070
      %2214 = vst.msk [vmem:[#allocation2 + $0x190] sm:$0xff] %vm2163, %v2072
      %2215 = vst.msk [vmem:[#allocation2 + $0x198] sm:$0xff] %vm2163, %v2074
      %2216 = vst.msk [vmem:[#allocation2 + $0x1a0] sm:$0xff] %vm2163, %v2076
      %2217 = vst.msk [vmem:[#allocation2 + $0x1a8] sm:$0xff] %vm2163, %v2078
      %2218 = vst.msk [vmem:[#allocation2 + $0x1b0] sm:$0xff] %vm2163, %v2080
      %2219 = vst.msk [vmem:[#allocation2 + $0x1b8] sm:$0xff] %vm2163, %v2082
      %2220 = vst.msk [vmem:[#allocation2 + $0x1c0] sm:$0xff] %vm2163, %v2084
      %2221 = vst.msk [vmem:[#allocation2 + $0x1c8] sm:$0xff] %vm2163, %v2086
      %2222 = vst.msk [vmem:[#allocation2 + $0x1d0] sm:$0xff] %vm2163, %v2088
      %2223 = vst.msk [vmem:[#allocation2 + $0x1d8] sm:$0xff] %vm2163, %v2090
      %2224 = vst.msk [vmem:[#allocation2 + $0x1e0] sm:$0xff] %vm2163, %v2092
      %2225 = vst.msk [vmem:[#allocation2 + $0x1e8] sm:$0xff] %vm2163, %v2094
      %2226 = vst.msk [vmem:[#allocation2 + $0x1f0] sm:$0xff] %vm2163, %v2096
      %2227 = vst.msk [vmem:[#allocation2 + $0x1f8] sm:$0xff] %vm2163, %v2098
      %s2228 = scalar_lea.vmem %s165, 176
      %v2229 = vld [vmem:[%s2228] sm:$0xff]
      %v2230 = vld [vmem:[%s2228 + $0x10] sm:$0xff]
      %v2231 = vld [vmem:[%s2228 + $0x20] sm:$0xff]
      %v2232 = vld [vmem:[%s2228 + $0x30] sm:$0xff]
      %v2233 = vld [vmem:[%s2228 + $0x40] sm:$0xff]
      %v2234 = vld [vmem:[%s2228 + $0x50] sm:$0xff]
      %v2235 = vld [vmem:[%s2228 + $0x60] sm:$0xff]
      %v2236 = vld [vmem:[%s2228 + $0x70] sm:$0xff]
      %v2237 = vld [vmem:[%s2228 + $0xa0] sm:$0xff]
      %v2238 = vld [vmem:[%s2228 + $0xb0] sm:$0xff]
      %v2239 = vld [vmem:[%s2228 + $0xc0] sm:$0xff]
      %v2240 = vld [vmem:[%s2228 + $0xd0] sm:$0xff]
      %v2241 = vld [vmem:[%s2228 + $0xe0] sm:$0xff]
      %v2242 = vld [vmem:[%s2228 + $0xf0] sm:$0xff]
      %v2243 = vld [vmem:[%s2228 + $0x100] sm:$0xff]
      %v2244 = vld [vmem:[%s2228 + $0x110] sm:$0xff]
      %v2245 = vld [vmem:[%s2228 + $0x140] sm:$0xff]
      %v2246 = vld [vmem:[%s2228 + $0x150] sm:$0xff]
      %v2247 = vld [vmem:[%s2228 + $0x160] sm:$0xff]
      %v2248 = vld [vmem:[%s2228 + $0x170] sm:$0xff]
      %v2249 = vld [vmem:[%s2228 + $0x180] sm:$0xff]
      %v2250 = vld [vmem:[%s2228 + $0x190] sm:$0xff]
      %v2251 = vld [vmem:[%s2228 + $0x1a0] sm:$0xff]
      %v2252 = vld [vmem:[%s2228 + $0x1b0] sm:$0xff]
      %v2253 = vld [vmem:[%s2228 + $0x1e0] sm:$0xff]
      %v2254 = vld [vmem:[%s2228 + $0x1f0] sm:$0xff]
      %v2255 = vld [vmem:[%s2228 + $0x200] sm:$0xff]
      %v2256 = vld [vmem:[%s2228 + $0x210] sm:$0xff]
      %v2257 = vld [vmem:[%s2228 + $0x220] sm:$0xff]
      %v2258 = vld [vmem:[%s2228 + $0x230] sm:$0xff]
      %v2259 = vld [vmem:[%s2228 + $0x240] sm:$0xff]
      %v2260 = vld [vmem:[%s2228 + $0x250] sm:$0xff]
      %v2261 = vld [vmem:[%s2228 + $0x280] sm:$0xff]
      %v2262 = vld [vmem:[%s2228 + $0x290] sm:$0xff]
      %v2263 = vld [vmem:[%s2228 + $0x2a0] sm:$0xff]
      %v2264 = vld [vmem:[%s2228 + $0x2b0] sm:$0xff]
      %v2265 = vld [vmem:[%s2228 + $0x2c0] sm:$0xff]
      %v2266 = vld [vmem:[%s2228 + $0x2d0] sm:$0xff]
      %v2267 = vld [vmem:[%s2228 + $0x2e0] sm:$0xff]
      %v2268 = vld [vmem:[%s2228 + $0x2f0] sm:$0xff]
      %v2269 = vld [vmem:[%s2228 + $0x320] sm:$0xff]
      %v2270 = vld [vmem:[%s2228 + $0x330] sm:$0xff]
      %v2271 = vld [vmem:[%s2228 + $0x340] sm:$0xff]
      %v2272 = vld [vmem:[%s2228 + $0x350] sm:$0xff]
      %v2273 = vld [vmem:[%s2228 + $0x360] sm:$0xff]
      %v2274 = vld [vmem:[%s2228 + $0x370] sm:$0xff]
      %v2275 = vld [vmem:[%s2228 + $0x380] sm:$0xff]
      %v2276 = vld [vmem:[%s2228 + $0x390] sm:$0xff]
      %v2277 = vld [vmem:[%s2228 + $0x3c0] sm:$0xff]
      %v2278 = vld [vmem:[%s2228 + $0x3d0] sm:$0xff]
      %v2279 = vld [vmem:[%s2228 + $0x3e0] sm:$0xff]
      %v2280 = vld [vmem:[%s2228 + $0x3f0] sm:$0xff]
      %v2281 = vld [vmem:[%s2228 + $0x400] sm:$0xff]
      %v2282 = vld [vmem:[%s2228 + $0x410] sm:$0xff]
      %v2283 = vld [vmem:[%s2228 + $0x420] sm:$0xff]
      %v2284 = vld [vmem:[%s2228 + $0x430] sm:$0xff]
      %v2285 = vld [vmem:[%s2228 + $0x460] sm:$0xff]
      %v2286 = vld [vmem:[%s2228 + $0x470] sm:$0xff]
      %v2287 = vld [vmem:[%s2228 + $0x480] sm:$0xff]
      %v2288 = vld [vmem:[%s2228 + $0x490] sm:$0xff]
      %v2289 = vld [vmem:[%s2228 + $0x4a0] sm:$0xff]
      %v2290 = vld [vmem:[%s2228 + $0x4b0] sm:$0xff]
      %v2291 = vld [vmem:[%s2228 + $0x4c0] sm:$0xff]
      %v2292 = vld [vmem:[%s2228 + $0x4d0] sm:$0xff]
      %2357 = vrot.lane.b32.xlu0 %v2229, 48
      %v2358 = vpop.permute.xlu0 %2357
      %2359 = vrot.lane.b32.xlu0 %v2230, 48
      %v2360 = vpop.permute.xlu0 %2359
      %2361 = vrot.lane.b32.xlu0 %v2231, 48
      %v2362 = vpop.permute.xlu0 %2361
      %2363 = vrot.lane.b32.xlu0 %v2232, 48
      %v2364 = vpop.permute.xlu0 %2363
      %2365 = vrot.lane.b32.xlu0 %v2233, 48
      %v2366 = vpop.permute.xlu0 %2365
      %2367 = vrot.lane.b32.xlu0 %v2234, 48
      %v2368 = vpop.permute.xlu0 %2367
      %2369 = vrot.lane.b32.xlu0 %v2235, 48
      %v2370 = vpop.permute.xlu0 %2369
      %2371 = vrot.lane.b32.xlu0 %v2236, 48
      %v2372 = vpop.permute.xlu0 %2371
      %2373 = vrot.lane.b32.xlu0 %v2237, 48
      %v2374 = vpop.permute.xlu0 %2373
      %2375 = vrot.lane.b32.xlu0 %v2238, 48
      %v2376 = vpop.permute.xlu0 %2375
      %2377 = vrot.lane.b32.xlu0 %v2239, 48
      %v2378 = vpop.permute.xlu0 %2377
      %2379 = vrot.lane.b32.xlu0 %v2240, 48
      %v2380 = vpop.permute.xlu0 %2379
      %2381 = vrot.lane.b32.xlu0 %v2241, 48
      %v2382 = vpop.permute.xlu0 %2381
      %2383 = vrot.lane.b32.xlu0 %v2242, 48
      %v2384 = vpop.permute.xlu0 %2383
      %2385 = vrot.lane.b32.xlu0 %v2243, 48
      %v2386 = vpop.permute.xlu0 %2385
      %2387 = vrot.lane.b32.xlu0 %v2244, 48
      %v2388 = vpop.permute.xlu0 %2387
      %2389 = vrot.lane.b32.xlu0 %v2245, 48
      %v2390 = vpop.permute.xlu0 %2389
      %2391 = vrot.lane.b32.xlu0 %v2246, 48
      %v2392 = vpop.permute.xlu0 %2391
      %2393 = vrot.lane.b32.xlu0 %v2247, 48
      %v2394 = vpop.permute.xlu0 %2393
      %2395 = vrot.lane.b32.xlu0 %v2248, 48
      %v2396 = vpop.permute.xlu0 %2395
      %2397 = vrot.lane.b32.xlu0 %v2249, 48
      %v2398 = vpop.permute.xlu0 %2397
      %2399 = vrot.lane.b32.xlu0 %v2250, 48
      %v2400 = vpop.permute.xlu0 %2399
      %2401 = vrot.lane.b32.xlu0 %v2251, 48
      %v2402 = vpop.permute.xlu0 %2401
      %2403 = vrot.lane.b32.xlu0 %v2252, 48
      %v2404 = vpop.permute.xlu0 %2403
      %2405 = vrot.lane.b32.xlu0 %v2253, 48
      %v2406 = vpop.permute.xlu0 %2405
      %2407 = vrot.lane.b32.xlu0 %v2254, 48
      %v2408 = vpop.permute.xlu0 %2407
      %2409 = vrot.lane.b32.xlu0 %v2255, 48
      %v2410 = vpop.permute.xlu0 %2409
      %2411 = vrot.lane.b32.xlu0 %v2256, 48
      %v2412 = vpop.permute.xlu0 %2411
      %2413 = vrot.lane.b32.xlu0 %v2257, 48
      %v2414 = vpop.permute.xlu0 %2413
      %2415 = vrot.lane.b32.xlu0 %v2258, 48
      %v2416 = vpop.permute.xlu0 %2415
      %2417 = vrot.lane.b32.xlu0 %v2259, 48
      %v2418 = vpop.permute.xlu0 %2417
      %2419 = vrot.lane.b32.xlu0 %v2260, 48
      %v2420 = vpop.permute.xlu0 %2419
      %2421 = vrot.lane.b32.xlu0 %v2261, 48
      %v2422 = vpop.permute.xlu0 %2421
      %2423 = vrot.lane.b32.xlu0 %v2262, 48
      %v2424 = vpop.permute.xlu0 %2423
      %2425 = vrot.lane.b32.xlu0 %v2263, 48
      %v2426 = vpop.permute.xlu0 %2425
      %2427 = vrot.lane.b32.xlu0 %v2264, 48
      %v2428 = vpop.permute.xlu0 %2427
      %2429 = vrot.lane.b32.xlu0 %v2265, 48
      %v2430 = vpop.permute.xlu0 %2429
      %2431 = vrot.lane.b32.xlu0 %v2266, 48
      %v2432 = vpop.permute.xlu0 %2431
      %2433 = vrot.lane.b32.xlu0 %v2267, 48
      %v2434 = vpop.permute.xlu0 %2433
      %2435 = vrot.lane.b32.xlu0 %v2268, 48
      %v2436 = vpop.permute.xlu0 %2435
      %2437 = vrot.lane.b32.xlu0 %v2269, 48
      %v2438 = vpop.permute.xlu0 %2437
      %2439 = vrot.lane.b32.xlu0 %v2270, 48
      %v2440 = vpop.permute.xlu0 %2439
      %2441 = vrot.lane.b32.xlu0 %v2271, 48
      %v2442 = vpop.permute.xlu0 %2441
      %2443 = vrot.lane.b32.xlu0 %v2272, 48
      %v2444 = vpop.permute.xlu0 %2443
      %2445 = vrot.lane.b32.xlu0 %v2273, 48
      %v2446 = vpop.permute.xlu0 %2445
      %2447 = vrot.lane.b32.xlu0 %v2274, 48
      %v2448 = vpop.permute.xlu0 %2447
      %2449 = vrot.lane.b32.xlu0 %v2275, 48
      %v2450 = vpop.permute.xlu0 %2449
      %2451 = vrot.lane.b32.xlu0 %v2276, 48
      %v2452 = vpop.permute.xlu0 %2451
      %2453 = vrot.lane.b32.xlu0 %v2277, 48
      %v2454 = vpop.permute.xlu0 %2453
      %2455 = vrot.lane.b32.xlu0 %v2278, 48
      %v2456 = vpop.permute.xlu0 %2455
      %2457 = vrot.lane.b32.xlu0 %v2279, 48
      %v2458 = vpop.permute.xlu0 %2457
      %2459 = vrot.lane.b32.xlu0 %v2280, 48
      %v2460 = vpop.permute.xlu0 %2459
      %2461 = vrot.lane.b32.xlu0 %v2281, 48
      %v2462 = vpop.permute.xlu0 %2461
      %2463 = vrot.lane.b32.xlu0 %v2282, 48
      %v2464 = vpop.permute.xlu0 %2463
      %2465 = vrot.lane.b32.xlu0 %v2283, 48
      %v2466 = vpop.permute.xlu0 %2465
      %2467 = vrot.lane.b32.xlu0 %v2284, 48
      %v2468 = vpop.permute.xlu0 %2467
      %2469 = vrot.lane.b32.xlu0 %v2285, 48
      %v2470 = vpop.permute.xlu0 %2469
      %2471 = vrot.lane.b32.xlu0 %v2286, 48
      %v2472 = vpop.permute.xlu0 %2471
      %2473 = vrot.lane.b32.xlu0 %v2287, 48
      %v2474 = vpop.permute.xlu0 %2473
      %2475 = vrot.lane.b32.xlu0 %v2288, 48
      %v2476 = vpop.permute.xlu0 %2475
      %2477 = vrot.lane.b32.xlu0 %v2289, 48
      %v2478 = vpop.permute.xlu0 %2477
      %2479 = vrot.lane.b32.xlu0 %v2290, 48
      %v2480 = vpop.permute.xlu0 %2479
      %2481 = vrot.lane.b32.xlu0 %v2291, 48
      %v2482 = vpop.permute.xlu0 %2481
      %2483 = vrot.lane.b32.xlu0 %v2292, 48
      %v2484 = vpop.permute.xlu0 %2483
      %vm2549 = vcmask 458112
      %2550 = vst.msk [vmem:[#allocation2] sm:$0xff] %vm2549, %v2358
      %2551 = vst.msk [vmem:[#allocation2 + $0x8] sm:$0xff] %vm2549, %v2360
      %2552 = vst.msk [vmem:[#allocation2 + $0x10] sm:$0xff] %vm2549, %v2362
      %2553 = vst.msk [vmem:[#allocation2 + $0x18] sm:$0xff] %vm2549, %v2364
      %2554 = vst.msk [vmem:[#allocation2 + $0x20] sm:$0xff] %vm2549, %v2366
      %2555 = vst.msk [vmem:[#allocation2 + $0x28] sm:$0xff] %vm2549, %v2368
      %2556 = vst.msk [vmem:[#allocation2 + $0x30] sm:$0xff] %vm2549, %v2370
      %2557 = vst.msk [vmem:[#allocation2 + $0x38] sm:$0xff] %vm2549, %v2372
      %2558 = vst.msk [vmem:[#allocation2 + $0x40] sm:$0xff] %vm2549, %v2374
      %2559 = vst.msk [vmem:[#allocation2 + $0x48] sm:$0xff] %vm2549, %v2376
      %2560 = vst.msk [vmem:[#allocation2 + $0x50] sm:$0xff] %vm2549, %v2378
      %2561 = vst.msk [vmem:[#allocation2 + $0x58] sm:$0xff] %vm2549, %v2380
      %2562 = vst.msk [vmem:[#allocation2 + $0x60] sm:$0xff] %vm2549, %v2382
      %2563 = vst.msk [vmem:[#allocation2 + $0x68] sm:$0xff] %vm2549, %v2384
      %2564 = vst.msk [vmem:[#allocation2 + $0x70] sm:$0xff] %vm2549, %v2386
      %2565 = vst.msk [vmem:[#allocation2 + $0x78] sm:$0xff] %vm2549, %v2388
      %2566 = vst.msk [vmem:[#allocation2 + $0x80] sm:$0xff] %vm2549, %v2390
      %2567 = vst.msk [vmem:[#allocation2 + $0x88] sm:$0xff] %vm2549, %v2392
      %2568 = vst.msk [vmem:[#allocation2 + $0x90] sm:$0xff] %vm2549, %v2394
      %2569 = vst.msk [vmem:[#allocation2 + $0x98] sm:$0xff] %vm2549, %v2396
      %2570 = vst.msk [vmem:[#allocation2 + $0xa0] sm:$0xff] %vm2549, %v2398
      %2571 = vst.msk [vmem:[#allocation2 + $0xa8] sm:$0xff] %vm2549, %v2400
      %2572 = vst.msk [vmem:[#allocation2 + $0xb0] sm:$0xff] %vm2549, %v2402
      %2573 = vst.msk [vmem:[#allocation2 + $0xb8] sm:$0xff] %vm2549, %v2404
      %2574 = vst.msk [vmem:[#allocation2 + $0xc0] sm:$0xff] %vm2549, %v2406
      %2575 = vst.msk [vmem:[#allocation2 + $0xc8] sm:$0xff] %vm2549, %v2408
      %2576 = vst.msk [vmem:[#allocation2 + $0xd0] sm:$0xff] %vm2549, %v2410
      %2577 = vst.msk [vmem:[#allocation2 + $0xd8] sm:$0xff] %vm2549, %v2412
      %2578 = vst.msk [vmem:[#allocation2 + $0xe0] sm:$0xff] %vm2549, %v2414
      %2579 = vst.msk [vmem:[#allocation2 + $0xe8] sm:$0xff] %vm2549, %v2416
      %2580 = vst.msk [vmem:[#allocation2 + $0xf0] sm:$0xff] %vm2549, %v2418
      %2581 = vst.msk [vmem:[#allocation2 + $0xf8] sm:$0xff] %vm2549, %v2420
      %2582 = vst.msk [vmem:[#allocation2 + $0x100] sm:$0xff] %vm2549, %v2422
      %2583 = vst.msk [vmem:[#allocation2 + $0x108] sm:$0xff] %vm2549, %v2424
      %2584 = vst.msk [vmem:[#allocation2 + $0x110] sm:$0xff] %vm2549, %v2426
      %2585 = vst.msk [vmem:[#allocation2 + $0x118] sm:$0xff] %vm2549, %v2428
      %2586 = vst.msk [vmem:[#allocation2 + $0x120] sm:$0xff] %vm2549, %v2430
      %2587 = vst.msk [vmem:[#allocation2 + $0x128] sm:$0xff] %vm2549, %v2432
      %2588 = vst.msk [vmem:[#allocation2 + $0x130] sm:$0xff] %vm2549, %v2434
      %2589 = vst.msk [vmem:[#allocation2 + $0x138] sm:$0xff] %vm2549, %v2436
      %2590 = vst.msk [vmem:[#allocation2 + $0x140] sm:$0xff] %vm2549, %v2438
      %2591 = vst.msk [vmem:[#allocation2 + $0x148] sm:$0xff] %vm2549, %v2440
      %2592 = vst.msk [vmem:[#allocation2 + $0x150] sm:$0xff] %vm2549, %v2442
      %2593 = vst.msk [vmem:[#allocation2 + $0x158] sm:$0xff] %vm2549, %v2444
      %2594 = vst.msk [vmem:[#allocation2 + $0x160] sm:$0xff] %vm2549, %v2446
      %2595 = vst.msk [vmem:[#allocation2 + $0x168] sm:$0xff] %vm2549, %v2448
      %2596 = vst.msk [vmem:[#allocation2 + $0x170] sm:$0xff] %vm2549, %v2450
      %2597 = vst.msk [vmem:[#allocation2 + $0x178] sm:$0xff] %vm2549, %v2452
      %2598 = vst.msk [vmem:[#allocation2 + $0x180] sm:$0xff] %vm2549, %v2454
      %2599 = vst.msk [vmem:[#allocation2 + $0x188] sm:$0xff] %vm2549, %v2456
      %2600 = vst.msk [vmem:[#allocation2 + $0x190] sm:$0xff] %vm2549, %v2458
      %2601 = vst.msk [vmem:[#allocation2 + $0x198] sm:$0xff] %vm2549, %v2460
      %2602 = vst.msk [vmem:[#allocation2 + $0x1a0] sm:$0xff] %vm2549, %v2462
      %2603 = vst.msk [vmem:[#allocation2 + $0x1a8] sm:$0xff] %vm2549, %v2464
      %2604 = vst.msk [vmem:[#allocation2 + $0x1b0] sm:$0xff] %vm2549, %v2466
      %2605 = vst.msk [vmem:[#allocation2 + $0x1b8] sm:$0xff] %vm2549, %v2468
      %2606 = vst.msk [vmem:[#allocation2 + $0x1c0] sm:$0xff] %vm2549, %v2470
      %2607 = vst.msk [vmem:[#allocation2 + $0x1c8] sm:$0xff] %vm2549, %v2472
      %2608 = vst.msk [vmem:[#allocation2 + $0x1d0] sm:$0xff] %vm2549, %v2474
      %2609 = vst.msk [vmem:[#allocation2 + $0x1d8] sm:$0xff] %vm2549, %v2476
      %2610 = vst.msk [vmem:[#allocation2 + $0x1e0] sm:$0xff] %vm2549, %v2478
      %2611 = vst.msk [vmem:[#allocation2 + $0x1e8] sm:$0xff] %vm2549, %v2480
      %2612 = vst.msk [vmem:[#allocation2 + $0x1f0] sm:$0xff] %vm2549, %v2482
      %2613 = vst.msk [vmem:[#allocation2 + $0x1f8] sm:$0xff] %vm2549, %v2484
      %v2614 = vld [vmem:[%s2228 + $0x1] sm:$0xff]
      %v2615 = vld [vmem:[%s2228 + $0x11] sm:$0xff]
      %v2616 = vld [vmem:[%s2228 + $0x21] sm:$0xff]
      %v2617 = vld [vmem:[%s2228 + $0x31] sm:$0xff]
      %v2618 = vld [vmem:[%s2228 + $0x41] sm:$0xff]
      %v2619 = vld [vmem:[%s2228 + $0x51] sm:$0xff]
      %v2620 = vld [vmem:[%s2228 + $0x61] sm:$0xff]
      %v2621 = vld [vmem:[%s2228 + $0x71] sm:$0xff]
      %v2622 = vld [vmem:[%s2228 + $0xa1] sm:$0xff]
      %v2623 = vld [vmem:[%s2228 + $0xb1] sm:$0xff]
      %v2624 = vld [vmem:[%s2228 + $0xc1] sm:$0xff]
      %v2625 = vld [vmem:[%s2228 + $0xd1] sm:$0xff]
      %v2626 = vld [vmem:[%s2228 + $0xe1] sm:$0xff]
      %v2627 = vld [vmem:[%s2228 + $0xf1] sm:$0xff]
      %v2628 = vld [vmem:[%s2228 + $0x101] sm:$0xff]
      %v2629 = vld [vmem:[%s2228 + $0x111] sm:$0xff]
      %v2630 = vld [vmem:[%s2228 + $0x141] sm:$0xff]
      %v2631 = vld [vmem:[%s2228 + $0x151] sm:$0xff]
      %v2632 = vld [vmem:[%s2228 + $0x161] sm:$0xff]
      %v2633 = vld [vmem:[%s2228 + $0x171] sm:$0xff]
      %v2634 = vld [vmem:[%s2228 + $0x181] sm:$0xff]
      %v2635 = vld [vmem:[%s2228 + $0x191] sm:$0xff]
      %v2636 = vld [vmem:[%s2228 + $0x1a1] sm:$0xff]
      %v2637 = vld [vmem:[%s2228 + $0x1b1] sm:$0xff]
      %v2638 = vld [vmem:[%s2228 + $0x1e1] sm:$0xff]
      %v2639 = vld [vmem:[%s2228 + $0x1f1] sm:$0xff]
      %v2640 = vld [vmem:[%s2228 + $0x201] sm:$0xff]
      %v2641 = vld [vmem:[%s2228 + $0x211] sm:$0xff]
      %v2642 = vld [vmem:[%s2228 + $0x221] sm:$0xff]
      %v2643 = vld [vmem:[%s2228 + $0x231] sm:$0xff]
      %v2644 = vld [vmem:[%s2228 + $0x241] sm:$0xff]
      %v2645 = vld [vmem:[%s2228 + $0x251] sm:$0xff]
      %v2646 = vld [vmem:[%s2228 + $0x281] sm:$0xff]
      %v2647 = vld [vmem:[%s2228 + $0x291] sm:$0xff]
      %v2648 = vld [vmem:[%s2228 + $0x2a1] sm:$0xff]
      %v2649 = vld [vmem:[%s2228 + $0x2b1] sm:$0xff]
      %v2650 = vld [vmem:[%s2228 + $0x2c1] sm:$0xff]
      %v2651 = vld [vmem:[%s2228 + $0x2d1] sm:$0xff]
      %v2652 = vld [vmem:[%s2228 + $0x2e1] sm:$0xff]
      %v2653 = vld [vmem:[%s2228 + $0x2f1] sm:$0xff]
      %v2654 = vld [vmem:[%s2228 + $0x321] sm:$0xff]
      %v2655 = vld [vmem:[%s2228 + $0x331] sm:$0xff]
      %v2656 = vld [vmem:[%s2228 + $0x341] sm:$0xff]
      %v2657 = vld [vmem:[%s2228 + $0x351] sm:$0xff]
      %v2658 = vld [vmem:[%s2228 + $0x361] sm:$0xff]
      %v2659 = vld [vmem:[%s2228 + $0x371] sm:$0xff]
      %v2660 = vld [vmem:[%s2228 + $0x381] sm:$0xff]
      %v2661 = vld [vmem:[%s2228 + $0x391] sm:$0xff]
      %v2662 = vld [vmem:[%s2228 + $0x3c1] sm:$0xff]
      %v2663 = vld [vmem:[%s2228 + $0x3d1] sm:$0xff]
      %v2664 = vld [vmem:[%s2228 + $0x3e1] sm:$0xff]
      %v2665 = vld [vmem:[%s2228 + $0x3f1] sm:$0xff]
      %v2666 = vld [vmem:[%s2228 + $0x401] sm:$0xff]
      %v2667 = vld [vmem:[%s2228 + $0x411] sm:$0xff]
      %v2668 = vld [vmem:[%s2228 + $0x421] sm:$0xff]
      %v2669 = vld [vmem:[%s2228 + $0x431] sm:$0xff]
      %v2670 = vld [vmem:[%s2228 + $0x461] sm:$0xff]
      %v2671 = vld [vmem:[%s2228 + $0x471] sm:$0xff]
      %v2672 = vld [vmem:[%s2228 + $0x481] sm:$0xff]
      %v2673 = vld [vmem:[%s2228 + $0x491] sm:$0xff]
      %v2674 = vld [vmem:[%s2228 + $0x4a1] sm:$0xff]
      %v2675 = vld [vmem:[%s2228 + $0x4b1] sm:$0xff]
      %v2676 = vld [vmem:[%s2228 + $0x4c1] sm:$0xff]
      %v2677 = vld [vmem:[%s2228 + $0x4d1] sm:$0xff]
      %2742 = vrot.lane.b32.xlu0 %v2614, 56
      %v2743 = vpop.permute.xlu0 %2742
      %2744 = vrot.lane.b32.xlu0 %v2615, 56
      %v2745 = vpop.permute.xlu0 %2744
      %2746 = vrot.lane.b32.xlu0 %v2616, 56
      %v2747 = vpop.permute.xlu0 %2746
      %2748 = vrot.lane.b32.xlu0 %v2617, 56
      %v2749 = vpop.permute.xlu0 %2748
      %2750 = vrot.lane.b32.xlu0 %v2618, 56
      %v2751 = vpop.permute.xlu0 %2750
      %2752 = vrot.lane.b32.xlu0 %v2619, 56
      %v2753 = vpop.permute.xlu0 %2752
      %2754 = vrot.lane.b32.xlu0 %v2620, 56
      %v2755 = vpop.permute.xlu0 %2754
      %2756 = vrot.lane.b32.xlu0 %v2621, 56
      %v2757 = vpop.permute.xlu0 %2756
      %2758 = vrot.lane.b32.xlu0 %v2622, 56
      %v2759 = vpop.permute.xlu0 %2758
      %2760 = vrot.lane.b32.xlu0 %v2623, 56
      %v2761 = vpop.permute.xlu0 %2760
      %2762 = vrot.lane.b32.xlu0 %v2624, 56
      %v2763 = vpop.permute.xlu0 %2762
      %2764 = vrot.lane.b32.xlu0 %v2625, 56
      %v2765 = vpop.permute.xlu0 %2764
      %2766 = vrot.lane.b32.xlu0 %v2626, 56
      %v2767 = vpop.permute.xlu0 %2766
      %2768 = vrot.lane.b32.xlu0 %v2627, 56
      %v2769 = vpop.permute.xlu0 %2768
      %2770 = vrot.lane.b32.xlu0 %v2628, 56
      %v2771 = vpop.permute.xlu0 %2770
      %2772 = vrot.lane.b32.xlu0 %v2629, 56
      %v2773 = vpop.permute.xlu0 %2772
      %2774 = vrot.lane.b32.xlu0 %v2630, 56
      %v2775 = vpop.permute.xlu0 %2774
      %2776 = vrot.lane.b32.xlu0 %v2631, 56
      %v2777 = vpop.permute.xlu0 %2776
      %2778 = vrot.lane.b32.xlu0 %v2632, 56
      %v2779 = vpop.permute.xlu0 %2778
      %2780 = vrot.lane.b32.xlu0 %v2633, 56
      %v2781 = vpop.permute.xlu0 %2780
      %2782 = vrot.lane.b32.xlu0 %v2634, 56
      %v2783 = vpop.permute.xlu0 %2782
      %2784 = vrot.lane.b32.xlu0 %v2635, 56
      %v2785 = vpop.permute.xlu0 %2784
      %2786 = vrot.lane.b32.xlu0 %v2636, 56
      %v2787 = vpop.permute.xlu0 %2786
      %2788 = vrot.lane.b32.xlu0 %v2637, 56
      %v2789 = vpop.permute.xlu0 %2788
      %2790 = vrot.lane.b32.xlu0 %v2638, 56
      %v2791 = vpop.permute.xlu0 %2790
      %2792 = vrot.lane.b32.xlu0 %v2639, 56
      %v2793 = vpop.permute.xlu0 %2792
      %2794 = vrot.lane.b32.xlu0 %v2640, 56
      %v2795 = vpop.permute.xlu0 %2794
      %2796 = vrot.lane.b32.xlu0 %v2641, 56
      %v2797 = vpop.permute.xlu0 %2796
      %2798 = vrot.lane.b32.xlu0 %v2642, 56
      %v2799 = vpop.permute.xlu0 %2798
      %2800 = vrot.lane.b32.xlu0 %v2643, 56
      %v2801 = vpop.permute.xlu0 %2800
      %2802 = vrot.lane.b32.xlu0 %v2644, 56
      %v2803 = vpop.permute.xlu0 %2802
      %2804 = vrot.lane.b32.xlu0 %v2645, 56
      %v2805 = vpop.permute.xlu0 %2804
      %2806 = vrot.lane.b32.xlu0 %v2646, 56
      %v2807 = vpop.permute.xlu0 %2806
      %2808 = vrot.lane.b32.xlu0 %v2647, 56
      %v2809 = vpop.permute.xlu0 %2808
      %2810 = vrot.lane.b32.xlu0 %v2648, 56
      %v2811 = vpop.permute.xlu0 %2810
      %2812 = vrot.lane.b32.xlu0 %v2649, 56
      %v2813 = vpop.permute.xlu0 %2812
      %2814 = vrot.lane.b32.xlu0 %v2650, 56
      %v2815 = vpop.permute.xlu0 %2814
      %2816 = vrot.lane.b32.xlu0 %v2651, 56
      %v2817 = vpop.permute.xlu0 %2816
      %2818 = vrot.lane.b32.xlu0 %v2652, 56
      %v2819 = vpop.permute.xlu0 %2818
      %2820 = vrot.lane.b32.xlu0 %v2653, 56
      %v2821 = vpop.permute.xlu0 %2820
      %2822 = vrot.lane.b32.xlu0 %v2654, 56
      %v2823 = vpop.permute.xlu0 %2822
      %2824 = vrot.lane.b32.xlu0 %v2655, 56
      %v2825 = vpop.permute.xlu0 %2824
      %2826 = vrot.lane.b32.xlu0 %v2656, 56
      %v2827 = vpop.permute.xlu0 %2826
      %2828 = vrot.lane.b32.xlu0 %v2657, 56
      %v2829 = vpop.permute.xlu0 %2828
      %2830 = vrot.lane.b32.xlu0 %v2658, 56
      %v2831 = vpop.permute.xlu0 %2830
      %2832 = vrot.lane.b32.xlu0 %v2659, 56
      %v2833 = vpop.permute.xlu0 %2832
      %2834 = vrot.lane.b32.xlu0 %v2660, 56
      %v2835 = vpop.permute.xlu0 %2834
      %2836 = vrot.lane.b32.xlu0 %v2661, 56
      %v2837 = vpop.permute.xlu0 %2836
      %2838 = vrot.lane.b32.xlu0 %v2662, 56
      %v2839 = vpop.permute.xlu0 %2838
      %2840 = vrot.lane.b32.xlu0 %v2663, 56
      %v2841 = vpop.permute.xlu0 %2840
      %2842 = vrot.lane.b32.xlu0 %v2664, 56
      %v2843 = vpop.permute.xlu0 %2842
      %2844 = vrot.lane.b32.xlu0 %v2665, 56
      %v2845 = vpop.permute.xlu0 %2844
      %2846 = vrot.lane.b32.xlu0 %v2666, 56
      %v2847 = vpop.permute.xlu0 %2846
      %2848 = vrot.lane.b32.xlu0 %v2667, 56
      %v2849 = vpop.permute.xlu0 %2848
      %2850 = vrot.lane.b32.xlu0 %v2668, 56
      %v2851 = vpop.permute.xlu0 %2850
      %2852 = vrot.lane.b32.xlu0 %v2669, 56
      %v2853 = vpop.permute.xlu0 %2852
      %2854 = vrot.lane.b32.xlu0 %v2670, 56
      %v2855 = vpop.permute.xlu0 %2854
      %2856 = vrot.lane.b32.xlu0 %v2671, 56
      %v2857 = vpop.permute.xlu0 %2856
      %2858 = vrot.lane.b32.xlu0 %v2672, 56
      %v2859 = vpop.permute.xlu0 %2858
      %2860 = vrot.lane.b32.xlu0 %v2673, 56
      %v2861 = vpop.permute.xlu0 %2860
      %2862 = vrot.lane.b32.xlu0 %v2674, 56
      %v2863 = vpop.permute.xlu0 %2862
      %2864 = vrot.lane.b32.xlu0 %v2675, 56
      %v2865 = vpop.permute.xlu0 %2864
      %2866 = vrot.lane.b32.xlu0 %v2676, 56
      %v2867 = vpop.permute.xlu0 %2866
      %2868 = vrot.lane.b32.xlu0 %v2677, 56
      %v2869 = vpop.permute.xlu0 %2868
      %vm2934 = vcmask 523712
      %2935 = vst.msk [vmem:[#allocation2] sm:$0xff] %vm2934, %v2743
      %2936 = vst.msk [vmem:[#allocation2 + $0x8] sm:$0xff] %vm2934, %v2745
      %2937 = vst.msk [vmem:[#allocation2 + $0x10] sm:$0xff] %vm2934, %v2747
      %2938 = vst.msk [vmem:[#allocation2 + $0x18] sm:$0xff] %vm2934, %v2749
      %2939 = vst.msk [vmem:[#allocation2 + $0x20] sm:$0xff] %vm2934, %v2751
      %2940 = vst.msk [vmem:[#allocation2 + $0x28] sm:$0xff] %vm2934, %v2753
      %2941 = vst.msk [vmem:[#allocation2 + $0x30] sm:$0xff] %vm2934, %v2755
      %2942 = vst.msk [vmem:[#allocation2 + $0x38] sm:$0xff] %vm2934, %v2757
      %2943 = vst.msk [vmem:[#allocation2 + $0x40] sm:$0xff] %vm2934, %v2759
      %2944 = vst.msk [vmem:[#allocation2 + $0x48] sm:$0xff] %vm2934, %v2761
      %2945 = vst.msk [vmem:[#allocation2 + $0x50] sm:$0xff] %vm2934, %v2763
      %2946 = vst.msk [vmem:[#allocation2 + $0x58] sm:$0xff] %vm2934, %v2765
      %2947 = vst.msk [vmem:[#allocation2 + $0x60] sm:$0xff] %vm2934, %v2767
      %2948 = vst.msk [vmem:[#allocation2 + $0x68] sm:$0xff] %vm2934, %v2769
      %2949 = vst.msk [vmem:[#allocation2 + $0x70] sm:$0xff] %vm2934, %v2771
      %2950 = vst.msk [vmem:[#allocation2 + $0x78] sm:$0xff] %vm2934, %v2773
      %2951 = vst.msk [vmem:[#allocation2 + $0x80] sm:$0xff] %vm2934, %v2775
      %2952 = vst.msk [vmem:[#allocation2 + $0x88] sm:$0xff] %vm2934, %v2777
      %2953 = vst.msk [vmem:[#allocation2 + $0x90] sm:$0xff] %vm2934, %v2779
      %2954 = vst.msk [vmem:[#allocation2 + $0x98] sm:$0xff] %vm2934, %v2781
      %2955 = vst.msk [vmem:[#allocation2 + $0xa0] sm:$0xff] %vm2934, %v2783
      %2956 = vst.msk [vmem:[#allocation2 + $0xa8] sm:$0xff] %vm2934, %v2785
      %2957 = vst.msk [vmem:[#allocation2 + $0xb0] sm:$0xff] %vm2934, %v2787
      %2958 = vst.msk [vmem:[#allocation2 + $0xb8] sm:$0xff] %vm2934, %v2789
      %2959 = vst.msk [vmem:[#allocation2 + $0xc0] sm:$0xff] %vm2934, %v2791
      %2960 = vst.msk [vmem:[#allocation2 + $0xc8] sm:$0xff] %vm2934, %v2793
      %2961 = vst.msk [vmem:[#allocation2 + $0xd0] sm:$0xff] %vm2934, %v2795
      %2962 = vst.msk [vmem:[#allocation2 + $0xd8] sm:$0xff] %vm2934, %v2797
      %2963 = vst.msk [vmem:[#allocation2 + $0xe0] sm:$0xff] %vm2934, %v2799
      %2964 = vst.msk [vmem:[#allocation2 + $0xe8] sm:$0xff] %vm2934, %v2801
      %2965 = vst.msk [vmem:[#allocation2 + $0xf0] sm:$0xff] %vm2934, %v2803
      %2966 = vst.msk [vmem:[#allocation2 + $0xf8] sm:$0xff] %vm2934, %v2805
      %2967 = vst.msk [vmem:[#allocation2 + $0x100] sm:$0xff] %vm2934, %v2807
      %2968 = vst.msk [vmem:[#allocation2 + $0x108] sm:$0xff] %vm2934, %v2809
      %2969 = vst.msk [vmem:[#allocation2 + $0x110] sm:$0xff] %vm2934, %v2811
      %2970 = vst.msk [vmem:[#allocation2 + $0x118] sm:$0xff] %vm2934, %v2813
      %2971 = vst.msk [vmem:[#allocation2 + $0x120] sm:$0xff] %vm2934, %v2815
      %2972 = vst.msk [vmem:[#allocation2 + $0x128] sm:$0xff] %vm2934, %v2817
      %2973 = vst.msk [vmem:[#allocation2 + $0x130] sm:$0xff] %vm2934, %v2819
      %2974 = vst.msk [vmem:[#allocation2 + $0x138] sm:$0xff] %vm2934, %v2821
      %2975 = vst.msk [vmem:[#allocation2 + $0x140] sm:$0xff] %vm2934, %v2823
      %2976 = vst.msk [vmem:[#allocation2 + $0x148] sm:$0xff] %vm2934, %v2825
      %2977 = vst.msk [vmem:[#allocation2 + $0x150] sm:$0xff] %vm2934, %v2827
      %2978 = vst.msk [vmem:[#allocation2 + $0x158] sm:$0xff] %vm2934, %v2829
      %2979 = vst.msk [vmem:[#allocation2 + $0x160] sm:$0xff] %vm2934, %v2831
      %2980 = vst.msk [vmem:[#allocation2 + $0x168] sm:$0xff] %vm2934, %v2833
      %2981 = vst.msk [vmem:[#allocation2 + $0x170] sm:$0xff] %vm2934, %v2835
      %2982 = vst.msk [vmem:[#allocation2 + $0x178] sm:$0xff] %vm2934, %v2837
      %2983 = vst.msk [vmem:[#allocation2 + $0x180] sm:$0xff] %vm2934, %v2839
      %2984 = vst.msk [vmem:[#allocation2 + $0x188] sm:$0xff] %vm2934, %v2841
      %2985 = vst.msk [vmem:[#allocation2 + $0x190] sm:$0xff] %vm2934, %v2843
      %2986 = vst.msk [vmem:[#allocation2 + $0x198] sm:$0xff] %vm2934, %v2845
      %2987 = vst.msk [vmem:[#allocation2 + $0x1a0] sm:$0xff] %vm2934, %v2847
      %2988 = vst.msk [vmem:[#allocation2 + $0x1a8] sm:$0xff] %vm2934, %v2849
      %2989 = vst.msk [vmem:[#allocation2 + $0x1b0] sm:$0xff] %vm2934, %v2851
      %2990 = vst.msk [vmem:[#allocation2 + $0x1b8] sm:$0xff] %vm2934, %v2853
      %2991 = vst.msk [vmem:[#allocation2 + $0x1c0] sm:$0xff] %vm2934, %v2855
      %2992 = vst.msk [vmem:[#allocation2 + $0x1c8] sm:$0xff] %vm2934, %v2857
      %2993 = vst.msk [vmem:[#allocation2 + $0x1d0] sm:$0xff] %vm2934, %v2859
      %2994 = vst.msk [vmem:[#allocation2 + $0x1d8] sm:$0xff] %vm2934, %v2861
      %2995 = vst.msk [vmem:[#allocation2 + $0x1e0] sm:$0xff] %vm2934, %v2863
      %2996 = vst.msk [vmem:[#allocation2 + $0x1e8] sm:$0xff] %vm2934, %v2865
      %2997 = vst.msk [vmem:[#allocation2 + $0x1f0] sm:$0xff] %vm2934, %v2867
      %2998 = vst.msk [vmem:[#allocation2 + $0x1f8] sm:$0xff] %vm2934, %v2869
      %v2999 = vld [vmem:[#allocation2] sm:$0xff]
      %v3000 = vld [vmem:[#allocation2 + $0x8] sm:$0xff]
      %v3001 = vld [vmem:[#allocation2 + $0x10] sm:$0xff]
      %v3002 = vld [vmem:[#allocation2 + $0x18] sm:$0xff]
      %v3003 = vld [vmem:[#allocation2 + $0x20] sm:$0xff]
      %v3004 = vld [vmem:[#allocation2 + $0x28] sm:$0xff]
      %v3005 = vld [vmem:[#allocation2 + $0x30] sm:$0xff]
      %v3006 = vld [vmem:[#allocation2 + $0x38] sm:$0xff]
      %v3007 = vld [vmem:[#allocation2 + $0x40] sm:$0xff]
      %v3008 = vld [vmem:[#allocation2 + $0x48] sm:$0xff]
      %v3009 = vld [vmem:[#allocation2 + $0x50] sm:$0xff]
      %v3010 = vld [vmem:[#allocation2 + $0x58] sm:$0xff]
      %v3011 = vld [vmem:[#allocation2 + $0x60] sm:$0xff]
      %v3012 = vld [vmem:[#allocation2 + $0x68] sm:$0xff]
      %v3013 = vld [vmem:[#allocation2 + $0x70] sm:$0xff]
      %v3014 = vld [vmem:[#allocation2 + $0x78] sm:$0xff]
      %v3015 = vld [vmem:[#allocation2 + $0x80] sm:$0xff]
      %v3016 = vld [vmem:[#allocation2 + $0x88] sm:$0xff]
      %v3017 = vld [vmem:[#allocation2 + $0x90] sm:$0xff]
      %v3018 = vld [vmem:[#allocation2 + $0x98] sm:$0xff]
      %v3019 = vld [vmem:[#allocation2 + $0xa0] sm:$0xff]
      %v3020 = vld [vmem:[#allocation2 + $0xa8] sm:$0xff]
      %v3021 = vld [vmem:[#allocation2 + $0xb0] sm:$0xff]
      %v3022 = vld [vmem:[#allocation2 + $0xb8] sm:$0xff]
      %v3023 = vld [vmem:[#allocation2 + $0xc0] sm:$0xff]
      %v3024 = vld [vmem:[#allocation2 + $0xc8] sm:$0xff]
      %v3025 = vld [vmem:[#allocation2 + $0xd0] sm:$0xff]
      %v3026 = vld [vmem:[#allocation2 + $0xd8] sm:$0xff]
      %v3027 = vld [vmem:[#allocation2 + $0xe0] sm:$0xff]
      %v3028 = vld [vmem:[#allocation2 + $0xe8] sm:$0xff]
      %v3029 = vld [vmem:[#allocation2 + $0xf0] sm:$0xff]
      %v3030 = vld [vmem:[#allocation2 + $0xf8] sm:$0xff]
      %v3031 = vld [vmem:[#allocation2 + $0x100] sm:$0xff]
      %v3032 = vld [vmem:[#allocation2 + $0x108] sm:$0xff]
      %v3033 = vld [vmem:[#allocation2 + $0x110] sm:$0xff]
      %v3034 = vld [vmem:[#allocation2 + $0x118] sm:$0xff]
      %v3035 = vld [vmem:[#allocation2 + $0x120] sm:$0xff]
      %v3036 = vld [vmem:[#allocation2 + $0x128] sm:$0xff]
      %v3037 = vld [vmem:[#allocation2 + $0x130] sm:$0xff]
      %v3038 = vld [vmem:[#allocation2 + $0x138] sm:$0xff]
      %v3039 = vld [vmem:[#allocation2 + $0x140] sm:$0xff]
      %v3040 = vld [vmem:[#allocation2 + $0x148] sm:$0xff]
      %v3041 = vld [vmem:[#allocation2 + $0x150] sm:$0xff]
      %v3042 = vld [vmem:[#allocation2 + $0x158] sm:$0xff]
      %v3043 = vld [vmem:[#allocation2 + $0x160] sm:$0xff]
      %v3044 = vld [vmem:[#allocation2 + $0x168] sm:$0xff]
      %v3045 = vld [vmem:[#allocation2 + $0x170] sm:$0xff]
      %v3046 = vld [vmem:[#allocation2 + $0x178] sm:$0xff]
      %v3047 = vld [vmem:[#allocation2 + $0x180] sm:$0xff]
      %v3048 = vld [vmem:[#allocation2 + $0x188] sm:$0xff]
      %v3049 = vld [vmem:[#allocation2 + $0x190] sm:$0xff]
      %v3050 = vld [vmem:[#allocation2 + $0x198] sm:$0xff]
      %v3051 = vld [vmem:[#allocation2 + $0x1a0] sm:$0xff]
      %v3052 = vld [vmem:[#allocation2 + $0x1a8] sm:$0xff]
      %v3053 = vld [vmem:[#allocation2 + $0x1b0] sm:$0xff]
      %v3054 = vld [vmem:[#allocation2 + $0x1b8] sm:$0xff]
      %v3055 = vld [vmem:[#allocation2 + $0x1c0] sm:$0xff]
      %v3056 = vld [vmem:[#allocation2 + $0x1c8] sm:$0xff]
      %v3057 = vld [vmem:[#allocation2 + $0x1d0] sm:$0xff]
      %v3058 = vld [vmem:[#allocation2 + $0x1d8] sm:$0xff]
      %v3059 = vld [vmem:[#allocation2 + $0x1e0] sm:$0xff]
      %v3060 = vld [vmem:[#allocation2 + $0x1e8] sm:$0xff]
      %v3061 = vld [vmem:[#allocation2 + $0x1f0] sm:$0xff]
      %v3062 = vld [vmem:[#allocation2 + $0x1f8] sm:$0xff]
      %v3063 = vpack.c.bf16 %v3000, %v2999
      %v3064 = vpack.c.bf16 %v3002, %v3001
      %v3065 = vpack.c.bf16 %v3004, %v3003
      %v3066 = vpack.c.bf16 %v3006, %v3005
      %v3067 = vpack.c.bf16 %v3008, %v3007
      %v3068 = vpack.c.bf16 %v3010, %v3009
      %v3069 = vpack.c.bf16 %v3012, %v3011
      %v3070 = vpack.c.bf16 %v3014, %v3013
      %v3071 = vpack.c.bf16 %v3016, %v3015
      %v3072 = vpack.c.bf16 %v3018, %v3017
      %v3073 = vpack.c.bf16 %v3020, %v3019
      %v3074 = vpack.c.bf16 %v3022, %v3021
      %v3075 = vpack.c.bf16 %v3024, %v3023
      %v3076 = vpack.c.bf16 %v3026, %v3025
      %v3077 = vpack.c.bf16 %v3028, %v3027
      %v3078 = vpack.c.bf16 %v3030, %v3029
      %v3079 = vpack.c.bf16 %v3032, %v3031
      %v3080 = vpack.c.bf16 %v3034, %v3033
      %v3081 = vpack.c.bf16 %v3036, %v3035
      %v3082 = vpack.c.bf16 %v3038, %v3037
      %v3083 = vpack.c.bf16 %v3040, %v3039
      %v3084 = vpack.c.bf16 %v3042, %v3041
      %v3085 = vpack.c.bf16 %v3044, %v3043
      %v3086 = vpack.c.bf16 %v3046, %v3045
      %v3087 = vpack.c.bf16 %v3048, %v3047
      %v3088 = vpack.c.bf16 %v3050, %v3049
      %v3089 = vpack.c.bf16 %v3052, %v3051
      %v3090 = vpack.c.bf16 %v3054, %v3053
      %v3091 = vpack.c.bf16 %v3056, %v3055
      %v3092 = vpack.c.bf16 %v3058, %v3057
      %v3093 = vpack.c.bf16 %v3060, %v3059
      %v3094 = vpack.c.bf16 %v3062, %v3061
      %v3095 = vld [vmem:[%s1] sm:$0xf]
      %v3096 = vld [vmem:[%s1 + $0x4] sm:$0xf]
      %v3097 = vld [vmem:[%s1 + $0x8] sm:$0xf]
      %v3098 = vld [vmem:[%s1 + $0xc] sm:$0xf]
      %v3099 = vld [vmem:[%s1 + $0x10] sm:$0xf]
      %v3100 = vld [vmem:[%s1 + $0x14] sm:$0xf]
      %v3101 = vld [vmem:[%s1 + $0x18] sm:$0xf]
      %v3102 = vld [vmem:[%s1 + $0x1c] sm:$0xf]
      %v3103 = vld [vmem:[%s2] sm:$0x1]
      %v3105 = vperm.slane %v3103, 0
      %v3115 = vunpack.c.l.b16 %v3095
      %v3116 = vunpack.c.l.b16 %v3096
      %v3117 = vunpack.c.l.b16 %v3097
      %v3118 = vunpack.c.l.b16 %v3098
      %v3119 = vunpack.c.l.b16 %v3099
      %v3120 = vunpack.c.l.b16 %v3100
      %v3121 = vunpack.c.l.b16 %v3101
      %v3122 = vunpack.c.l.b16 %v3102
      %v3123 = vpack.c.b16 %v3116, %v3115
      %v3124 = vpack.c.b16 %v3118, %v3117
      %v3125 = vpack.c.b16 %v3120, %v3119
      %v3126 = vpack.c.b16 %v3122, %v3121
      %vm3131 = vcmask 523264
      %v3133 = vsel %vm3131, %v3063, 0
      %v3136 = vsel %vm3131, %v3064, 0
      %v3139 = vsel %vm3131, %v3065, 0
      %v3142 = vsel %vm3131, %v3066, 0
      %v3145 = vsel %vm3131, %v3067, 0
      %v3148 = vsel %vm3131, %v3068, 0
      %v3151 = vsel %vm3131, %v3069, 0
      %v3154 = vsel %vm3131, %v3070, 0
      %v3157 = vsel %vm3131, %v3071, 0
      %v3160 = vsel %vm3131, %v3072, 0
      %v3163 = vsel %vm3131, %v3073, 0
      %v3166 = vsel %vm3131, %v3074, 0
      %v3169 = vsel %vm3131, %v3075, 0
      %v3172 = vsel %vm3131, %v3076, 0
      %v3175 = vsel %vm3131, %v3077, 0
      %v3178 = vsel %vm3131, %v3078, 0
      %v3181 = vsel %vm3131, %v3079, 0
      %v3184 = vsel %vm3131, %v3080, 0
      %v3187 = vsel %vm3131, %v3081, 0
      %v3190 = vsel %vm3131, %v3082, 0
      %v3193 = vsel %vm3131, %v3083, 0
      %v3196 = vsel %vm3131, %v3084, 0
      %v3199 = vsel %vm3131, %v3085, 0
      %v3202 = vsel %vm3131, %v3086, 0
      %v3205 = vsel %vm3131, %v3087, 0
      %v3208 = vsel %vm3131, %v3088, 0
      %v3211 = vsel %vm3131, %v3089, 0
      %v3214 = vsel %vm3131, %v3090, 0
      %v3217 = vsel %vm3131, %v3091, 0
      %v3220 = vsel %vm3131, %v3092, 0
      %v3223 = vsel %vm3131, %v3093, 0
      %v3226 = vsel %vm3131, %v3094, 0
      %3228 = vmatpush.bf16.msra.mxu0 0
      %3229 = vmatpush.bf16.msra.mxu0 0
      %3230 = vmatpush.bf16.msra.mxu0 0
      %3231 = vmatpush.bf16.msra.mxu0 0
      %3232 = vmatpush.bf16.msra.mxu0 %v3126
      %3233 = vmatpush.bf16.msra.mxu0 %v3125
      %3234 = vmatpush.bf16.msra.mxu0 %v3124
      %3235 = vmatpush.bf16.msra.mxu0 %v3123
      %3236 = vmatmul.bf16.gmra.mxu0 %v3133
      %v3237 = vpop.f32.mrf.mxu0
      %v3238 = vadd.f32 %v3105, %v3237
      %v3239 = vpop.f32.mrf.mxu0
      %v3240 = vadd.f32 %v3105, %v3239
      %3241 = vmatmul.bf16.gmra.mxu0 %v3136
      %v3242 = vpop.f32.mrf.mxu0
      %v3243 = vadd.f32 %v3105, %v3242
      %v3244 = vpop.f32.mrf.mxu0
      %v3245 = vadd.f32 %v3105, %v3244
      %3246 = vmatmul.bf16.gmra.mxu0 %v3139
      %v3247 = vpop.f32.mrf.mxu0
      %v3248 = vadd.f32 %v3105, %v3247
      %v3249 = vpop.f32.mrf.mxu0
      %v3250 = vadd.f32 %v3105, %v3249
      %3251 = vmatmul.bf16.gmra.mxu0 %v3142
      %v3252 = vpop.f32.mrf.mxu0
      %v3253 = vadd.f32 %v3105, %v3252
      %v3254 = vpop.f32.mrf.mxu0
      %v3255 = vadd.f32 %v3105, %v3254
      %3256 = vmatmul.bf16.gmra.mxu0 %v3145
      %v3257 = vpop.f32.mrf.mxu0
      %v3258 = vadd.f32 %v3105, %v3257
      %v3259 = vpop.f32.mrf.mxu0
      %v3260 = vadd.f32 %v3105, %v3259
      %3261 = vmatmul.bf16.gmra.mxu0 %v3148
      %v3262 = vpop.f32.mrf.mxu0
      %v3263 = vadd.f32 %v3105, %v3262
      %v3264 = vpop.f32.mrf.mxu0
      %v3265 = vadd.f32 %v3105, %v3264
      %3266 = vmatmul.bf16.gmra.mxu0 %v3151
      %v3267 = vpop.f32.mrf.mxu0
      %v3268 = vadd.f32 %v3105, %v3267
      %v3269 = vpop.f32.mrf.mxu0
      %v3270 = vadd.f32 %v3105, %v3269
      %3271 = vmatmul.bf16.gmra.mxu0 %v3154
      %v3272 = vpop.f32.mrf.mxu0
      %v3273 = vadd.f32 %v3105, %v3272
      %v3274 = vpop.f32.mrf.mxu0
      %v3275 = vadd.f32 %v3105, %v3274
      %3276 = vmatmul.bf16.gmra.mxu0 %v3157
      %v3277 = vpop.f32.mrf.mxu0
      %v3278 = vadd.f32 %v3105, %v3277
      %v3279 = vpop.f32.mrf.mxu0
      %v3280 = vadd.f32 %v3105, %v3279
      %3281 = vmatmul.bf16.gmra.mxu0 %v3160
      %v3282 = vpop.f32.mrf.mxu0
      %v3283 = vadd.f32 %v3105, %v3282
      %v3284 = vpop.f32.mrf.mxu0
      %v3285 = vadd.f32 %v3105, %v3284
      %3286 = vmatmul.bf16.gmra.mxu0 %v3163
      %v3287 = vpop.f32.mrf.mxu0
      %v3288 = vadd.f32 %v3105, %v3287
      %v3289 = vpop.f32.mrf.mxu0
      %v3290 = vadd.f32 %v3105, %v3289
      %3291 = vmatmul.bf16.gmra.mxu0 %v3166
      %v3292 = vpop.f32.mrf.mxu0
      %v3293 = vadd.f32 %v3105, %v3292
      %v3294 = vpop.f32.mrf.mxu0
      %v3295 = vadd.f32 %v3105, %v3294
      %3296 = vmatmul.bf16.gmra.mxu0 %v3169
      %v3297 = vpop.f32.mrf.mxu0
      %v3298 = vadd.f32 %v3105, %v3297
      %v3299 = vpop.f32.mrf.mxu0
      %v3300 = vadd.f32 %v3105, %v3299
      %3301 = vmatmul.bf16.gmra.mxu0 %v3172
      %v3302 = vpop.f32.mrf.mxu0
      %v3303 = vadd.f32 %v3105, %v3302
      %v3304 = vpop.f32.mrf.mxu0
      %v3305 = vadd.f32 %v3105, %v3304
      %3306 = vmatmul.bf16.gmra.mxu0 %v3175
      %v3307 = vpop.f32.mrf.mxu0
      %v3308 = vadd.f32 %v3105, %v3307
      %v3309 = vpop.f32.mrf.mxu0
      %v3310 = vadd.f32 %v3105, %v3309
      %3311 = vmatmul.bf16.gmra.mxu0 %v3178
      %v3312 = vpop.f32.mrf.mxu0
      %v3313 = vadd.f32 %v3105, %v3312
      %v3314 = vpop.f32.mrf.mxu0
      %v3315 = vadd.f32 %v3105, %v3314
      %3316 = vmatmul.bf16.gmra.mxu0 %v3181
      %v3317 = vpop.f32.mrf.mxu0
      %v3318 = vadd.f32 %v3105, %v3317
      %v3319 = vpop.f32.mrf.mxu0
      %v3320 = vadd.f32 %v3105, %v3319
      %3321 = vmatmul.bf16.gmra.mxu0 %v3184
      %v3322 = vpop.f32.mrf.mxu0
      %v3323 = vadd.f32 %v3105, %v3322
      %v3324 = vpop.f32.mrf.mxu0
      %v3325 = vadd.f32 %v3105, %v3324
      %3326 = vmatmul.bf16.gmra.mxu0 %v3187
      %v3327 = vpop.f32.mrf.mxu0
      %v3328 = vadd.f32 %v3105, %v3327
      %v3329 = vpop.f32.mrf.mxu0
      %v3330 = vadd.f32 %v3105, %v3329
      %3331 = vmatmul.bf16.gmra.mxu0 %v3190
      %v3332 = vpop.f32.mrf.mxu0
      %v3333 = vadd.f32 %v3105, %v3332
      %v3334 = vpop.f32.mrf.mxu0
      %v3335 = vadd.f32 %v3105, %v3334
      %3336 = vmatmul.bf16.gmra.mxu0 %v3193
      %v3337 = vpop.f32.mrf.mxu0
      %v3338 = vadd.f32 %v3105, %v3337
      %v3339 = vpop.f32.mrf.mxu0
      %v3340 = vadd.f32 %v3105, %v3339
      %3341 = vmatmul.bf16.gmra.mxu0 %v3196
      %v3342 = vpop.f32.mrf.mxu0
      %v3343 = vadd.f32 %v3105, %v3342
      %v3344 = vpop.f32.mrf.mxu0
      %v3345 = vadd.f32 %v3105, %v3344
      %3346 = vmatmul.bf16.gmra.mxu0 %v3199
      %v3347 = vpop.f32.mrf.mxu0
      %v3348 = vadd.f32 %v3105, %v3347
      %v3349 = vpop.f32.mrf.mxu0
      %v3350 = vadd.f32 %v3105, %v3349
      %3351 = vmatmul.bf16.gmra.mxu0 %v3202
      %v3352 = vpop.f32.mrf.mxu0
      %v3353 = vadd.f32 %v3105, %v3352
      %v3354 = vpop.f32.mrf.mxu0
      %v3355 = vadd.f32 %v3105, %v3354
      %3356 = vmatmul.bf16.gmra.mxu0 %v3205
      %v3357 = vpop.f32.mrf.mxu0
      %v3358 = vadd.f32 %v3105, %v3357
      %v3359 = vpop.f32.mrf.mxu0
      %v3360 = vadd.f32 %v3105, %v3359
      %3361 = vmatmul.bf16.gmra.mxu0 %v3208
      %v3362 = vpop.f32.mrf.mxu0
      %v3363 = vadd.f32 %v3105, %v3362
      %v3364 = vpop.f32.mrf.mxu0
      %v3365 = vadd.f32 %v3105, %v3364
      %3366 = vmatmul.bf16.gmra.mxu0 %v3211
      %v3367 = vpop.f32.mrf.mxu0
      %v3368 = vadd.f32 %v3105, %v3367
      %v3369 = vpop.f32.mrf.mxu0
      %v3370 = vadd.f32 %v3105, %v3369
      %3371 = vmatmul.bf16.gmra.mxu0 %v3214
      %v3372 = vpop.f32.mrf.mxu0
      %v3373 = vadd.f32 %v3105, %v3372
      %v3374 = vpop.f32.mrf.mxu0
      %v3375 = vadd.f32 %v3105, %v3374
      %3376 = vmatmul.bf16.gmra.mxu0 %v3217
      %v3377 = vpop.f32.mrf.mxu0
      %v3378 = vadd.f32 %v3105, %v3377
      %v3379 = vpop.f32.mrf.mxu0
      %v3380 = vadd.f32 %v3105, %v3379
      %3381 = vmatmul.bf16.gmra.mxu0 %v3220
      %v3382 = vpop.f32.mrf.mxu0
      %v3383 = vadd.f32 %v3105, %v3382
      %v3384 = vpop.f32.mrf.mxu0
      %v3385 = vadd.f32 %v3105, %v3384
      %3386 = vmatmul.bf16.gmra.mxu0 %v3223
      %v3387 = vpop.f32.mrf.mxu0
      %v3388 = vadd.f32 %v3105, %v3387
      %v3389 = vpop.f32.mrf.mxu0
      %v3390 = vadd.f32 %v3105, %v3389
      %3391 = vmatmul.bf16.gmra.mxu0 %v3226
      %v3392 = vpop.f32.mrf.mxu0
      %v3393 = vadd.f32 %v3105, %v3392
      %v3394 = vpop.f32.mrf.mxu0
      %v3395 = vadd.f32 %v3105, %v3394
      %3396 = vdwg.mxu0
      %vm3397 = vcmp.ge.f32.partialorder %v3238, 0.0
      %vm3398 = vcmp.ge.f32.partialorder %v3240, 0.0
      %vm3399 = vcmp.ge.f32.partialorder %v3243, 0.0
      %vm3400 = vcmp.ge.f32.partialorder %v3245, 0.0
      %vm3401 = vcmp.ge.f32.partialorder %v3248, 0.0
      %vm3402 = vcmp.ge.f32.partialorder %v3250, 0.0
      %vm3403 = vcmp.ge.f32.partialorder %v3253, 0.0
      %vm3404 = vcmp.ge.f32.partialorder %v3255, 0.0
      %vm3405 = vcmp.ge.f32.partialorder %v3258, 0.0
      %vm3406 = vcmp.ge.f32.partialorder %v3260, 0.0
      %vm3407 = vcmp.ge.f32.partialorder %v3263, 0.0
      %vm3408 = vcmp.ge.f32.partialorder %v3265, 0.0
      %vm3409 = vcmp.ge.f32.partialorder %v3268, 0.0
      %vm3410 = vcmp.ge.f32.partialorder %v3270, 0.0
      %vm3411 = vcmp.ge.f32.partialorder %v3273, 0.0
      %vm3412 = vcmp.ge.f32.partialorder %v3275, 0.0
      %vm3413 = vcmp.ge.f32.partialorder %v3278, 0.0
      %vm3414 = vcmp.ge.f32.partialorder %v3280, 0.0
      %vm3415 = vcmp.ge.f32.partialorder %v3283, 0.0
      %vm3416 = vcmp.ge.f32.partialorder %v3285, 0.0
      %vm3417 = vcmp.ge.f32.partialorder %v3288, 0.0
      %vm3418 = vcmp.ge.f32.partialorder %v3290, 0.0
      %vm3419 = vcmp.ge.f32.partialorder %v3293, 0.0
      %vm3420 = vcmp.ge.f32.partialorder %v3295, 0.0
      %vm3421 = vcmp.ge.f32.partialorder %v3298, 0.0
      %vm3422 = vcmp.ge.f32.partialorder %v3300, 0.0
      %vm3423 = vcmp.ge.f32.partialorder %v3303, 0.0
      %vm3424 = vcmp.ge.f32.partialorder %v3305, 0.0
      %vm3425 = vcmp.ge.f32.partialorder %v3308, 0.0
      %vm3426 = vcmp.ge.f32.partialorder %v3310, 0.0
      %vm3427 = vcmp.ge.f32.partialorder %v3313, 0.0
      %vm3428 = vcmp.ge.f32.partialorder %v3315, 0.0
      %vm3429 = vcmp.ge.f32.partialorder %v3318, 0.0
      %vm3430 = vcmp.ge.f32.partialorder %v3320, 0.0
      %vm3431 = vcmp.ge.f32.partialorder %v3323, 0.0
      %vm3432 = vcmp.ge.f32.partialorder %v3325, 0.0
      %vm3433 = vcmp.ge.f32.partialorder %v3328, 0.0
      %vm3434 = vcmp.ge.f32.partialorder %v3330, 0.0
      %vm3435 = vcmp.ge.f32.partialorder %v3333, 0.0
      %vm3436 = vcmp.ge.f32.partialorder %v3335, 0.0
      %vm3437 = vcmp.ge.f32.partialorder %v3338, 0.0
      %vm3438 = vcmp.ge.f32.partialorder %v3340, 0.0
      %vm3439 = vcmp.ge.f32.partialorder %v3343, 0.0
      %vm3440 = vcmp.ge.f32.partialorder %v3345, 0.0
      %vm3441 = vcmp.ge.f32.partialorder %v3348, 0.0
      %vm3442 = vcmp.ge.f32.partialorder %v3350, 0.0
      %vm3443 = vcmp.ge.f32.partialorder %v3353, 0.0
      %vm3444 = vcmp.ge.f32.partialorder %v3355, 0.0
      %vm3445 = vcmp.ge.f32.partialorder %v3358, 0.0
      %vm3446 = vcmp.ge.f32.partialorder %v3360, 0.0
      %vm3447 = vcmp.ge.f32.partialorder %v3363, 0.0
      %vm3448 = vcmp.ge.f32.partialorder %v3365, 0.0
      %vm3449 = vcmp.ge.f32.partialorder %v3368, 0.0
      %vm3450 = vcmp.ge.f32.partialorder %v3370, 0.0
      %vm3451 = vcmp.ge.f32.partialorder %v3373, 0.0
      %vm3452 = vcmp.ge.f32.partialorder %v3375, 0.0
      %vm3453 = vcmp.ge.f32.partialorder %v3378, 0.0
      %vm3454 = vcmp.ge.f32.partialorder %v3380, 0.0
      %vm3455 = vcmp.ge.f32.partialorder %v3383, 0.0
      %vm3456 = vcmp.ge.f32.partialorder %v3385, 0.0
      %vm3457 = vcmp.ge.f32.partialorder %v3388, 0.0
      %vm3458 = vcmp.ge.f32.partialorder %v3390, 0.0
      %vm3459 = vcmp.ge.f32.partialorder %v3393, 0.0
      %vm3460 = vcmp.ge.f32.partialorder %v3395, 0.0
      %v3461 = vmul.f32 %v3238, 0.2
      %v3462 = vmul.f32 %v3240, 0.2
      %v3463 = vmul.f32 %v3243, 0.2
      %v3464 = vmul.f32 %v3245, 0.2
      %v3465 = vmul.f32 %v3248, 0.2
      %v3466 = vmul.f32 %v3250, 0.2
      %v3467 = vmul.f32 %v3253, 0.2
      %v3468 = vmul.f32 %v3255, 0.2
      %v3469 = vmul.f32 %v3258, 0.2
      %v3470 = vmul.f32 %v3260, 0.2
      %v3471 = vmul.f32 %v3263, 0.2
      %v3472 = vmul.f32 %v3265, 0.2
      %v3473 = vmul.f32 %v3268, 0.2
      %v3474 = vmul.f32 %v3270, 0.2
      %v3475 = vmul.f32 %v3273, 0.2
      %v3476 = vmul.f32 %v3275, 0.2
      %v3477 = vmul.f32 %v3278, 0.2
      %v3478 = vmul.f32 %v3280, 0.2
      %v3479 = vmul.f32 %v3283, 0.2
      %v3480 = vmul.f32 %v3285, 0.2
      %v3481 = vmul.f32 %v3288, 0.2
      %v3482 = vmul.f32 %v3290, 0.2
      %v3483 = vmul.f32 %v3293, 0.2
      %v3484 = vmul.f32 %v3295, 0.2
      %v3485 = vmul.f32 %v3298, 0.2
      %v3486 = vmul.f32 %v3300, 0.2
      %v3487 = vmul.f32 %v3303, 0.2
      %v3488 = vmul.f32 %v3305, 0.2
      %v3489 = vmul.f32 %v3308, 0.2
      %v3490 = vmul.f32 %v3310, 0.2
      %v3491 = vmul.f32 %v3313, 0.2
      %v3492 = vmul.f32 %v3315, 0.2
      %v3493 = vmul.f32 %v3318, 0.2
      %v3494 = vmul.f32 %v3320, 0.2
      %v3495 = vmul.f32 %v3323, 0.2
      %v3496 = vmul.f32 %v3325, 0.2
      %v3497 = vmul.f32 %v3328, 0.2
      %v3498 = vmul.f32 %v3330, 0.2
      %v3499 = vmul.f32 %v3333, 0.2
      %v3500 = vmul.f32 %v3335, 0.2
      %v3501 = vmul.f32 %v3338, 0.2
      %v3502 = vmul.f32 %v3340, 0.2
      %v3503 = vmul.f32 %v3343, 0.2
      %v3504 = vmul.f32 %v3345, 0.2
      %v3505 = vmul.f32 %v3348, 0.2
      %v3506 = vmul.f32 %v3350, 0.2
      %v3507 = vmul.f32 %v3353, 0.2
      %v3508 = vmul.f32 %v3355, 0.2
      %v3509 = vmul.f32 %v3358, 0.2
      %v3510 = vmul.f32 %v3360, 0.2
      %v3511 = vmul.f32 %v3363, 0.2
      %v3512 = vmul.f32 %v3365, 0.2
      %v3513 = vmul.f32 %v3368, 0.2
      %v3514 = vmul.f32 %v3370, 0.2
      %v3515 = vmul.f32 %v3373, 0.2
      %v3516 = vmul.f32 %v3375, 0.2
      %v3517 = vmul.f32 %v3378, 0.2
      %v3518 = vmul.f32 %v3380, 0.2
      %v3519 = vmul.f32 %v3383, 0.2
      %v3520 = vmul.f32 %v3385, 0.2
      %v3521 = vmul.f32 %v3388, 0.2
      %v3522 = vmul.f32 %v3390, 0.2
      %v3523 = vmul.f32 %v3393, 0.2
      %v3524 = vmul.f32 %v3395, 0.2
      %v3525 = vsel %vm3397, %v3238, %v3461
      %v3526 = vsel %vm3398, %v3240, %v3462
      %v3527 = vsel %vm3399, %v3243, %v3463
      %v3528 = vsel %vm3400, %v3245, %v3464
      %v3529 = vsel %vm3401, %v3248, %v3465
      %v3530 = vsel %vm3402, %v3250, %v3466
      %v3531 = vsel %vm3403, %v3253, %v3467
      %v3532 = vsel %vm3404, %v3255, %v3468
      %v3533 = vsel %vm3405, %v3258, %v3469
      %v3534 = vsel %vm3406, %v3260, %v3470
      %v3535 = vsel %vm3407, %v3263, %v3471
      %v3536 = vsel %vm3408, %v3265, %v3472
      %v3537 = vsel %vm3409, %v3268, %v3473
      %v3538 = vsel %vm3410, %v3270, %v3474
      %v3539 = vsel %vm3411, %v3273, %v3475
      %v3540 = vsel %vm3412, %v3275, %v3476
      %v3541 = vsel %vm3413, %v3278, %v3477
      %v3542 = vsel %vm3414, %v3280, %v3478
      %v3543 = vsel %vm3415, %v3283, %v3479
      %v3544 = vsel %vm3416, %v3285, %v3480
      %v3545 = vsel %vm3417, %v3288, %v3481
      %v3546 = vsel %vm3418, %v3290, %v3482
      %v3547 = vsel %vm3419, %v3293, %v3483
      %v3548 = vsel %vm3420, %v3295, %v3484
      %v3549 = vsel %vm3421, %v3298, %v3485
      %v3550 = vsel %vm3422, %v3300, %v3486
      %v3551 = vsel %vm3423, %v3303, %v3487
      %v3552 = vsel %vm3424, %v3305, %v3488
      %v3553 = vsel %vm3425, %v3308, %v3489
      %v3554 = vsel %vm3426, %v3310, %v3490
      %v3555 = vsel %vm3427, %v3313, %v3491
      %v3556 = vsel %vm3428, %v3315, %v3492
      %v3557 = vsel %vm3429, %v3318, %v3493
      %v3558 = vsel %vm3430, %v3320, %v3494
      %v3559 = vsel %vm3431, %v3323, %v3495
      %v3560 = vsel %vm3432, %v3325, %v3496
      %v3561 = vsel %vm3433, %v3328, %v3497
      %v3562 = vsel %vm3434, %v3330, %v3498
      %v3563 = vsel %vm3435, %v3333, %v3499
      %v3564 = vsel %vm3436, %v3335, %v3500
      %v3565 = vsel %vm3437, %v3338, %v3501
      %v3566 = vsel %vm3438, %v3340, %v3502
      %v3567 = vsel %vm3439, %v3343, %v3503
      %v3568 = vsel %vm3440, %v3345, %v3504
      %v3569 = vsel %vm3441, %v3348, %v3505
      %v3570 = vsel %vm3442, %v3350, %v3506
      %v3571 = vsel %vm3443, %v3353, %v3507
      %v3572 = vsel %vm3444, %v3355, %v3508
      %v3573 = vsel %vm3445, %v3358, %v3509
      %v3574 = vsel %vm3446, %v3360, %v3510
      %v3575 = vsel %vm3447, %v3363, %v3511
      %v3576 = vsel %vm3448, %v3365, %v3512
      %v3577 = vsel %vm3449, %v3368, %v3513
      %v3578 = vsel %vm3450, %v3370, %v3514
      %v3579 = vsel %vm3451, %v3373, %v3515
      %v3580 = vsel %vm3452, %v3375, %v3516
      %v3581 = vsel %vm3453, %v3378, %v3517
      %v3582 = vsel %vm3454, %v3380, %v3518
      %v3583 = vsel %vm3455, %v3383, %v3519
      %v3584 = vsel %vm3456, %v3385, %v3520
      %v3585 = vsel %vm3457, %v3388, %v3521
      %v3586 = vsel %vm3458, %v3390, %v3522
      %v3587 = vsel %vm3459, %v3393, %v3523
      %v3588 = vsel %vm3460, %v3395, %v3524
      %3589 = vxpose.xlu0.b32.start [1/16] %v3525, 128
      %3590 = vxpose.xlu0.b32.cont [2/16] %v3526, 128
      %3591 = vxpose.xlu0.b32.cont [3/16] %v3527, 128
      %3592 = vxpose.xlu0.b32.cont [4/16] %v3528, 128
      %3593 = vxpose.xlu0.b32.cont [5/16] %v3529, 128
      %3594 = vxpose.xlu0.b32.cont [6/16] %v3530, 128
      %3595 = vxpose.xlu0.b32.cont [7/16] %v3531, 128
      %3596 = vxpose.xlu0.b32.cont [8/16] %v3532, 128
      %3597 = vxpose.xlu0.b32.cont [9/16] %v3533, 128
      %3598 = vxpose.xlu0.b32.cont [10/16] %v3534, 128
      %3599 = vxpose.xlu0.b32.cont [11/16] %v3535, 128
      %3600 = vxpose.xlu0.b32.cont [12/16] %v3536, 128
      %3601 = vxpose.xlu0.b32.cont [13/16] %v3537, 128
      %3602 = vxpose.xlu0.b32.cont [14/16] %v3538, 128
      %3603 = vxpose.xlu0.b32.cont [15/16] %v3539, 128
      %3604 = vxpose.xlu0.b32.end [16/16] %v3540, 128
      %v3605 = vpop.trf.xlu0
      %v3606 = vpop.trf.xlu0
      %v3607 = vpop.trf.xlu0
      %v3608 = vpop.trf.xlu0
      %v3609 = vpop.trf.xlu0
      %v3610 = vpop.trf.xlu0
      %v3611 = vpop.trf.xlu0
      %v3612 = vpop.trf.xlu0
      %v3613 = vpop.trf.xlu0
      %v3614 = vpop.trf.xlu0
      %v3615 = vpop.trf.xlu0
      %v3616 = vpop.trf.xlu0
      %v3617 = vpop.trf.xlu0
      %v3618 = vpop.trf.xlu0
      %v3619 = vpop.trf.xlu0
      %v3620 = vpop.trf.xlu0
      %3621 = vxpose.xlu0.b32.start [1/16] %v3541, 128
      %3622 = vxpose.xlu0.b32.cont [2/16] %v3542, 128
      %3623 = vxpose.xlu0.b32.cont [3/16] %v3543, 128
      %3624 = vxpose.xlu0.b32.cont [4/16] %v3544, 128
      %3625 = vxpose.xlu0.b32.cont [5/16] %v3545, 128
      %3626 = vxpose.xlu0.b32.cont [6/16] %v3546, 128
      %3627 = vxpose.xlu0.b32.cont [7/16] %v3547, 128
      %3628 = vxpose.xlu0.b32.cont [8/16] %v3548, 128
      %3629 = vxpose.xlu0.b32.cont [9/16] %v3549, 128
      %3630 = vxpose.xlu0.b32.cont [10/16] %v3550, 128
      %3631 = vxpose.xlu0.b32.cont [11/16] %v3551, 128
      %3632 = vxpose.xlu0.b32.cont [12/16] %v3552, 128
      %3633 = vxpose.xlu0.b32.cont [13/16] %v3553, 128
      %3634 = vxpose.xlu0.b32.cont [14/16] %v3554, 128
      %3635 = vxpose.xlu0.b32.cont [15/16] %v3555, 128
      %3636 = vxpose.xlu0.b32.end [16/16] %v3556, 128
      %v3637 = vpop.trf.xlu0
      %v3638 = vpop.trf.xlu0
      %v3639 = vpop.trf.xlu0
      %v3640 = vpop.trf.xlu0
      %v3641 = vpop.trf.xlu0
      %v3642 = vpop.trf.xlu0
      %v3643 = vpop.trf.xlu0
      %v3644 = vpop.trf.xlu0
      %v3645 = vpop.trf.xlu0
      %v3646 = vpop.trf.xlu0
      %v3647 = vpop.trf.xlu0
      %v3648 = vpop.trf.xlu0
      %v3649 = vpop.trf.xlu0
      %v3650 = vpop.trf.xlu0
      %v3651 = vpop.trf.xlu0
      %v3652 = vpop.trf.xlu0
      %3653 = vxpose.xlu0.b32.start [1/16] %v3557, 128
      %3654 = vxpose.xlu0.b32.cont [2/16] %v3558, 128
      %3655 = vxpose.xlu0.b32.cont [3/16] %v3559, 128
      %3656 = vxpose.xlu0.b32.cont [4/16] %v3560, 128
      %3657 = vxpose.xlu0.b32.cont [5/16] %v3561, 128
      %3658 = vxpose.xlu0.b32.cont [6/16] %v3562, 128
      %3659 = vxpose.xlu0.b32.cont [7/16] %v3563, 128
      %3660 = vxpose.xlu0.b32.cont [8/16] %v3564, 128
      %3661 = vxpose.xlu0.b32.cont [9/16] %v3565, 128
      %3662 = vxpose.xlu0.b32.cont [10/16] %v3566, 128
      %3663 = vxpose.xlu0.b32.cont [11/16] %v3567, 128
      %3664 = vxpose.xlu0.b32.cont [12/16] %v3568, 128
      %3665 = vxpose.xlu0.b32.cont [13/16] %v3569, 128
      %3666 = vxpose.xlu0.b32.cont [14/16] %v3570, 128
      %3667 = vxpose.xlu0.b32.cont [15/16] %v3571, 128
      %3668 = vxpose.xlu0.b32.end [16/16] %v3572, 128
      %v3669 = vpop.trf.xlu0
      %v3670 = vpop.trf.xlu0
      %v3671 = vpop.trf.xlu0
      %v3672 = vpop.trf.xlu0
      %v3673 = vpop.trf.xlu0
      %v3674 = vpop.trf.xlu0
      %v3675 = vpop.trf.xlu0
      %v3676 = vpop.trf.xlu0
      %v3677 = vpop.trf.xlu0
      %v3678 = vpop.trf.xlu0
      %v3679 = vpop.trf.xlu0
      %v3680 = vpop.trf.xlu0
      %v3681 = vpop.trf.xlu0
      %v3682 = vpop.trf.xlu0
      %v3683 = vpop.trf.xlu0
      %v3684 = vpop.trf.xlu0
      %3685 = vxpose.xlu0.b32.start [1/16] %v3573, 128
      %3686 = vxpose.xlu0.b32.cont [2/16] %v3574, 128
      %3687 = vxpose.xlu0.b32.cont [3/16] %v3575, 128
      %3688 = vxpose.xlu0.b32.cont [4/16] %v3576, 128
      %3689 = vxpose.xlu0.b32.cont [5/16] %v3577, 128
      %3690 = vxpose.xlu0.b32.cont [6/16] %v3578, 128
      %3691 = vxpose.xlu0.b32.cont [7/16] %v3579, 128
      %3692 = vxpose.xlu0.b32.cont [8/16] %v3580, 128
      %3693 = vxpose.xlu0.b32.cont [9/16] %v3581, 128
      %3694 = vxpose.xlu0.b32.cont [10/16] %v3582, 128
      %3695 = vxpose.xlu0.b32.cont [11/16] %v3583, 128
      %3696 = vxpose.xlu0.b32.cont [12/16] %v3584, 128
      %3697 = vxpose.xlu0.b32.cont [13/16] %v3585, 128
      %3698 = vxpose.xlu0.b32.cont [14/16] %v3586, 128
      %3699 = vxpose.xlu0.b32.cont [15/16] %v3587, 128
      %3700 = vxpose.xlu0.b32.end [16/16] %v3588, 128
      %v3701 = vpop.trf.xlu0
      %v3702 = vpop.trf.xlu0
      %v3703 = vpop.trf.xlu0
      %v3704 = vpop.trf.xlu0
      %v3705 = vpop.trf.xlu0
      %v3706 = vpop.trf.xlu0
      %v3707 = vpop.trf.xlu0
      %v3708 = vpop.trf.xlu0
      %v3709 = vpop.trf.xlu0
      %v3710 = vpop.trf.xlu0
      %v3711 = vpop.trf.xlu0
      %v3712 = vpop.trf.xlu0
      %v3713 = vpop.trf.xlu0
      %v3714 = vpop.trf.xlu0
      %v3715 = vpop.trf.xlu0
      %v3716 = vpop.trf.xlu0
      %3717 = vst [vmem:[%s170] sm:$0xff] %v3605
      %3718 = vst [vmem:[%s170 + $0x8] sm:$0xff] %v3637
      %3719 = vst [vmem:[%s170 + $0x10] sm:$0xff] %v3669
      %3720 = vst [vmem:[%s170 + $0x18] sm:$0xff] %v3701
      %3721 = vst [vmem:[%s170 + $0x20] sm:$0xff] %v3606
      %3722 = vst [vmem:[%s170 + $0x28] sm:$0xff] %v3638
      %3723 = vst [vmem:[%s170 + $0x30] sm:$0xff] %v3670
      %3724 = vst [vmem:[%s170 + $0x38] sm:$0xff] %v3702
      %p3725 = scmp.lt.s32.totalorder %s14, 1
      %s3726 = scalar_select %p3725, %s14, 1
      %s3727 = smul.addr %s3726, 8
      %s3728 = smul.addr %s3727, 8
      %s3729 = scalar_lea.vmem %s3, %s3728
      // Predicated region
      $region33: #{discriminator_forward.2} parent=31 // pred_check
        %p3730 = pneg %p100
      $region34: #{discriminator_forward.2} parent=31 // pred_check_branch
        %3732 = sbr.rel (%p3730) target = $region36
      $region35: #{discriminator_forward.2} parent=31 // pred_region
        _
      $region36: #{discriminator_forward.2} parent=31 // pred_fallthru
        _
    $region32: #{discriminator_forward.2} parent=5 // pred_fallthru
      _
    %p3733 = scmp.le.s32.totalorder 2, %s9
    // Predicated region
    $region37: #{discriminator_forward.2} parent=5 // pred_check
      %p3734 = pneg %p3733
    $region38: #{discriminator_forward.2} parent=5 // pred_check_branch
      %3736 = sbr.rel (%p3734) target = $region40
    $region39: #{discriminator_forward.2} parent=5 // pred_region
      %s3737 = ssub.s32 %s9, 2
      // Predicated region
      $region41: #{discriminator_forward.2} parent=39 // pred_check
        %p3738 = pneg %p106
      $region42: #{discriminator_forward.2} parent=39 // pred_check_branch
        %3740 = sbr.rel (%p3738) target = $region44
      $region43: #{discriminator_forward.2} parent=39 // pred_region
        %p3741 = scmp.lt.s32.totalorder %s15, 1
        %s3742 = scalar_select %p3741, %s15, 1
        %s3743 = smul.addr %s3742, 8
        %s3744 = smul.addr %s3743, 8
        %s3745 = scalar_lea.vmem %s3, %s3744
      $region44: #{discriminator_forward.2} parent=39 // pred_fallthru
        _
    $region40: #{discriminator_forward.2} parent=5 // pred_fallthru
      _
  $region6: #{discriminator_forward.2} parent=0 // loop_footer
    %s13 = sadd.s32 1, %s9
  $region7: #{discriminator_forward.2} parent=0 // loop_footer_branch
    %8 = sbr.rel target = $region3
  $region8: #{discriminator_forward.2} parent=0 // loop_exit
    _

// kernel: discriminator_forward.3
$region0: #{discriminator_forward.3}
  #allocation0 [shape = 'u32[]', space=smem, size = 0x4, offset = 0x4, fixed_abs, tag = 'smem constant byte address 0x4 - core index']
  #allocation1 [shape = 'u32[72,128]{1,0:T(1,128)}', space=vmem, size = 0x9000, scoped, tag = 'internal scratch']
  %s0 = inlined_call_operand.vmem [shape: bf16[2,64,1024], index: 0, kind: input, shape index: {}]
  %s1 = inlined_call_operand.vmem [shape: bf16[1024,32], index: 1, kind: input, shape index: {}]
  %s2 = inlined_call_operand.vmem [shape: f32[1,32], index: 2, kind: input, shape index: {}]
  %s3 = inlined_call_operand.vmem [shape: f32[1,32], index: 3, kind: input, shape index: {}]
  %s4 = inlined_call_operand.vmem [shape: f32[1,32], index: 4, kind: input, shape index: {}]
  %s5 = inlined_call_operand.vmem [shape: f32[1,64,32], index: 5, kind: input, shape index: {}]
  %s6 = inlined_call_operand.vmem [shape: f32[1,128], index: 6, kind: input, shape index: {}]
  %s7 = inlined_call_operand.vmem [shape: f32[2,1,128], index: 7, kind: output, shape index: {}]
  %s8 = sld [smem:[#allocation0]]
  $region61: #{discriminator_forward.3} parent=0
    _
  %s10 = ssub.s32 1, %s8
  %s11 = scalar_select 0, %s10, %s8
  loop: start=0, step=1, limit=4
  $region2: #{discriminator_forward.3} parent=0 // loop_pre_header
    _
  $region3: #{discriminator_forward.3} parent=0 // loop_header
    %s13 = sphi 0, %s17
    %p14 = scmp.ge.s32.totalorder %s13, 4
    %s23 = sphi 0, %s25
    %s26 = sphi 0, %s23
    %s27 = sphi 0, %s26
    %s43 = sphi 0, %s27
    %s47 = sphi 0, %s47
    %s49 = sphi 0, %s47
    %s50 = sphi 0, %s49
    %s64 = sphi 0, %s50
    %s68 = sphi 0, %s68
    %s70 = sphi 0, %s68
    %s71 = sphi 0, %s70
    %s85 = sphi 0, %s71
    %s89 = sphi 0, %s89
    %s91 = sphi 0, %s89
    %s92 = sphi 0, %s91
    %s106 = sphi 0, %s92
    %s110 = sphi 0, %s110
    %s112 = sphi 0, %s110
    %s113 = sphi 0, %s112
    %s127 = sphi 0, %s113
    %s131 = sphi 0, %s131
    %s133 = sphi 0, %s131
    %s134 = sphi 0, %s133
    %s148 = sphi 0, %s134
    %s152 = sphi 0, %s152
    %s154 = sphi 0, %s152
    %s155 = sphi 0, %s154
    %s169 = sphi 0, %s155
    %s175 = sphi 0, %s177
    %s178 = sphi 0, %s175
    %s179 = sphi 0, %s178
    %s195 = sphi 0, %s179
  $region4: #{discriminator_forward.3} parent=0 // loop_header_branch
    %16 = sbr.rel (%p14) target = $region8
  $region5: #{discriminator_forward.3} parent=0 // loop_body
    %s18 = ssub.s32 %s13, 1
    %s19 = ssub.s32 %s13, 2
    %s20 = sadd.s32 %s13, 1
    %s21 = ssub.s32 %s13, %s20
    %p22 = scmp.eq.s32.totalorder %s21, 0
    %s24 = sadd.s32 %s23, 1
    %s25 = scalar_select %p22, %s23, %s24
    %p28 = pneg %p22
    %p29 = scmp.eq.s32.totalorder %s13, 1
    %p30 = por %p28, %p29
    %p31 = scmp.ne.s32.totalorder %s23, %s26
    %p32 = scmp.eq.s32.totalorder %s13, 0
    %p33 = por %p31, %p32
    %p34 = scmp.ne.s32.totalorder %s23, %s26
    %p35 = scmp.eq.s32.totalorder %s18, 1
    %p36 = por %p34, %p35
    %p37 = scmp.ne.s32.totalorder %s26, %s27
    %p38 = scmp.eq.s32.totalorder %s18, 0
    %p39 = por %p37, %p38
    %p40 = scmp.ne.s32.totalorder %s26, %s27
    %p41 = scmp.eq.s32.totalorder %s19, 1
    %p42 = por %p40, %p41
    %p44 = scmp.ne.s32.totalorder %s27, %s43
    %p45 = scmp.eq.s32.totalorder %s19, 0
    %p46 = por %p44, %p45
    %s48 = sadd.s32 %s47, 1
    %p51 = scmp.eq.s32.totalorder %s13, 1
    %p52 = scmp.ne.s32.totalorder %s47, %s49
    %p53 = scmp.eq.s32.totalorder %s13, 0
    %p54 = por %p52, %p53
    %p55 = scmp.ne.s32.totalorder %s47, %s49
    %p56 = scmp.eq.s32.totalorder %s18, 1
    %p57 = por %p55, %p56
    %p58 = scmp.ne.s32.totalorder %s49, %s50
    %p59 = scmp.eq.s32.totalorder %s18, 0
    %p60 = por %p58, %p59
    %p61 = scmp.ne.s32.totalorder %s49, %s50
    %p62 = scmp.eq.s32.totalorder %s19, 1
    %p63 = por %p61, %p62
    %p65 = scmp.ne.s32.totalorder %s50, %s64
    %p66 = scmp.eq.s32.totalorder %s19, 0
    %p67 = por %p65, %p66
    %s69 = sadd.s32 %s68, 1
    %p72 = scmp.eq.s32.totalorder %s13, 1
    %p73 = scmp.ne.s32.totalorder %s68, %s70
    %p74 = scmp.eq.s32.totalorder %s13, 0
    %p75 = por %p73, %p74
    %p76 = scmp.ne.s32.totalorder %s68, %s70
    %p77 = scmp.eq.s32.totalorder %s18, 1
    %p78 = por %p76, %p77
    %p79 = scmp.ne.s32.totalorder %s70, %s71
    %p80 = scmp.eq.s32.totalorder %s18, 0
    %p81 = por %p79, %p80
    %p82 = scmp.ne.s32.totalorder %s70, %s71
    %p83 = scmp.eq.s32.totalorder %s19, 1
    %p84 = por %p82, %p83
    %p86 = scmp.ne.s32.totalorder %s71, %s85
    %p87 = scmp.eq.s32.totalorder %s19, 0
    %p88 = por %p86, %p87
    %s90 = sadd.s32 %s89, 1
    %p93 = scmp.eq.s32.totalorder %s13, 1
    %p94 = scmp.ne.s32.totalorder %s89, %s91
    %p95 = scmp.eq.s32.totalorder %s13, 0
    %p96 = por %p94, %p95
    %p97 = scmp.ne.s32.totalorder %s89, %s91
    %p98 = scmp.eq.s32.totalorder %s18, 1
    %p99 = por %p97, %p98
    %p100 = scmp.ne.s32.totalorder %s91, %s92
    %p101 = scmp.eq.s32.totalorder %s18, 0
    %p102 = por %p100, %p101
    %p103 = scmp.ne.s32.totalorder %s91, %s92
    %p104 = scmp.eq.s32.totalorder %s19, 1
    %p105 = por %p103, %p104
    %p107 = scmp.ne.s32.totalorder %s92, %s106
    %p108 = scmp.eq.s32.totalorder %s19, 0
    %p109 = por %p107, %p108
    %s111 = sadd.s32 %s110, 1
    %p114 = scmp.eq.s32.totalorder %s13, 1
    %p115 = scmp.ne.s32.totalorder %s110, %s112
    %p116 = scmp.eq.s32.totalorder %s13, 0
    %p117 = por %p115, %p116
    %p118 = scmp.ne.s32.totalorder %s110, %s112
    %p119 = scmp.eq.s32.totalorder %s18, 1
    %p120 = por %p118, %p119
    %p121 = scmp.ne.s32.totalorder %s112, %s113
    %p122 = scmp.eq.s32.totalorder %s18, 0
    %p123 = por %p121, %p122
    %p124 = scmp.ne.s32.totalorder %s112, %s113
    %p125 = scmp.eq.s32.totalorder %s19, 1
    %p126 = por %p124, %p125
    %p128 = scmp.ne.s32.totalorder %s113, %s127
    %p129 = scmp.eq.s32.totalorder %s19, 0
    %p130 = por %p128, %p129
    %s132 = sadd.s32 %s131, 1
    %p135 = scmp.eq.s32.totalorder %s13, 1
    %p136 = scmp.ne.s32.totalorder %s131, %s133
    %p137 = scmp.eq.s32.totalorder %s13, 0
    %p138 = por %p136, %p137
    %p139 = scmp.ne.s32.totalorder %s131, %s133
    %p140 = scmp.eq.s32.totalorder %s18, 1
    %p141 = por %p139, %p140
    %p142 = scmp.ne.s32.totalorder %s133, %s134
    %p143 = scmp.eq.s32.totalorder %s18, 0
    %p144 = por %p142, %p143
    %p145 = scmp.ne.s32.totalorder %s133, %s134
    %p146 = scmp.eq.s32.totalorder %s19, 1
    %p147 = por %p145, %p146
    %p149 = scmp.ne.s32.totalorder %s134, %s148
    %p150 = scmp.eq.s32.totalorder %s19, 0
    %p151 = por %p149, %p150
    %s153 = sadd.s32 %s152, 1
    %p156 = scmp.eq.s32.totalorder %s13, 1
    %p157 = scmp.ne.s32.totalorder %s152, %s154
    %p158 = scmp.eq.s32.totalorder %s13, 0
    %p159 = por %p157, %p158
    %p160 = scmp.ne.s32.totalorder %s152, %s154
    %p161 = scmp.eq.s32.totalorder %s18, 1
    %p162 = por %p160, %p161
    %p163 = scmp.ne.s32.totalorder %s154, %s155
    %p164 = scmp.eq.s32.totalorder %s18, 0
    %p165 = por %p163, %p164
    %p166 = scmp.ne.s32.totalorder %s154, %s155
    %p167 = scmp.eq.s32.totalorder %s19, 1
    %p168 = por %p166, %p167
    %p170 = scmp.ne.s32.totalorder %s155, %s169
    %p171 = scmp.eq.s32.totalorder %s19, 0
    %p172 = por %p170, %p171
    %s173 = ssub.s32 %s13, %s20
    %p174 = scmp.eq.s32.totalorder %s173, 0
    %s176 = sadd.s32 %s175, 1
    %s177 = scalar_select %p174, %s175, %s176
    %p180 = pneg %p174
    %p181 = scmp.eq.s32.totalorder %s13, 1
    %p182 = por %p180, %p181
    %p183 = scmp.ne.s32.totalorder %s175, %s178
    %p184 = scmp.eq.s32.totalorder %s13, 0
    %p185 = por %p183, %p184
    %p186 = scmp.ne.s32.totalorder %s175, %s178
    %p187 = scmp.eq.s32.totalorder %s18, 1
    %p188 = por %p186, %p187
    %p189 = scmp.ne.s32.totalorder %s178, %s179
    %p190 = scmp.eq.s32.totalorder %s18, 0
    %p191 = por %p189, %p190
    %p192 = scmp.ne.s32.totalorder %s178, %s179
    %p193 = scmp.eq.s32.totalorder %s19, 1
    %p194 = por %p192, %p193
    %p196 = scmp.ne.s32.totalorder %s179, %s195
    %p197 = scmp.eq.s32.totalorder %s19, 0
    %p198 = por %p196, %p197
    %p199 = scmp.le.s32.totalorder 1, %s13
    %p200 = scmp.lt.s32.totalorder %s13, 3
    %p201 = pnand %p199, %p200
    %p202 = pneg %p201
    // Predicated region
    $region9: #{discriminator_forward.3} parent=5 // pred_check
      _
    $region10: #{discriminator_forward.3} parent=5 // pred_check_branch
      %204 = sbr.rel (%p201) target = $region12
    $region11: #{discriminator_forward.3} parent=5 // pred_region
      %s205 = ssub.s32 %s13, 1
      // Predicated region
      $region13: #{discriminator_forward.3} parent=11 // pred_check
        %p206 = pneg %p60
      $region14: #{discriminator_forward.3} parent=11 // pred_check_branch
        %208 = sbr.rel (%p206) target = $region16
      $region15: #{discriminator_forward.3} parent=11 // pred_region
        _
      $region16: #{discriminator_forward.3} parent=11 // pred_fallthru
        _
      // Predicated region
      $region17: #{discriminator_forward.3} parent=11 // pred_check
        %p209 = pneg %p81
      $region18: #{discriminator_forward.3} parent=11 // pred_check_branch
        %211 = sbr.rel (%p209) target = $region20
      $region19: #{discriminator_forward.3} parent=11 // pred_region
        _
      $region20: #{discriminator_forward.3} parent=11 // pred_fallthru
        _
      // Predicated region
      $region21: #{discriminator_forward.3} parent=11 // pred_check
        %p212 = pneg %p102
      $region22: #{discriminator_forward.3} parent=11 // pred_check_branch
        %214 = sbr.rel (%p212) target = $region24
      $region23: #{discriminator_forward.3} parent=11 // pred_region
        _
      $region24: #{discriminator_forward.3} parent=11 // pred_fallthru
        _
      // Predicated region
      $region25: #{discriminator_forward.3} parent=11 // pred_check
        %p215 = pneg %p123
      $region26: #{discriminator_forward.3} parent=11 // pred_check_branch
        %217 = sbr.rel (%p215) target = $region28
      $region27: #{discriminator_forward.3} parent=11 // pred_region
        _
      $region28: #{discriminator_forward.3} parent=11 // pred_fallthru
        _
      // Predicated region
      $region29: #{discriminator_forward.3} parent=11 // pred_check
        %p218 = pneg %p144
      $region30: #{discriminator_forward.3} parent=11 // pred_check_branch
        %220 = sbr.rel (%p218) target = $region32
      $region31: #{discriminator_forward.3} parent=11 // pred_region
        _
      $region32: #{discriminator_forward.3} parent=11 // pred_fallthru
        _
      // Predicated region
      $region33: #{discriminator_forward.3} parent=11 // pred_check
        %p221 = pneg %p165
      $region34: #{discriminator_forward.3} parent=11 // pred_check_branch
        %223 = sbr.rel (%p221) target = $region36
      $region35: #{discriminator_forward.3} parent=11 // pred_region
        _
      $region36: #{discriminator_forward.3} parent=11 // pred_fallthru
        _
    $region12: #{discriminator_forward.3} parent=5 // pred_fallthru
      _
    %p224 = scmp.lt.s32.totalorder %s13, 2
    // Predicated region
    $region37: #{discriminator_forward.3} parent=5 // pred_check
      %p225 = pneg %p224
    $region38: #{discriminator_forward.3} parent=5 // pred_check_branch
      %227 = sbr.rel (%p225) target = $region40
    $region39: #{discriminator_forward.3} parent=5 // pred_region
      // Predicated region
      $region41: #{discriminator_forward.3} parent=39 // pred_check
        %p228 = pneg %p33
      $region42: #{discriminator_forward.3} parent=39 // pred_check_branch
        %230 = sbr.rel (%p228) target = $region44
      $region43: #{discriminator_forward.3} parent=39 // pred_region
        %p231 = scmp.lt.s32.totalorder %s13, 1
        %s232 = scalar_select %p231, %s13, 1
        %s233 = smul.addr %s232, 64
        %s234 = smul.addr %s233, 4
        %s235 = scalar_lea.vmem %s0, %s234
      $region44: #{discriminator_forward.3} parent=39 // pred_fallthru
        _
    $region40: #{discriminator_forward.3} parent=5 // pred_fallthru
      _
    %p236 = scmp.le.s32.totalorder 1, %s13
    %p237 = scmp.lt.s32.totalorder %s13, 3
    %p238 = pnand %p236, %p237
    %p239 = pneg %p238
    // Predicated region
    $region45: #{discriminator_forward.3} parent=5 // pred_check
      _
    $region46: #{discriminator_forward.3} parent=5 // pred_check_branch
      %241 = sbr.rel (%p238) target = $region48
    $region47: #{discriminator_forward.3} parent=5 // pred_region
      %s242 = ssub.s32 %s13, 1
      %p243 = scmp.lt.s32.totalorder %s18, 1
      %s244 = scalar_select %p243, %s18, 1
      %s245 = smul.addr %s244, 64
      %s246 = smul.addr %s245, 4
      %s247 = scalar_lea.vmem %s0, %s246
      %p248 = pneg %p39
      %p249 = pneg %p36
      %p250 = pneg %p60
      %p251 = pneg %p57
      %p252 = pneg %p81
      %p253 = pneg %p78
      %p254 = pneg %p102
      %p255 = pneg %p99
      %p256 = pneg %p123
      %p257 = pneg %p120
      %p258 = pneg %p144
      %p259 = pneg %p141
      %p260 = pneg %p165
      %p261 = pneg %p162
      %p262 = pneg %p191
      %p263 = pneg %p188
      %p264 = scmp.lt.s32.totalorder %s18, 1
      %s265 = scalar_select %p264, %s18, 1
      %s266 = scalar_lea.vmem %s7, %s265
      %p267 = scmp.lt.s32.totalorder %s18, 1
      %s268 = scalar_select %p267, %s18, 1
      %s269 = smul.addr %s268, 64
      %s270 = smul.addr %s269, 4
      %s271 = scalar_lea.vmem %s0, %s270
      %p272 = scmp.lt.s32.totalorder %s18, 1
      %s273 = scalar_select %p272, %s18, 1
      %s274 = scalar_lea.vmem %s7, %s273
      %v275 = vld [vmem:[%s271] sm:$0xff]
      %v276 = vld [vmem:[%s271 + $0x8] sm:$0xff]
      %v277 = vld [vmem:[%s271 + $0x10] sm:$0xff]
      %v278 = vld [vmem:[%s271 + $0x18] sm:$0xff]
      %v279 = vld [vmem:[%s271 + $0x20] sm:$0xff]
      %v280 = vld [vmem:[%s271 + $0x28] sm:$0xff]
      %v281 = vld [vmem:[%s271 + $0x30] sm:$0xff]
      %v282 = vld [vmem:[%s271 + $0x38] sm:$0xff]
      %v283 = vld [vmem:[%s271 + $0x40] sm:$0xff]
      %v284 = vld [vmem:[%s271 + $0x48] sm:$0xff]
      %v285 = vld [vmem:[%s271 + $0x50] sm:$0xff]
      %v286 = vld [vmem:[%s271 + $0x58] sm:$0xff]
      %v287 = vld [vmem:[%s271 + $0x60] sm:$0xff]
      %v288 = vld [vmem:[%s271 + $0x68] sm:$0xff]
      %v289 = vld [vmem:[%s271 + $0x70] sm:$0xff]
      %v290 = vld [vmem:[%s271 + $0x78] sm:$0xff]
      %v291 = vld [vmem:[%s271 + $0x80] sm:$0xff]
      %v292 = vld [vmem:[%s271 + $0x88] sm:$0xff]
      %v293 = vld [vmem:[%s271 + $0x90] sm:$0xff]
      %v294 = vld [vmem:[%s271 + $0x98] sm:$0xff]
      %v295 = vld [vmem:[%s271 + $0xa0] sm:$0xff]
      %v296 = vld [vmem:[%s271 + $0xa8] sm:$0xff]
      %v297 = vld [vmem:[%s271 + $0xb0] sm:$0xff]
      %v298 = vld [vmem:[%s271 + $0xb8] sm:$0xff]
      %v299 = vld [vmem:[%s271 + $0xc0] sm:$0xff]
      %v300 = vld [vmem:[%s271 + $0xc8] sm:$0xff]
      %v301 = vld [vmem:[%s271 + $0xd0] sm:$0xff]
      %v302 = vld [vmem:[%s271 + $0xd8] sm:$0xff]
      %v303 = vld [vmem:[%s271 + $0xe0] sm:$0xff]
      %v304 = vld [vmem:[%s271 + $0xe8] sm:$0xff]
      %v305 = vld [vmem:[%s271 + $0xf0] sm:$0xff]
      %v306 = vld [vmem:[%s271 + $0xf8] sm:$0xff]
      %v307 = vld [vmem:[%s1] sm:$0xf]
      %v308 = vld [vmem:[%s1 + $0x4] sm:$0xf]
      %v309 = vld [vmem:[%s1 + $0x8] sm:$0xf]
      %v310 = vld [vmem:[%s1 + $0xc] sm:$0xf]
      %v311 = vld [vmem:[%s1 + $0x10] sm:$0xf]
      %v312 = vld [vmem:[%s1 + $0x14] sm:$0xf]
      %v313 = vld [vmem:[%s1 + $0x18] sm:$0xf]
      %v314 = vld [vmem:[%s1 + $0x1c] sm:$0xf]
      %v315 = vld [vmem:[%s1 + $0x20] sm:$0xf]
      %v316 = vld [vmem:[%s1 + $0x24] sm:$0xf]
      %v317 = vld [vmem:[%s1 + $0x28] sm:$0xf]
      %v318 = vld [vmem:[%s1 + $0x2c] sm:$0xf]
      %v319 = vld [vmem:[%s1 + $0x30] sm:$0xf]
      %v320 = vld [vmem:[%s1 + $0x34] sm:$0xf]
      %v321 = vld [vmem:[%s1 + $0x38] sm:$0xf]
      %v322 = vld [vmem:[%s1 + $0x3c] sm:$0xf]
      %v323 = vld [vmem:[%s1 + $0x40] sm:$0xf]
      %v324 = vld [vmem:[%s1 + $0x44] sm:$0xf]
      %v325 = vld [vmem:[%s1 + $0x48] sm:$0xf]
      %v326 = vld [vmem:[%s1 + $0x4c] sm:$0xf]
      %v327 = vld [vmem:[%s1 + $0x50] sm:$0xf]
      %v328 = vld [vmem:[%s1 + $0x54] sm:$0xf]
      %v329 = vld [vmem:[%s1 + $0x58] sm:$0xf]
      %v330 = vld [vmem:[%s1 + $0x5c] sm:$0xf]
      %v331 = vld [vmem:[%s1 + $0x60] sm:$0xf]
      %v332 = vld [vmem:[%s1 + $0x64] sm:$0xf]
      %v333 = vld [vmem:[%s1 + $0x68] sm:$0xf]
      %v334 = vld [vmem:[%s1 + $0x6c] sm:$0xf]
      %v335 = vld [vmem:[%s1 + $0x70] sm:$0xf]
      %v336 = vld [vmem:[%s1 + $0x74] sm:$0xf]
      %v337 = vld [vmem:[%s1 + $0x78] sm:$0xf]
      %v338 = vld [vmem:[%s1 + $0x7c] sm:$0xf]
      %v339 = vld [vmem:[%s1 + $0x80] sm:$0xf]
      %v340 = vld [vmem:[%s1 + $0x84] sm:$0xf]
      %v341 = vld [vmem:[%s1 + $0x88] sm:$0xf]
      %v342 = vld [vmem:[%s1 + $0x8c] sm:$0xf]
      %v343 = vld [vmem:[%s1 + $0x90] sm:$0xf]
      %v344 = vld [vmem:[%s1 + $0x94] sm:$0xf]
      %v345 = vld [vmem:[%s1 + $0x98] sm:$0xf]
      %v346 = vld [vmem:[%s1 + $0x9c] sm:$0xf]
      %v347 = vld [vmem:[%s1 + $0xa0] sm:$0xf]
      %v348 = vld [vmem:[%s1 + $0xa4] sm:$0xf]
      %v349 = vld [vmem:[%s1 + $0xa8] sm:$0xf]
      %v350 = vld [vmem:[%s1 + $0xac] sm:$0xf]
      %v351 = vld [vmem:[%s1 + $0xb0] sm:$0xf]
      %v352 = vld [vmem:[%s1 + $0xb4] sm:$0xf]
      %v353 = vld [vmem:[%s1 + $0xb8] sm:$0xf]
      %v354 = vld [vmem:[%s1 + $0xbc] sm:$0xf]
      %v355 = vld [vmem:[%s1 + $0xc0] sm:$0xf]
      %v356 = vld [vmem:[%s1 + $0xc4] sm:$0xf]
      %v357 = vld [vmem:[%s1 + $0xc8] sm:$0xf]
      %v358 = vld [vmem:[%s1 + $0xcc] sm:$0xf]
      %v359 = vld [vmem:[%s1 + $0xd0] sm:$0xf]
      %v360 = vld [vmem:[%s1 + $0xd4] sm:$0xf]
      %v361 = vld [vmem:[%s1 + $0xd8] sm:$0xf]
      %v362 = vld [vmem:[%s1 + $0xdc] sm:$0xf]
      %v363 = vld [vmem:[%s1 + $0xe0] sm:$0xf]
      %v364 = vld [vmem:[%s1 + $0xe4] sm:$0xf]
      %v365 = vld [vmem:[%s1 + $0xe8] sm:$0xf]
      %v366 = vld [vmem:[%s1 + $0xec] sm:$0xf]
      %v367 = vld [vmem:[%s1 + $0xf0] sm:$0xf]
      %v368 = vld [vmem:[%s1 + $0xf4] sm:$0xf]
      %v369 = vld [vmem:[%s1 + $0xf8] sm:$0xf]
      %v370 = vld [vmem:[%s1 + $0xfc] sm:$0xf]
      %v371 = vld [vmem:[%s1 + $0x100] sm:$0xf]
      %v372 = vld [vmem:[%s1 + $0x104] sm:$0xf]
      %v373 = vld [vmem:[%s1 + $0x108] sm:$0xf]
      %v374 = vld [vmem:[%s1 + $0x10c] sm:$0xf]
      %v375 = vld [vmem:[%s1 + $0x110] sm:$0xf]
      %v376 = vld [vmem:[%s1 + $0x114] sm:$0xf]
      %v377 = vld [vmem:[%s1 + $0x118] sm:$0xf]
      %v378 = vld [vmem:[%s1 + $0x11c] sm:$0xf]
      %v379 = vld [vmem:[%s1 + $0x120] sm:$0xf]
      %v380 = vld [vmem:[%s1 + $0x124] sm:$0xf]
      %v381 = vld [vmem:[%s1 + $0x128] sm:$0xf]
      %v382 = vld [vmem:[%s1 + $0x12c] sm:$0xf]
      %v383 = vld [vmem:[%s1 + $0x130] sm:$0xf]
      %v384 = vld [vmem:[%s1 + $0x134] sm:$0xf]
      %v385 = vld [vmem:[%s1 + $0x138] sm:$0xf]
      %v386 = vld [vmem:[%s1 + $0x13c] sm:$0xf]
      %v387 = vld [vmem:[%s1 + $0x140] sm:$0xf]
      %v388 = vld [vmem:[%s1 + $0x144] sm:$0xf]
      %v389 = vld [vmem:[%s1 + $0x148] sm:$0xf]
      %v390 = vld [vmem:[%s1 + $0x14c] sm:$0xf]
      %v391 = vld [vmem:[%s1 + $0x150] sm:$0xf]
      %v392 = vld [vmem:[%s1 + $0x154] sm:$0xf]
      %v393 = vld [vmem:[%s1 + $0x158] sm:$0xf]
      %v394 = vld [vmem:[%s1 + $0x15c] sm:$0xf]
      %v395 = vld [vmem:[%s1 + $0x160] sm:$0xf]
      %v396 = vld [vmem:[%s1 + $0x164] sm:$0xf]
      %v397 = vld [vmem:[%s1 + $0x168] sm:$0xf]
      %v398 = vld [vmem:[%s1 + $0x16c] sm:$0xf]
      %v399 = vld [vmem:[%s1 + $0x170] sm:$0xf]
      %v400 = vld [vmem:[%s1 + $0x174] sm:$0xf]
      %v401 = vld [vmem:[%s1 + $0x178] sm:$0xf]
      %v402 = vld [vmem:[%s1 + $0x17c] sm:$0xf]
      %v403 = vld [vmem:[%s1 + $0x180] sm:$0xf]
      %v404 = vld [vmem:[%s1 + $0x184] sm:$0xf]
      %v405 = vld [vmem:[%s1 + $0x188] sm:$0xf]
      %v406 = vld [vmem:[%s1 + $0x18c] sm:$0xf]
      %v407 = vld [vmem:[%s1 + $0x190] sm:$0xf]
      %v408 = vld [vmem:[%s1 + $0x194] sm:$0xf]
      %v409 = vld [vmem:[%s1 + $0x198] sm:$0xf]
      %v410 = vld [vmem:[%s1 + $0x19c] sm:$0xf]
      %v411 = vld [vmem:[%s1 + $0x1a0] sm:$0xf]
      %v412 = vld [vmem:[%s1 + $0x1a4] sm:$0xf]
      %v413 = vld [vmem:[%s1 + $0x1a8] sm:$0xf]
      %v414 = vld [vmem:[%s1 + $0x1ac] sm:$0xf]
      %v415 = vld [vmem:[%s1 + $0x1b0] sm:$0xf]
      %v416 = vld [vmem:[%s1 + $0x1b4] sm:$0xf]
      %v417 = vld [vmem:[%s1 + $0x1b8] sm:$0xf]
      %v418 = vld [vmem:[%s1 + $0x1bc] sm:$0xf]
      %v419 = vld [vmem:[%s1 + $0x1c0] sm:$0xf]
      %v420 = vld [vmem:[%s1 + $0x1c4] sm:$0xf]
      %v421 = vld [vmem:[%s1 + $0x1c8] sm:$0xf]
      %v422 = vld [vmem:[%s1 + $0x1cc] sm:$0xf]
      %v423 = vld [vmem:[%s1 + $0x1d0] sm:$0xf]
      %v424 = vld [vmem:[%s1 + $0x1d4] sm:$0xf]
      %v425 = vld [vmem:[%s1 + $0x1d8] sm:$0xf]
      %v426 = vld [vmem:[%s1 + $0x1dc] sm:$0xf]
      %v427 = vld [vmem:[%s1 + $0x1e0] sm:$0xf]
      %v428 = vld [vmem:[%s1 + $0x1e4] sm:$0xf]
      %v429 = vld [vmem:[%s1 + $0x1e8] sm:$0xf]
      %v430 = vld [vmem:[%s1 + $0x1ec] sm:$0xf]
      %v431 = vld [vmem:[%s1 + $0x1f0] sm:$0xf]
      %v432 = vld [vmem:[%s1 + $0x1f4] sm:$0xf]
      %v433 = vld [vmem:[%s1 + $0x1f8] sm:$0xf]
      %v434 = vld [vmem:[%s1 + $0x1fc] sm:$0xf]
      %v435 = vld [vmem:[%s2] sm:$0x1]
      %v437 = vperm.slane %v435, 0
      %v471 = vunpack.c.l.b16 %v275
      %v472 = vunpack.c.h.b16 %v275
      %v473 = vunpack.c.l.b16 %v276
      %v474 = vunpack.c.h.b16 %v276
      %v475 = vunpack.c.l.b16 %v277
      %v476 = vunpack.c.h.b16 %v277
      %v477 = vunpack.c.l.b16 %v278
      %v478 = vunpack.c.h.b16 %v278
      %v479 = vunpack.c.l.b16 %v279
      %v480 = vunpack.c.h.b16 %v279
      %v481 = vunpack.c.l.b16 %v280
      %v482 = vunpack.c.h.b16 %v280
      %v483 = vunpack.c.l.b16 %v281
      %v484 = vunpack.c.h.b16 %v281
      %v485 = vunpack.c.l.b16 %v282
      %v486 = vunpack.c.h.b16 %v282
      %v487 = vunpack.c.l.b16 %v283
      %v488 = vunpack.c.h.b16 %v283
      %v489 = vunpack.c.l.b16 %v284
      %v490 = vunpack.c.h.b16 %v284
      %v491 = vunpack.c.l.b16 %v285
      %v492 = vunpack.c.h.b16 %v285
      %v493 = vunpack.c.l.b16 %v286
      %v494 = vunpack.c.h.b16 %v286
      %v495 = vunpack.c.l.b16 %v287
      %v496 = vunpack.c.h.b16 %v287
      %v497 = vunpack.c.l.b16 %v288
      %v498 = vunpack.c.h.b16 %v288
      %v499 = vunpack.c.l.b16 %v289
      %v500 = vunpack.c.h.b16 %v289
      %v501 = vunpack.c.l.b16 %v290
      %v502 = vunpack.c.h.b16 %v290
      %v503 = vunpack.c.l.b16 %v291
      %v504 = vunpack.c.h.b16 %v291
      %v505 = vunpack.c.l.b16 %v292
      %v506 = vunpack.c.h.b16 %v292
      %v507 = vunpack.c.l.b16 %v293
      %v508 = vunpack.c.h.b16 %v293
      %v509 = vunpack.c.l.b16 %v294
      %v510 = vunpack.c.h.b16 %v294
      %v511 = vunpack.c.l.b16 %v295
      %v512 = vunpack.c.h.b16 %v295
      %v513 = vunpack.c.l.b16 %v296
      %v514 = vunpack.c.h.b16 %v296
      %v515 = vunpack.c.l.b16 %v297
      %v516 = vunpack.c.h.b16 %v297
      %v517 = vunpack.c.l.b16 %v298
      %v518 = vunpack.c.h.b16 %v298
      %v519 = vunpack.c.l.b16 %v299
      %v520 = vunpack.c.h.b16 %v299
      %v521 = vunpack.c.l.b16 %v300
      %v522 = vunpack.c.h.b16 %v300
      %v523 = vunpack.c.l.b16 %v301
      %v524 = vunpack.c.h.b16 %v301
      %v525 = vunpack.c.l.b16 %v302
      %v526 = vunpack.c.h.b16 %v302
      %v527 = vunpack.c.l.b16 %v303
      %v528 = vunpack.c.h.b16 %v303
      %v529 = vunpack.c.l.b16 %v304
      %v530 = vunpack.c.h.b16 %v304
      %v531 = vunpack.c.l.b16 %v305
      %v532 = vunpack.c.h.b16 %v305
      %v533 = vunpack.c.l.b16 %v306
      %v534 = vunpack.c.h.b16 %v306
      %v535 = vpack.c.b16 %v479, %v471
      %v536 = vpack.c.b16 %v480, %v472
      %v537 = vpack.c.b16 %v481, %v473
      %v538 = vpack.c.b16 %v482, %v474
      %v539 = vpack.c.b16 %v483, %v475
      %v540 = vpack.c.b16 %v484, %v476
      %v541 = vpack.c.b16 %v485, %v477
      %v542 = vpack.c.b16 %v486, %v478
      %v543 = vpack.c.b16 %v495, %v487
      %v544 = vpack.c.b16 %v496, %v488
      %v545 = vpack.c.b16 %v497, %v489
      %v546 = vpack.c.b16 %v498, %v490
      %v547 = vpack.c.b16 %v499, %v491
      %v548 = vpack.c.b16 %v500, %v492
      %v549 = vpack.c.b16 %v501, %v493
      %v550 = vpack.c.b16 %v502, %v494
      %v551 = vpack.c.b16 %v511, %v503
      %v552 = vpack.c.b16 %v512, %v504
      %v553 = vpack.c.b16 %v513, %v505
      %v554 = vpack.c.b16 %v514, %v506
      %v555 = vpack.c.b16 %v515, %v507
      %v556 = vpack.c.b16 %v516, %v508
      %v557 = vpack.c.b16 %v517, %v509
      %v558 = vpack.c.b16 %v518, %v510
      %v559 = vpack.c.b16 %v527, %v519
      %v560 = vpack.c.b16 %v528, %v520
      %v561 = vpack.c.b16 %v529, %v521
      %v562 = vpack.c.b16 %v530, %v522
      %v563 = vpack.c.b16 %v531, %v523
      %v564 = vpack.c.b16 %v532, %v524
      %v565 = vpack.c.b16 %v533, %v525
      %v566 = vpack.c.b16 %v534, %v526
      %v727 = vunpack.c.l.b16 %v307
      %v728 = vunpack.c.l.b16 %v308
      %v729 = vunpack.c.l.b16 %v309
      %v730 = vunpack.c.l.b16 %v310
      %v731 = vunpack.c.l.b16 %v311
      %v732 = vunpack.c.l.b16 %v312
      %v733 = vunpack.c.l.b16 %v313
      %v734 = vunpack.c.l.b16 %v314
      %v735 = vunpack.c.l.b16 %v315
      %v736 = vunpack.c.l.b16 %v316
      %v737 = vunpack.c.l.b16 %v317
      %v738 = vunpack.c.l.b16 %v318
      %v739 = vunpack.c.l.b16 %v319
      %v740 = vunpack.c.l.b16 %v320
      %v741 = vunpack.c.l.b16 %v321
      %v742 = vunpack.c.l.b16 %v322
      %v743 = vunpack.c.l.b16 %v323
      %v744 = vunpack.c.l.b16 %v324
      %v745 = vunpack.c.l.b16 %v325
      %v746 = vunpack.c.l.b16 %v326
      %v747 = vunpack.c.l.b16 %v327
      %v748 = vunpack.c.l.b16 %v328
      %v749 = vunpack.c.l.b16 %v329
      %v750 = vunpack.c.l.b16 %v330
      %v751 = vunpack.c.l.b16 %v331
      %v752 = vunpack.c.l.b16 %v332
      %v753 = vunpack.c.l.b16 %v333
      %v754 = vunpack.c.l.b16 %v334
      %v755 = vunpack.c.l.b16 %v335
      %v756 = vunpack.c.l.b16 %v336
      %v757 = vunpack.c.l.b16 %v337
      %v758 = vunpack.c.l.b16 %v338
      %v759 = vunpack.c.l.b16 %v339
      %v760 = vunpack.c.l.b16 %v340
      %v761 = vunpack.c.l.b16 %v341
      %v762 = vunpack.c.l.b16 %v342
      %v763 = vunpack.c.l.b16 %v343
      %v764 = vunpack.c.l.b16 %v344
      %v765 = vunpack.c.l.b16 %v345
      %v766 = vunpack.c.l.b16 %v346
      %v767 = vunpack.c.l.b16 %v347
      %v768 = vunpack.c.l.b16 %v348
      %v769 = vunpack.c.l.b16 %v349
      %v770 = vunpack.c.l.b16 %v350
      %v771 = vunpack.c.l.b16 %v351
      %v772 = vunpack.c.l.b16 %v352
      %v773 = vunpack.c.l.b16 %v353
      %v774 = vunpack.c.l.b16 %v354
      %v775 = vunpack.c.l.b16 %v355
      %v776 = vunpack.c.l.b16 %v356
      %v777 = vunpack.c.l.b16 %v357
      %v778 = vunpack.c.l.b16 %v358
      %v779 = vunpack.c.l.b16 %v359
      %v780 = vunpack.c.l.b16 %v360
      %v781 = vunpack.c.l.b16 %v361
      %v782 = vunpack.c.l.b16 %v362
      %v783 = vunpack.c.l.b16 %v363
      %v784 = vunpack.c.l.b16 %v364
      %v785 = vunpack.c.l.b16 %v365
      %v786 = vunpack.c.l.b16 %v366
      %v787 = vunpack.c.l.b16 %v367
      %v788 = vunpack.c.l.b16 %v368
      %v789 = vunpack.c.l.b16 %v369
      %v790 = vunpack.c.l.b16 %v370
      %v791 = vunpack.c.l.b16 %v371
      %v792 = vunpack.c.l.b16 %v372
      %v793 = vunpack.c.l.b16 %v373
      %v794 = vunpack.c.l.b16 %v374
      %v795 = vunpack.c.l.b16 %v375
      %v796 = vunpack.c.l.b16 %v376
      %v797 = vunpack.c.l.b16 %v377
      %v798 = vunpack.c.l.b16 %v378
      %v799 = vunpack.c.l.b16 %v379
      %v800 = vunpack.c.l.b16 %v380
      %v801 = vunpack.c.l.b16 %v381
      %v802 = vunpack.c.l.b16 %v382
      %v803 = vunpack.c.l.b16 %v383
      %v804 = vunpack.c.l.b16 %v384
      %v805 = vunpack.c.l.b16 %v385
      %v806 = vunpack.c.l.b16 %v386
      %v807 = vunpack.c.l.b16 %v387
      %v808 = vunpack.c.l.b16 %v388
      %v809 = vunpack.c.l.b16 %v389
      %v810 = vunpack.c.l.b16 %v390
      %v811 = vunpack.c.l.b16 %v391
      %v812 = vunpack.c.l.b16 %v392
      %v813 = vunpack.c.l.b16 %v393
      %v814 = vunpack.c.l.b16 %v394
      %v815 = vunpack.c.l.b16 %v395
      %v816 = vunpack.c.l.b16 %v396
      %v817 = vunpack.c.l.b16 %v397
      %v818 = vunpack.c.l.b16 %v398
      %v819 = vunpack.c.l.b16 %v399
      %v820 = vunpack.c.l.b16 %v400
      %v821 = vunpack.c.l.b16 %v401
      %v822 = vunpack.c.l.b16 %v402
      %v823 = vunpack.c.l.b16 %v403
      %v824 = vunpack.c.l.b16 %v404
      %v825 = vunpack.c.l.b16 %v405
      %v826 = vunpack.c.l.b16 %v406
      %v827 = vunpack.c.l.b16 %v407
      %v828 = vunpack.c.l.b16 %v408
      %v829 = vunpack.c.l.b16 %v409
      %v830 = vunpack.c.l.b16 %v410
      %v831 = vunpack.c.l.b16 %v411
      %v832 = vunpack.c.l.b16 %v412
      %v833 = vunpack.c.l.b16 %v413
      %v834 = vunpack.c.l.b16 %v414
      %v835 = vunpack.c.l.b16 %v415
      %v836 = vunpack.c.l.b16 %v416
      %v837 = vunpack.c.l.b16 %v417
      %v838 = vunpack.c.l.b16 %v418
      %v839 = vunpack.c.l.b16 %v419
      %v840 = vunpack.c.l.b16 %v420
      %v841 = vunpack.c.l.b16 %v421
      %v842 = vunpack.c.l.b16 %v422
      %v843 = vunpack.c.l.b16 %v423
      %v844 = vunpack.c.l.b16 %v424
      %v845 = vunpack.c.l.b16 %v425
      %v846 = vunpack.c.l.b16 %v426
      %v847 = vunpack.c.l.b16 %v427
      %v848 = vunpack.c.l.b16 %v428
      %v849 = vunpack.c.l.b16 %v429
      %v850 = vunpack.c.l.b16 %v430
      %v851 = vunpack.c.l.b16 %v431
      %v852 = vunpack.c.l.b16 %v432
      %v853 = vunpack.c.l.b16 %v433
      %v854 = vunpack.c.l.b16 %v434
      %v855 = vpack.c.b16 %v728, %v727
      %v856 = vpack.c.b16 %v730, %v729
      %v857 = vpack.c.b16 %v732, %v731
      %v858 = vpack.c.b16 %v734, %v733
      %v859 = vpack.c.b16 %v736, %v735
      %v860 = vpack.c.b16 %v738, %v737
      %v861 = vpack.c.b16 %v740, %v739
      %v862 = vpack.c.b16 %v742, %v741
      %v863 = vpack.c.b16 %v744, %v743
      %v864 = vpack.c.b16 %v746, %v745
      %v865 = vpack.c.b16 %v748, %v747
      %v866 = vpack.c.b16 %v750, %v749
      %v867 = vpack.c.b16 %v752, %v751
      %v868 = vpack.c.b16 %v754, %v753
      %v869 = vpack.c.b16 %v756, %v755
      %v870 = vpack.c.b16 %v758, %v757
      %v871 = vpack.c.b16 %v760, %v759
      %v872 = vpack.c.b16 %v762, %v761
      %v873 = vpack.c.b16 %v764, %v763
      %v874 = vpack.c.b16 %v766, %v765
      %v875 = vpack.c.b16 %v768, %v767
      %v876 = vpack.c.b16 %v770, %v769
      %v877 = vpack.c.b16 %v772, %v771
      %v878 = vpack.c.b16 %v774, %v773
      %v879 = vpack.c.b16 %v776, %v775
      %v880 = vpack.c.b16 %v778, %v777
      %v881 = vpack.c.b16 %v780, %v779
      %v882 = vpack.c.b16 %v782, %v781
      %v883 = vpack.c.b16 %v784, %v783
      %v884 = vpack.c.b16 %v786, %v785
      %v885 = vpack.c.b16 %v788, %v787
      %v886 = vpack.c.b16 %v790, %v789
      %v887 = vpack.c.b16 %v792, %v791
      %v888 = vpack.c.b16 %v794, %v793
      %v889 = vpack.c.b16 %v796, %v795
      %v890 = vpack.c.b16 %v798, %v797
      %v891 = vpack.c.b16 %v800, %v799
      %v892 = vpack.c.b16 %v802, %v801
      %v893 = vpack.c.b16 %v804, %v803
      %v894 = vpack.c.b16 %v806, %v805
      %v895 = vpack.c.b16 %v808, %v807
      %v896 = vpack.c.b16 %v810, %v809
      %v897 = vpack.c.b16 %v812, %v811
      %v898 = vpack.c.b16 %v814, %v813
      %v899 = vpack.c.b16 %v816, %v815
      %v900 = vpack.c.b16 %v818, %v817
      %v901 = vpack.c.b16 %v820, %v819
      %v902 = vpack.c.b16 %v822, %v821
      %v903 = vpack.c.b16 %v824, %v823
      %v904 = vpack.c.b16 %v826, %v825
      %v905 = vpack.c.b16 %v828, %v827
      %v906 = vpack.c.b16 %v830, %v829
      %v907 = vpack.c.b16 %v832, %v831
      %v908 = vpack.c.b16 %v834, %v833
      %v909 = vpack.c.b16 %v836, %v835
      %v910 = vpack.c.b16 %v838, %v837
      %v911 = vpack.c.b16 %v840, %v839
      %v912 = vpack.c.b16 %v842, %v841
      %v913 = vpack.c.b16 %v844, %v843
      %v914 = vpack.c.b16 %v846, %v845
      %v915 = vpack.c.b16 %v848, %v847
      %v916 = vpack.c.b16 %v850, %v849
      %v917 = vpack.c.b16 %v852, %v851
      %v918 = vpack.c.b16 %v854, %v853
      %983 = vmatpush.bf16.msra.mxu0 %v862
      %984 = vmatpush.bf16.msra.mxu0 %v861
      %985 = vmatpush.bf16.msra.mxu0 %v860
      %986 = vmatpush.bf16.msra.mxu0 %v859
      %987 = vmatpush.bf16.msra.mxu0 %v858
      %988 = vmatpush.bf16.msra.mxu0 %v857
      %989 = vmatpush.bf16.msra.mxu0 %v856
      %990 = vmatpush.bf16.msra.mxu0 %v855
      %991 = vmatmul.bf16.gmra.mxu0 %v535
      %v992 = vpop.f32.mrf.mxu0
      %v993 = vadd.f32 %v437, %v992
      %v994 = vpop.f32.mrf.mxu0
      %v995 = vadd.f32 %v437, %v994
      %996 = vmatmul.bf16.gmra.mxu0 %v543
      %v997 = vpop.f32.mrf.mxu0
      %v998 = vadd.f32 %v437, %v997
      %v999 = vpop.f32.mrf.mxu0
      %v1000 = vadd.f32 %v437, %v999
      %1001 = vmatmul.bf16.gmra.mxu0 %v551
      %v1002 = vpop.f32.mrf.mxu0
      %v1003 = vadd.f32 %v437, %v1002
      %v1004 = vpop.f32.mrf.mxu0
      %v1005 = vadd.f32 %v437, %v1004
      %1006 = vmatmul.bf16.gmra.mxu0 %v559
      %v1007 = vpop.f32.mrf.mxu0
      %v1008 = vadd.f32 %v437, %v1007
      %v1009 = vpop.f32.mrf.mxu0
      %v1010 = vadd.f32 %v437, %v1009
      %1011 = vdwg.mxu0
      %1012 = vmatpush.bf16.msra.mxu0 %v870
      %1013 = vmatpush.bf16.msra.mxu0 %v869
      %1014 = vmatpush.bf16.msra.mxu0 %v868
      %1015 = vmatpush.bf16.msra.mxu0 %v867
      %1016 = vmatpush.bf16.msra.mxu0 %v866
      %1017 = vmatpush.bf16.msra.mxu0 %v865
      %1018 = vmatpush.bf16.msra.mxu0 %v864
      %1019 = vmatpush.bf16.msra.mxu0 %v863
      %1020 = vmatmul.bf16.gmra.mxu0 %v536
      %v1021 = vpop.f32.mrf.mxu0
      %v1022 = vadd.f32 %v993, %v1021
      %v1023 = vpop.f32.mrf.mxu0
      %v1024 = vadd.f32 %v995, %v1023
      %1025 = vmatmul.bf16.gmra.mxu0 %v544
      %v1026 = vpop.f32.mrf.mxu0
      %v1027 = vadd.f32 %v998, %v1026
      %v1028 = vpop.f32.mrf.mxu0
      %v1029 = vadd.f32 %v1000, %v1028
      %1030 = vmatmul.bf16.gmra.mxu0 %v552
      %v1031 = vpop.f32.mrf.mxu0
      %v1032 = vadd.f32 %v1003, %v1031
      %v1033 = vpop.f32.mrf.mxu0
      %v1034 = vadd.f32 %v1005, %v1033
      %1035 = vmatmul.bf16.gmra.mxu0 %v560
      %v1036 = vpop.f32.mrf.mxu0
      %v1037 = vadd.f32 %v1008, %v1036
      %v1038 = vpop.f32.mrf.mxu0
      %v1039 = vadd.f32 %v1010, %v1038
      %1040 = vdwg.mxu0
      %1041 = vmatpush.bf16.msra.mxu0 %v878
      %1042 = vmatpush.bf16.msra.mxu0 %v877
      %1043 = vmatpush.bf16.msra.mxu0 %v876
      %1044 = vmatpush.bf16.msra.mxu0 %v875
      %1045 = vmatpush.bf16.msra.mxu0 %v874
      %1046 = vmatpush.bf16.msra.mxu0 %v873
      %1047 = vmatpush.bf16.msra.mxu0 %v872
      %1048 = vmatpush.bf16.msra.mxu0 %v871
      %1049 = vmatmul.bf16.gmra.mxu0 %v537
      %v1050 = vpop.f32.mrf.mxu0
      %v1051 = vadd.f32 %v1022, %v1050
      %v1052 = vpop.f32.mrf.mxu0
      %v1053 = vadd.f32 %v1024, %v1052
      %1054 = vmatmul.bf16.gmra.mxu0 %v545
      %v1055 = vpop.f32.mrf.mxu0
      %v1056 = vadd.f32 %v1027, %v1055
      %v1057 = vpop.f32.mrf.mxu0
      %v1058 = vadd.f32 %v1029, %v1057
      %1059 = vmatmul.bf16.gmra.mxu0 %v553
      %v1060 = vpop.f32.mrf.mxu0
      %v1061 = vadd.f32 %v1032, %v1060
      %v1062 = vpop.f32.mrf.mxu0
      %v1063 = vadd.f32 %v1034, %v1062
      %1064 = vmatmul.bf16.gmra.mxu0 %v561
      %v1065 = vpop.f32.mrf.mxu0
      %v1066 = vadd.f32 %v1037, %v1065
      %v1067 = vpop.f32.mrf.mxu0
      %v1068 = vadd.f32 %v1039, %v1067
      %1069 = vdwg.mxu0
      %1070 = vmatpush.bf16.msra.mxu0 %v886
      %1071 = vmatpush.bf16.msra.mxu0 %v885
      %1072 = vmatpush.bf16.msra.mxu0 %v884
      %1073 = vmatpush.bf16.msra.mxu0 %v883
      %1074 = vmatpush.bf16.msra.mxu0 %v882
      %1075 = vmatpush.bf16.msra.mxu0 %v881
      %1076 = vmatpush.bf16.msra.mxu0 %v880
      %1077 = vmatpush.bf16.msra.mxu0 %v879
      %1078 = vmatmul.bf16.gmra.mxu0 %v538
      %v1079 = vpop.f32.mrf.mxu0
      %v1080 = vadd.f32 %v1051, %v1079
      %v1081 = vpop.f32.mrf.mxu0
      %v1082 = vadd.f32 %v1053, %v1081
      %1083 = vmatmul.bf16.gmra.mxu0 %v546
      %v1084 = vpop.f32.mrf.mxu0
      %v1085 = vadd.f32 %v1056, %v1084
      %v1086 = vpop.f32.mrf.mxu0
      %v1087 = vadd.f32 %v1058, %v1086
      %1088 = vmatmul.bf16.gmra.mxu0 %v554
      %v1089 = vpop.f32.mrf.mxu0
      %v1090 = vadd.f32 %v1061, %v1089
      %v1091 = vpop.f32.mrf.mxu0
      %v1092 = vadd.f32 %v1063, %v1091
      %1093 = vmatmul.bf16.gmra.mxu0 %v562
      %v1094 = vpop.f32.mrf.mxu0
      %v1095 = vadd.f32 %v1066, %v1094
      %v1096 = vpop.f32.mrf.mxu0
      %v1097 = vadd.f32 %v1068, %v1096
      %1098 = vdwg.mxu0
      %1099 = vmatpush.bf16.msra.mxu0 %v894
      %1100 = vmatpush.bf16.msra.mxu0 %v893
      %1101 = vmatpush.bf16.msra.mxu0 %v892
      %1102 = vmatpush.bf16.msra.mxu0 %v891
      %1103 = vmatpush.bf16.msra.mxu0 %v890
      %1104 = vmatpush.bf16.msra.mxu0 %v889
      %1105 = vmatpush.bf16.msra.mxu0 %v888
      %1106 = vmatpush.bf16.msra.mxu0 %v887
      %1107 = vmatmul.bf16.gmra.mxu0 %v539
      %v1108 = vpop.f32.mrf.mxu0
      %v1109 = vadd.f32 %v1080, %v1108
      %v1110 = vpop.f32.mrf.mxu0
      %v1111 = vadd.f32 %v1082, %v1110
      %1112 = vmatmul.bf16.gmra.mxu0 %v547
      %v1113 = vpop.f32.mrf.mxu0
      %v1114 = vadd.f32 %v1085, %v1113
      %v1115 = vpop.f32.mrf.mxu0
      %v1116 = vadd.f32 %v1087, %v1115
      %1117 = vmatmul.bf16.gmra.mxu0 %v555
      %v1118 = vpop.f32.mrf.mxu0
      %v1119 = vadd.f32 %v1090, %v1118
      %v1120 = vpop.f32.mrf.mxu0
      %v1121 = vadd.f32 %v1092, %v1120
      %1122 = vmatmul.bf16.gmra.mxu0 %v563
      %v1123 = vpop.f32.mrf.mxu0
      %v1124 = vadd.f32 %v1095, %v1123
      %v1125 = vpop.f32.mrf.mxu0
      %v1126 = vadd.f32 %v1097, %v1125
      %1127 = vdwg.mxu0
      %1128 = vmatpush.bf16.msra.mxu0 %v902
      %1129 = vmatpush.bf16.msra.mxu0 %v901
      %1130 = vmatpush.bf16.msra.mxu0 %v900
      %1131 = vmatpush.bf16.msra.mxu0 %v899
      %1132 = vmatpush.bf16.msra.mxu0 %v898
      %1133 = vmatpush.bf16.msra.mxu0 %v897
      %1134 = vmatpush.bf16.msra.mxu0 %v896
      %1135 = vmatpush.bf16.msra.mxu0 %v895
      %1136 = vmatmul.bf16.gmra.mxu0 %v540
      %v1137 = vpop.f32.mrf.mxu0
      %v1138 = vadd.f32 %v1109, %v1137
      %v1139 = vpop.f32.mrf.mxu0
      %v1140 = vadd.f32 %v1111, %v1139
      %1141 = vmatmul.bf16.gmra.mxu0 %v548
      %v1142 = vpop.f32.mrf.mxu0
      %v1143 = vadd.f32 %v1114, %v1142
      %v1144 = vpop.f32.mrf.mxu0
      %v1145 = vadd.f32 %v1116, %v1144
      %1146 = vmatmul.bf16.gmra.mxu0 %v556
      %v1147 = vpop.f32.mrf.mxu0
      %v1148 = vadd.f32 %v1119, %v1147
      %v1149 = vpop.f32.mrf.mxu0
      %v1150 = vadd.f32 %v1121, %v1149
      %1151 = vmatmul.bf16.gmra.mxu0 %v564
      %v1152 = vpop.f32.mrf.mxu0
      %v1153 = vadd.f32 %v1124, %v1152
      %v1154 = vpop.f32.mrf.mxu0
      %v1155 = vadd.f32 %v1126, %v1154
      %1156 = vdwg.mxu0
      %1157 = vmatpush.bf16.msra.mxu0 %v910
      %1158 = vmatpush.bf16.msra.mxu0 %v909
      %1159 = vmatpush.bf16.msra.mxu0 %v908
      %1160 = vmatpush.bf16.msra.mxu0 %v907
      %1161 = vmatpush.bf16.msra.mxu0 %v906
      %1162 = vmatpush.bf16.msra.mxu0 %v905
      %1163 = vmatpush.bf16.msra.mxu0 %v904
      %1164 = vmatpush.bf16.msra.mxu0 %v903
      %1165 = vmatmul.bf16.gmra.mxu0 %v541
      %v1166 = vpop.f32.mrf.mxu0
      %v1167 = vadd.f32 %v1138, %v1166
      %v1168 = vpop.f32.mrf.mxu0
      %v1169 = vadd.f32 %v1140, %v1168
      %1170 = vmatmul.bf16.gmra.mxu0 %v549
      %v1171 = vpop.f32.mrf.mxu0
      %v1172 = vadd.f32 %v1143, %v1171
      %v1173 = vpop.f32.mrf.mxu0
      %v1174 = vadd.f32 %v1145, %v1173
      %1175 = vmatmul.bf16.gmra.mxu0 %v557
      %v1176 = vpop.f32.mrf.mxu0
      %v1177 = vadd.f32 %v1148, %v1176
      %v1178 = vpop.f32.mrf.mxu0
      %v1179 = vadd.f32 %v1150, %v1178
      %1180 = vmatmul.bf16.gmra.mxu0 %v565
      %v1181 = vpop.f32.mrf.mxu0
      %v1182 = vadd.f32 %v1153, %v1181
      %v1183 = vpop.f32.mrf.mxu0
      %v1184 = vadd.f32 %v1155, %v1183
      %1185 = vdwg.mxu0
      %1186 = vmatpush.bf16.msra.mxu0 %v918
      %1187 = vmatpush.bf16.msra.mxu0 %v917
      %1188 = vmatpush.bf16.msra.mxu0 %v916
      %1189 = vmatpush.bf16.msra.mxu0 %v915
      %1190 = vmatpush.bf16.msra.mxu0 %v914
      %1191 = vmatpush.bf16.msra.mxu0 %v913
      %1192 = vmatpush.bf16.msra.mxu0 %v912
      %1193 = vmatpush.bf16.msra.mxu0 %v911
      %1194 = vmatmul.bf16.gmra.mxu0 %v542
      %v1195 = vpop.f32.mrf.mxu0
      %v1196 = vadd.f32 %v1167, %v1195
      %v1197 = vpop.f32.mrf.mxu0
      %v1198 = vadd.f32 %v1169, %v1197
      %1199 = vmatmul.bf16.gmra.mxu0 %v550
      %v1200 = vpop.f32.mrf.mxu0
      %v1201 = vadd.f32 %v1172, %v1200
      %v1202 = vpop.f32.mrf.mxu0
      %v1203 = vadd.f32 %v1174, %v1202
      %1204 = vmatmul.bf16.gmra.mxu0 %v558
      %v1205 = vpop.f32.mrf.mxu0
      %v1206 = vadd.f32 %v1177, %v1205
      %v1207 = vpop.f32.mrf.mxu0
      %v1208 = vadd.f32 %v1179, %v1207
      %1209 = vmatmul.bf16.gmra.mxu0 %v566
      %v1210 = vpop.f32.mrf.mxu0
      %v1211 = vadd.f32 %v1182, %v1210
      %v1212 = vpop.f32.mrf.mxu0
      %v1213 = vadd.f32 %v1184, %v1212
      %1214 = vdwg.mxu0
      %vm1215 = vcmask 261120
      %v1216 = vsel %vm1215, %v1196, 0.0
      %v1217 = vsel %vm1215, %v1198, 0.0
      %v1218 = vadd.f32 %v1216, %v1217
      %v1219 = vsel %vm1215, %v1201, 0.0
      %v1220 = vadd.f32 %v1218, %v1219
      %v1221 = vsel %vm1215, %v1203, 0.0
      %v1222 = vadd.f32 %v1220, %v1221
      %v1223 = vsel %vm1215, %v1206, 0.0
      %v1224 = vadd.f32 %v1222, %v1223
      %v1225 = vsel %vm1215, %v1208, 0.0
      %v1226 = vadd.f32 %v1224, %v1225
      %v1227 = vsel %vm1215, %v1211, 0.0
      %v1228 = vadd.f32 %v1226, %v1227
      %v1229 = vsel %vm1215, %v1213, 0.0
      %v1230 = vadd.f32 %v1228, %v1229
      %v1231 = vrot.slane %v1230, 4
      %v1232 = vadd.f32 %v1230, %v1231
      %v1233 = vrot.slane %v1232, 2
      %v1234 = vadd.f32 %v1232, %v1233
      %v1235 = vrot.slane %v1234, 1
      %v1236 = vadd.f32 %v1234, %v1235
      %v1237 = vrcp.pop 64.0
      %v1238 = vmul.f32 64.0, %v1237
      %v1239 = vsub.f32 1.0, %v1238
      %v1240 = vmul.f32 %v1237, %v1239
      %v1241 = vadd.f32 %v1237, %v1240
      %vm1242 = vweird.f32 %v1237
      %v1243 = vsel %vm1242, %v1237, %v1241
      %v1244 = vmul.f32 %v1236, %v1243
      %v1245 = vsub.f32 %v1196, %v1244
      %v1246 = vsub.f32 %v1198, %v1244
      %v1247 = vsub.f32 %v1201, %v1244
      %v1248 = vsub.f32 %v1203, %v1244
      %v1249 = vsub.f32 %v1206, %v1244
      %v1250 = vsub.f32 %v1208, %v1244
      %v1251 = vsub.f32 %v1211, %v1244
      %v1252 = vsub.f32 %v1213, %v1244
      %v1253 = vmul.f32 %v1245, %v1245
      %v1254 = vmul.f32 %v1246, %v1246
      %v1255 = vmul.f32 %v1247, %v1247
      %v1256 = vmul.f32 %v1248, %v1248
      %v1257 = vmul.f32 %v1249, %v1249
      %v1258 = vmul.f32 %v1250, %v1250
      %v1259 = vmul.f32 %v1251, %v1251
      %v1260 = vmul.f32 %v1252, %v1252
      %v1261 = vsel %vm1215, %v1253, 0.0
      %v1262 = vsel %vm1215, %v1254, 0.0
      %v1263 = vadd.f32 %v1261, %v1262
      %v1264 = vsel %vm1215, %v1255, 0.0
      %v1265 = vadd.f32 %v1263, %v1264
      %v1266 = vsel %vm1215, %v1256, 0.0
      %v1267 = vadd.f32 %v1265, %v1266
      %v1268 = vsel %vm1215, %v1257, 0.0
      %v1269 = vadd.f32 %v1267, %v1268
      %v1270 = vsel %vm1215, %v1258, 0.0
      %v1271 = vadd.f32 %v1269, %v1270
      %v1272 = vsel %vm1215, %v1259, 0.0
      %v1273 = vadd.f32 %v1271, %v1272
      %v1274 = vsel %vm1215, %v1260, 0.0
      %v1275 = vadd.f32 %v1273, %v1274
      %v1276 = vrot.slane %v1275, 4
      %v1277 = vadd.f32 %v1275, %v1276
      %v1278 = vrot.slane %v1277, 2
      %v1279 = vadd.f32 %v1277, %v1278
      %v1280 = vrot.slane %v1279, 1
      %v1281 = vadd.f32 %v1279, %v1280
      %v1282 = vmul.f32 %v1281, %v1243
      %v1283 = vadd.f32 %v1282, 1e-05
      %v1284 = vrsqrt.pop %v1283
      %v1285 = vmul.f32 %v1284, %v1283
      %v1286 = vmul.f32 %v1285, %v1284
      %v1287 = vmul.f32 0.5, %v1286
      %v1288 = vsub.f32 1.5, %v1287
      %v1289 = vmul.f32 %v1284, %v1288
      %vm1290 = vweird.f32 %v1283
      %vm1291 = vweird.f32 %v1284
      %vm1292 = vmor %vm1290, %vm1291
      %v1293 = vsel %vm1292, %v1284, %v1289
      %v1294 = vmul.f32 %v1245, %v1293
      %v1295 = vmul.f32 %v1246, %v1293
      %v1296 = vmul.f32 %v1247, %v1293
      %v1297 = vmul.f32 %v1248, %v1293
      %v1298 = vmul.f32 %v1249, %v1293
      %v1299 = vmul.f32 %v1250, %v1293
      %v1300 = vmul.f32 %v1251, %v1293
      %v1301 = vmul.f32 %v1252, %v1293
      %v1302 = vld [vmem:[%s3] sm:$0x1]
      %v1304 = vperm.slane %v1302, 0
      %v1306 = vmul.f32 %v1294, %v1304
      %v1307 = vmul.f32 %v1295, %v1304
      %v1308 = vmul.f32 %v1296, %v1304
      %v1309 = vmul.f32 %v1297, %v1304
      %v1310 = vmul.f32 %v1298, %v1304
      %v1311 = vmul.f32 %v1299, %v1304
      %v1312 = vmul.f32 %v1300, %v1304
      %v1313 = vmul.f32 %v1301, %v1304
      %v1314 = vld [vmem:[%s4] sm:$0x1]
      %v1316 = vperm.slane %v1314, 0
      %v1318 = vadd.f32 %v1306, %v1316
      %v1319 = vadd.f32 %v1307, %v1316
      %v1320 = vadd.f32 %v1308, %v1316
      %v1321 = vadd.f32 %v1309, %v1316
      %v1322 = vadd.f32 %v1310, %v1316
      %v1323 = vadd.f32 %v1311, %v1316
      %v1324 = vadd.f32 %v1312, %v1316
      %v1325 = vadd.f32 %v1313, %v1316
      %vm1326 = vcmp.ge.f32.partialorder %v1318, 0.0
      %vm1327 = vcmp.ge.f32.partialorder %v1319, 0.0
      %vm1328 = vcmp.ge.f32.partialorder %v1320, 0.0
      %vm1329 = vcmp.ge.f32.partialorder %v1321, 0.0
      %vm1330 = vcmp.ge.f32.partialorder %v1322, 0.0
      %vm1331 = vcmp.ge.f32.partialorder %v1323, 0.0
      %vm1332 = vcmp.ge.f32.partialorder %v1324, 0.0
      %vm1333 = vcmp.ge.f32.partialorder %v1325, 0.0
      %v1334 = vmul.f32 %v1318, 0.2
      %v1335 = vmul.f32 %v1319, 0.2
      %v1336 = vmul.f32 %v1320, 0.2
      %v1337 = vmul.f32 %v1321, 0.2
      %v1338 = vmul.f32 %v1322, 0.2
      %v1339 = vmul.f32 %v1323, 0.2
      %v1340 = vmul.f32 %v1324, 0.2
      %v1341 = vmul.f32 %v1325, 0.2
      %v1342 = vsel %vm1326, %v1318, %v1334
      %v1343 = vsel %vm1327, %v1319, %v1335
      %v1344 = vsel %vm1328, %v1320, %v1336
      %v1345 = vsel %vm1329, %v1321, %v1337
      %v1346 = vsel %vm1330, %v1322, %v1338
      %v1347 = vsel %vm1331, %v1323, %v1339
      %v1348 = vsel %vm1332, %v1324, %v1340
      %v1349 = vsel %vm1333, %v1325, %v1341
      %v1350 = vld [vmem:[%s6] sm:$0x1]
      %v1351 = vlaneseq
      %v1352 = vand.u32 %v1351, 127
      %v1353 = vld [vmem:[%s5] sm:$0xff]
      %v1354 = vld [vmem:[%s5 + $0x8] sm:$0xff]
      %v1355 = vld [vmem:[%s5 + $0x10] sm:$0xff]
      %v1356 = vld [vmem:[%s5 + $0x18] sm:$0xff]
      %v1357 = vld [vmem:[%s5 + $0x20] sm:$0xff]
      %v1358 = vld [vmem:[%s5 + $0x28] sm:$0xff]
      %v1359 = vld [vmem:[%s5 + $0x30] sm:$0xff]
      %v1360 = vld [vmem:[%s5 + $0x38] sm:$0xff]
      %v1361 = vmul.f32 %v1342, %v1353
      %v1362 = vmul.f32 %v1343, %v1354
      %v1363 = vmul.f32 %v1344, %v1355
      %v1364 = vmul.f32 %v1345, %v1356
      %v1365 = vmul.f32 %v1346, %v1357
      %v1366 = vmul.f32 %v1347, %v1358
      %v1367 = vmul.f32 %v1348, %v1359
      %v1368 = vmul.f32 %v1349, %v1360
      %v1369 = vsel %vm1215, %v1361, 0.0
      %1370 = vadd.xlane.f32.xlu0 %v1369
      %v1371 = vpop.xlane.xlu0 %1370
      %v1372 = vsel %vm1215, %v1362, 0.0
      %1373 = vadd.xlane.f32.xlu0 %v1372
      %v1374 = vpop.xlane.xlu0 %1373
      %v1375 = vsel %vm1215, %v1363, 0.0
      %1376 = vadd.xlane.f32.xlu0 %v1375
      %v1377 = vpop.xlane.xlu0 %1376
      %v1378 = vsel %vm1215, %v1364, 0.0
      %1379 = vadd.xlane.f32.xlu0 %v1378
      %v1380 = vpop.xlane.xlu0 %1379
      %v1381 = vsel %vm1215, %v1365, 0.0
      %1382 = vadd.xlane.f32.xlu0 %v1381
      %v1383 = vpop.xlane.xlu0 %1382
      %v1384 = vsel %vm1215, %v1366, 0.0
      %1385 = vadd.xlane.f32.xlu0 %v1384
      %v1386 = vpop.xlane.xlu0 %1385
      %v1387 = vsel %vm1215, %v1367, 0.0
      %1388 = vadd.xlane.f32.xlu0 %v1387
      %v1389 = vpop.xlane.xlu0 %1388
      %v1390 = vsel %vm1215, %v1368, 0.0
      %1391 = vadd.xlane.f32.xlu0 %v1390
      %v1392 = vpop.xlane.xlu0 %1391
      %v1393 = vadd.f32 %v1371, %v1374
      %v1394 = vadd.f32 %v1393, %v1377
      %v1395 = vadd.f32 %v1394, %v1380
      %v1396 = vadd.f32 %v1395, %v1383
      %v1397 = vadd.f32 %v1396, %v1386
      %v1398 = vadd.f32 %v1397, %v1389
      %v1399 = vadd.f32 %v1398, %v1392
      %v1400 = vrot.slane %v1399, 4
      %v1401 = vadd.f32 %v1399, %v1400
      %v1402 = vrot.slane %v1401, 2
      %v1403 = vadd.f32 %v1401, %v1402
      %v1404 = vrot.slane %v1403, 1
      %v1405 = vadd.f32 %v1403, %v1404
      %vm1406 = vcmp.eq.s32.totalorder %v1352, 0
      %v1407 = vsel %vm1406, %v1405, 0.0
      %v1408 = vadd.f32 %v1350, %v1407
      %1409 = vst [vmem:[%s274] sm:$0x1] %v1408
      %p1410 = scmp.lt.s32.totalorder %s18, 1
      %s1411 = scalar_select %p1410, %s18, 1
      %s1412 = scalar_lea.vmem %s7, %s1411
      // Predicated region
      $region49: #{discriminator_forward.3} parent=47 // pred_check
        %p1413 = pneg %p188
      $region50: #{discriminator_forward.3} parent=47 // pred_check_branch
        %1415 = sbr.rel (%p1413) target = $region52
      $region51: #{discriminator_forward.3} parent=47 // pred_region
        _
      $region52: #{discriminator_forward.3} parent=47 // pred_fallthru
        _
    $region48: #{discriminator_forward.3} parent=5 // pred_fallthru
      _
    %p1416 = scmp.le.s32.totalorder 2, %s13
    // Predicated region
    $region53: #{discriminator_forward.3} parent=5 // pred_check
      %p1417 = pneg %p1416
    $region54: #{discriminator_forward.3} parent=5 // pred_check_branch
      %1419 = sbr.rel (%p1417) target = $region56
    $region55: #{discriminator_forward.3} parent=5 // pred_region
      %s1420 = ssub.s32 %s13, 2
      // Predicated region
      $region57: #{discriminator_forward.3} parent=55 // pred_check
        %p1421 = pneg %p194
      $region58: #{discriminator_forward.3} parent=55 // pred_check_branch
        %1423 = sbr.rel (%p1421) target = $region60
      $region59: #{discriminator_forward.3} parent=55 // pred_region
        %p1424 = scmp.lt.s32.totalorder %s19, 1
        %s1425 = scalar_select %p1424, %s19, 1
        %s1426 = scalar_lea.vmem %s7, %s1425
      $region60: #{discriminator_forward.3} parent=55 // pred_fallthru
        _
    $region56: #{discriminator_forward.3} parent=5 // pred_fallthru
      _
  $region6: #{discriminator_forward.3} parent=0 // loop_footer
    %s17 = sadd.s32 1, %s13
  $region7: #{discriminator_forward.3} parent=0 // loop_footer_branch
    %12 = sbr.rel target = $region3
  $region8: #{discriminator_forward.3} parent=0 // loop_exit
    _

</llo_original>
